<compile_context>
chip_gen: v6e
topology: v6e:2x2x1
jax: 0.10.0
libtpu: 0.0.40
codegen_flags: <defaults>
</compile_context>

<pallas_src>
import math

import jax
import jax.numpy as jnp
from jax.experimental import pallas as pl
from jax.experimental.pallas import tpu as pltpu


_GELU_C = math.sqrt(2.0 / math.pi)


def _gelu_tanh(x):
    # BERT/GELU tanh approximation, exactly as in the PyTorch GELU module.
    return 0.5 * x * (1.0 + jnp.tanh(_GELU_C * (x + 0.044715 * x * x * x)))


def _sigmoid(z):
    return 1.0 / (1.0 + jnp.exp(-z))


def lstm_linear_kernel(a_ref, b_ref,
                       w1_ref, b1_ref, w2_ref, b2_ref, w3_ref, b3_ref,
                       w4l_ref, b4l_ref, w4t_ref, b4t_ref,
                       wc_ref,
                       out_ref, logs_ref):
    # a_ref/b_ref: (TM, C) row tiles of coup_a / coup_b.
    # wN_ref: MLP weights already transposed to (in, out); biases (1, out).
    # wc_ref: (C, C) = (weight_r @ weight)^T  -> coup_b @ wc == F.linear(F.linear(coup_b, W), Wr).
    a = a_ref[...]

    h = _gelu_tanh(jnp.dot(a, w1_ref[...], preferred_element_type=jnp.float32) + b1_ref[...])
    h = _gelu_tanh(jnp.dot(h, w2_ref[...], preferred_element_type=jnp.float32) + b2_ref[...])
    h = _gelu_tanh(jnp.dot(h, w3_ref[...], preferred_element_type=jnp.float32) + b3_ref[...])

    # Final Linear(F, 2C) split into its two chunk(2, 2) halves to avoid an
    # unaligned lane slice: rows [0:C] -> log, rows [C:2C] -> t.
    log_raw = jnp.dot(h, w4l_ref[...], preferred_element_type=jnp.float32) + b4l_ref[...]
    t = jnp.dot(h, w4t_ref[...], preferred_element_type=jnp.float32) + b4t_ref[...]

    s = _sigmoid(log_raw + 2.0)

    xb = jnp.dot(b_ref[...], wc_ref[...], preferred_element_type=jnp.float32)
    out_ref[...] = ((xb + t) * s).astype(out_ref.dtype)

    # Per-row sum of log(s); batch reduction + sum(w_s) terms happen in the wrapper.
    logs_ref[...] = jnp.sum(jnp.log(s), axis=-1, keepdims=True).astype(logs_ref.dtype)


def _calc_weight(w_p, w_l, w_s, w_u, l_mask, u_mask, s_sign, l_eye):
    return w_p @ (w_l * l_mask + l_eye) @ (w_u * u_mask + jnp.diag(s_sign * jnp.exp(w_s)))


def lstm_linear_forward(params, coup_a, coup_b, *, block_m=256):
    B, T, C = coup_a.shape
    M = B * T
    Fsz = params["w1"].shape[0]

    # --- tiny wrapper-side algebra (C x C / C x F elements only) -------------
    weight = _calc_weight(params["w_p"], params["w_l"], params["w_s"], params["w_u"],
                          params["l_mask"], params["u_mask"], params["s_sign"], params["l_eye"])
    weight_r = _calc_weight(params["w_p_r"], params["w_l_r"], params["w_s_r"], params["w_u_r"],
                            params["l_mask_r"], params["u_mask_r"], params["s_sign_r"],
                            params["l_eye_r"])
    wc_t = (weight_r @ weight).T                 # (C, C)

    w1_t = params["w1"].T                        # (C, Fsz)
    w2_t = params["w2"].T                        # (Fsz, Fsz)
    w3_t = params["w3"].T                        # (Fsz, Fsz)
    w4 = params["w4"]                            # (2C, Fsz)  PyTorch layout
    b4 = params["b4"]
    w4l_t = w4[:C].T                             # (Fsz, C) -> "log" half
    w4t_t = w4[C:].T                             # (Fsz, C) -> "t" half
    b1 = params["b1"].reshape(1, Fsz)
    b2 = params["b2"].reshape(1, Fsz)
    b3 = params["b3"].reshape(1, Fsz)
    b4l = b4[:C].reshape(1, C)
    b4t = b4[C:].reshape(1, C)

    a_2d = coup_a.reshape(M, C)
    b_2d = coup_b.reshape(M, C)

    # --- tiling ---------------------------------------------------------------
    tm = M if M <= block_m else block_m
    if tm != M and tm % 8 != 0:
        tm = max(8, (tm // 8) * 8)
    grid = (pl.cdiv(M, tm),)

    f32 = jnp.dtype(jnp.float32).itemsize
    weight_bytes = (w1_t.size + w2_t.size + w3_t.size + w4l_t.size + w4t_t.size
                    + wc_t.size + 2 * Fsz + 2 * C) * f32
    tile_bytes = (3 * tm * C + tm) * f32         # a, b, out tiles + logs
    vmem_limit = int(2 * (weight_bytes + tile_bytes) + (16 << 20))
    vmem_limit = min(vmem_limit, 56 << 20)       # stay inside v7x's 64 MiB/TC

    resident = lambda i: (0, 0)
    rowtile = lambda i: (i, 0)

    out2, logs = pl.pallas_call(
        lstm_linear_kernel,
        out_shape=(
            jax.ShapeDtypeStruct((M, C), coup_b.dtype),
            jax.ShapeDtypeStruct((M, 1), jnp.float32),
        ),
        grid=grid,
        in_specs=[
            pl.BlockSpec((tm, C), rowtile),       # coup_a tile
            pl.BlockSpec((tm, C), rowtile),       # coup_b tile
            pl.BlockSpec((C, Fsz), resident),     # w1^T
            pl.BlockSpec((1, Fsz), resident),     # b1
            pl.BlockSpec((Fsz, Fsz), resident),   # w2^T
            pl.BlockSpec((1, Fsz), resident),     # b2
            pl.BlockSpec((Fsz, Fsz), resident),   # w3^T
            pl.BlockSpec((1, Fsz), resident),     # b3
            pl.BlockSpec((Fsz, C), resident),     # w4 (log half)^T
            pl.BlockSpec((1, C), resident),       # b4 (log half)
            pl.BlockSpec((Fsz, C), resident),     # w4 (t half)^T
            pl.BlockSpec((1, C), resident),       # b4 (t half)
            pl.BlockSpec((C, C), resident),       # (weight_r @ weight)^T
        ],
        out_specs=(
            pl.BlockSpec((tm, C), rowtile),
            pl.BlockSpec((tm, 1), rowtile),
        ),
        compiler_params=pltpu.CompilerParams(
            dimension_semantics=("parallel",),
            vmem_limit_bytes=vmem_limit,
        ),
    )(a_2d, b_2d, w1_t, b1, w2_t, b2, w3_t, b3, w4l_t, b4l, w4t_t, b4t, wc_t)

    out_b = out2.reshape(B, T, C)
    logdet = (logs.reshape(B, T).sum(axis=1)
              + jnp.sum(params["w_s"]) + jnp.sum(params["w_s_r"]))
    return out_b, logdet


def lstm_linear_reference(params, coup_a, coup_b):
    hp = jax.lax.Precision.HIGHEST

    def lin(x, w, b):
        return jnp.einsum("btc,oc->bto", x, w, precision=hp) + b

    h = _gelu_tanh(lin(coup_a, params["w1"], params["b1"]))
    h = _gelu_tanh(lin(h, params["w2"], params["b2"]))
    h = _gelu_tanh(lin(h, params["w3"], params["b3"]))
    h = lin(h, params["w4"], params["b4"])
    C = coup_a.shape[-1]
    log_raw, t = h[..., :C], h[..., C:]
    s = _sigmoid(log_raw + 2.0)

    weight = _calc_weight(params["w_p"], params["w_l"], params["w_s"], params["w_u"],
                          params["l_mask"], params["u_mask"], params["s_sign"], params["l_eye"])
    weight_r = _calc_weight(params["w_p_r"], params["w_l_r"], params["w_s_r"], params["w_u_r"],
                            params["l_mask_r"], params["u_mask_r"], params["s_sign_r"],
                            params["l_eye_r"])
    y = jnp.einsum("btc,oc->bto", coup_b, weight, precision=hp)
    y = jnp.einsum("btc,oc->bto", y, weight_r, precision=hp)
    out_b = (y + t) * s
    logdet = (jnp.sum(jnp.log(s).reshape(coup_a.shape[0], -1), axis=1)
              + jnp.sum(params["w_s"]) + jnp.sum(params["w_s_r"]))
    return out_b, logdet


if __name__ == "__main__":
    B, T, C, Fsz = 2, 256, 32, 256

    key = jax.random.PRNGKey(0)
    keys = jax.random.split(key, 8)

    def dense(k, out_dim, in_dim):
        kw, kb = jax.random.split(k)
        w = jax.random.normal(kw, (out_dim, in_dim), jnp.float32) / jnp.sqrt(in_dim)
        b = 0.01 * jax.random.normal(kb, (out_dim,), jnp.float32)
        return w, b

    # TODO(synk): the PyTorch module builds w_p/w_l/w_s/w_u via scipy qr+lu at
    # construction time; here deterministic jax.random tensors of the same
    # shapes/roles are used — the forward math (mask/exp/diag/matmul) is identical.
    def inv_params(k, C, suffix=""):
        k1, k2, k3, k4 = jax.random.split(k, 4)
        perm = jax.random.permutation(k1, C)
        u_mask = jnp.triu(jnp.ones((C, C), jnp.float32), 1)
        return {
            "w_p" + suffix: jnp.eye(C, dtype=jnp.float32)[perm],
            "w_l" + suffix: 0.1 * jax.random.normal(k2, (C, C), jnp.float32),
            "w_u" + suffix: 0.1 * jax.random.normal(k3, (C, C), jnp.float32),
            "w_s" + suffix: 0.1 * jax.random.normal(k4, (C,), jnp.float32),
            "s_sign" + suffix: jnp.where(jnp.arange(C) % 2 == 0, 1.0, -1.0).astype(jnp.float32),
            "u_mask" + suffix: u_mask,
            "l_mask" + suffix: u_mask.T,
            "l_eye" + suffix: jnp.eye(C, dtype=jnp.float32),
        }

    params = {}
    params["w1"], params["b1"] = dense(keys[0], Fsz, C)
    params["w2"], params["b2"] = dense(keys[1], Fsz, Fsz)
    params["w3"], params["b3"] = dense(keys[2], Fsz, Fsz)
    params["w4"], params["b4"] = dense(keys[3], 2 * C, Fsz)
    params.update(inv_params(keys[4], C))
    params.update(inv_params(keys[5], C, "_r"))

    coup_a = jax.random.normal(keys[6], (B, T, C), jnp.float32)
    coup_b = jax.random.normal(keys[7], (B, T, C), jnp.float32)

    out_b, logdet = lstm_linear_forward(params, coup_a, coup_b, block_m=256)
    jax.block_until_ready((out_b, logdet))

    ref_out, ref_logdet = lstm_linear_reference(params, coup_a, coup_b)
    assert out_b.shape == (B, T, C)
    assert logdet.shape == (B,)
    assert jnp.allclose(out_b, ref_out, atol=2e-3, rtol=2e-3), "out_b mismatch"
    assert jnp.allclose(logdet, ref_logdet, atol=5e-2, rtol=2e-3), "logdet mismatch"

    print("KERNEL_OK")
</pallas_src>

<mosaic_0001>
module attributes {stable_mosaic.version = 11 : i64} {
  func.func @lstm_linear_kernel(%arg0: i32, %arg1: memref<256x32xf32, #tpu.memory_space<vmem>>, %arg2: memref<256x32xf32, #tpu.memory_space<vmem>>, %arg3: memref<32x256xf32, #tpu.memory_space<vmem>>, %arg4: memref<1x256xf32, #tpu.memory_space<vmem>>, %arg5: memref<256x256xf32, #tpu.memory_space<vmem>>, %arg6: memref<1x256xf32, #tpu.memory_space<vmem>>, %arg7: memref<256x256xf32, #tpu.memory_space<vmem>>, %arg8: memref<1x256xf32, #tpu.memory_space<vmem>>, %arg9: memref<256x32xf32, #tpu.memory_space<vmem>>, %arg10: memref<1x32xf32, #tpu.memory_space<vmem>>, %arg11: memref<256x32xf32, #tpu.memory_space<vmem>>, %arg12: memref<1x32xf32, #tpu.memory_space<vmem>>, %arg13: memref<32x32xf32, #tpu.memory_space<vmem>>, %arg14: memref<256x32xf32, #tpu.memory_space<vmem>>, %arg15: memref<256x1xf32, #tpu.memory_space<vmem>>) attributes {dimension_semantics = [#tpu.dimension_semantics<parallel>], iteration_bounds = array<i64: 2>, scalar_prefetch = 0 : i64, scratch_operands = 0 : i64, tpu.core_type = #tpu.core_type<tc>, window_params = [{transform_indices = @transform_0, window_bounds = array<i64: 256, 32>}, {transform_indices = @transform_1, window_bounds = array<i64: 256, 32>}, {pipeline_mode = #tpu.pipeline_mode<synchronous>, transform_indices = @transform_2, window_bounds = array<i64: 32, 256>}, {pipeline_mode = #tpu.pipeline_mode<synchronous>, transform_indices = @transform_3, window_bounds = array<i64: 1, 256>}, {pipeline_mode = #tpu.pipeline_mode<synchronous>, transform_indices = @transform_4, window_bounds = array<i64: 256, 256>}, {pipeline_mode = #tpu.pipeline_mode<synchronous>, transform_indices = @transform_5, window_bounds = array<i64: 1, 256>}, {pipeline_mode = #tpu.pipeline_mode<synchronous>, transform_indices = @transform_6, window_bounds = array<i64: 256, 256>}, {pipeline_mode = #tpu.pipeline_mode<synchronous>, transform_indices = @transform_7, window_bounds = array<i64: 1, 256>}, {pipeline_mode = #tpu.pipeline_mode<synchronous>, transform_indices = @transform_8, window_bounds = array<i64: 256, 32>}, {pipeline_mode = #tpu.pipeline_mode<synchronous>, transform_indices = @transform_9, window_bounds = array<i64: 1, 32>}, {pipeline_mode = #tpu.pipeline_mode<synchronous>, transform_indices = @transform_10, window_bounds = array<i64: 256, 32>}, {pipeline_mode = #tpu.pipeline_mode<synchronous>, transform_indices = @transform_11, window_bounds = array<i64: 1, 32>}, {pipeline_mode = #tpu.pipeline_mode<synchronous>, transform_indices = @transform_12, window_bounds = array<i64: 32, 32>}, {transform_indices = @transform_13, window_bounds = array<i64: 256, 32>}, {transform_indices = @transform_14, window_bounds = array<i64: 256, 1>}]} {
    %c0 = arith.constant 0 : index
    %c0_0 = arith.constant 0 : index
    %0 = vector.load %arg1[%c0, %c0_0] : memref<256x32xf32, #tpu.memory_space<vmem>>, vector<256x32xf32>
    %c0_1 = arith.constant 0 : index
    %c0_2 = arith.constant 0 : index
    %1 = vector.load %arg3[%c0_1, %c0_2] : memref<32x256xf32, #tpu.memory_space<vmem>>, vector<32x256xf32>
    %cst = arith.constant dense<0.000000e+00> : vector<256x256xf32>
    %2 = tpu.matmul %0, %1, %cst {dimension_numbers = #tpu.dot_dimension_numbers<[1], [0], [0], [1], [0, 0, 1, 1], [], []>} : vector<256x32xf32>, vector<32x256xf32>, vector<256x256xf32> -> vector<256x256xf32>
    %c0_3 = arith.constant 0 : index
    %c0_4 = arith.constant 0 : index
    %3 = vector.load %arg4[%c0_3, %c0_4] : memref<1x256xf32, #tpu.memory_space<vmem>>, vector<1x256xf32>
    %4 = vector.broadcast %3 : vector<1x256xf32> to vector<256x256xf32>
    %5 = arith.addf %2, %4 : vector<256x256xf32>
    %cst_5 = arith.constant 5.000000e-01 : f32
    %6 = vector.broadcast %cst_5 : f32 to vector<256x256xf32>
    %7 = arith.mulf %6, %5 : vector<256x256xf32>
    %cst_6 = arith.constant 4.471500e-02 : f32
    %8 = vector.broadcast %cst_6 : f32 to vector<256x256xf32>
    %9 = arith.mulf %8, %5 : vector<256x256xf32>
    %10 = arith.mulf %9, %5 : vector<256x256xf32>
    %11 = arith.mulf %10, %5 : vector<256x256xf32>
    %12 = arith.addf %5, %11 : vector<256x256xf32>
    %cst_7 = arith.constant 0.797884583 : f32
    %13 = vector.broadcast %cst_7 : f32 to vector<256x256xf32>
    %14 = arith.mulf %13, %12 : vector<256x256xf32>
    %15 = math.tanh %14 : vector<256x256xf32>
    %cst_8 = arith.constant 1.000000e+00 : f32
    %16 = vector.broadcast %cst_8 : f32 to vector<256x256xf32>
    %17 = arith.addf %16, %15 : vector<256x256xf32>
    %18 = arith.mulf %7, %17 : vector<256x256xf32>
    %c0_9 = arith.constant 0 : index
    %c0_10 = arith.constant 0 : index
    %19 = vector.load %arg5[%c0_9, %c0_10] : memref<256x256xf32, #tpu.memory_space<vmem>>, vector<256x256xf32>
    %cst_11 = arith.constant dense<0.000000e+00> : vector<256x256xf32>
    %20 = tpu.matmul %18, %19, %cst_11 {dimension_numbers = #tpu.dot_dimension_numbers<[1], [0], [0], [1], [0, 0, 1, 1], [], []>} : vector<256x256xf32>, vector<256x256xf32>, vector<256x256xf32> -> vector<256x256xf32>
    %c0_12 = arith.constant 0 : index
    %c0_13 = arith.constant 0 : index
    %21 = vector.load %arg6[%c0_12, %c0_13] : memref<1x256xf32, #tpu.memory_space<vmem>>, vector<1x256xf32>
    %22 = vector.broadcast %21 : vector<1x256xf32> to vector<256x256xf32>
    %23 = arith.addf %20, %22 : vector<256x256xf32>
    %cst_14 = arith.constant 5.000000e-01 : f32
    %24 = vector.broadcast %cst_14 : f32 to vector<256x256xf32>
    %25 = arith.mulf %24, %23 : vector<256x256xf32>
    %cst_15 = arith.constant 4.471500e-02 : f32
    %26 = vector.broadcast %cst_15 : f32 to vector<256x256xf32>
    %27 = arith.mulf %26, %23 : vector<256x256xf32>
    %28 = arith.mulf %27, %23 : vector<256x256xf32>
    %29 = arith.mulf %28, %23 : vector<256x256xf32>
    %30 = arith.addf %23, %29 : vector<256x256xf32>
    %cst_16 = arith.constant 0.797884583 : f32
    %31 = vector.broadcast %cst_16 : f32 to vector<256x256xf32>
    %32 = arith.mulf %31, %30 : vector<256x256xf32>
    %33 = math.tanh %32 : vector<256x256xf32>
    %cst_17 = arith.constant 1.000000e+00 : f32
    %34 = vector.broadcast %cst_17 : f32 to vector<256x256xf32>
    %35 = arith.addf %34, %33 : vector<256x256xf32>
    %36 = arith.mulf %25, %35 : vector<256x256xf32>
    %c0_18 = arith.constant 0 : index
    %c0_19 = arith.constant 0 : index
    %37 = vector.load %arg7[%c0_18, %c0_19] : memref<256x256xf32, #tpu.memory_space<vmem>>, vector<256x256xf32>
    %cst_20 = arith.constant dense<0.000000e+00> : vector<256x256xf32>
    %38 = tpu.matmul %36, %37, %cst_20 {dimension_numbers = #tpu.dot_dimension_numbers<[1], [0], [0], [1], [0, 0, 1, 1], [], []>} : vector<256x256xf32>, vector<256x256xf32>, vector<256x256xf32> -> vector<256x256xf32>
    %c0_21 = arith.constant 0 : index
    %c0_22 = arith.constant 0 : index
    %39 = vector.load %arg8[%c0_21, %c0_22] : memref<1x256xf32, #tpu.memory_space<vmem>>, vector<1x256xf32>
    %40 = vector.broadcast %39 : vector<1x256xf32> to vector<256x256xf32>
    %41 = arith.addf %38, %40 : vector<256x256xf32>
    %cst_23 = arith.constant 5.000000e-01 : f32
    %42 = vector.broadcast %cst_23 : f32 to vector<256x256xf32>
    %43 = arith.mulf %42, %41 : vector<256x256xf32>
    %cst_24 = arith.constant 4.471500e-02 : f32
    %44 = vector.broadcast %cst_24 : f32 to vector<256x256xf32>
    %45 = arith.mulf %44, %41 : vector<256x256xf32>
    %46 = arith.mulf %45, %41 : vector<256x256xf32>
    %47 = arith.mulf %46, %41 : vector<256x256xf32>
    %48 = arith.addf %41, %47 : vector<256x256xf32>
    %cst_25 = arith.constant 0.797884583 : f32
    %49 = vector.broadcast %cst_25 : f32 to vector<256x256xf32>
    %50 = arith.mulf %49, %48 : vector<256x256xf32>
    %51 = math.tanh %50 : vector<256x256xf32>
    %cst_26 = arith.constant 1.000000e+00 : f32
    %52 = vector.broadcast %cst_26 : f32 to vector<256x256xf32>
    %53 = arith.addf %52, %51 : vector<256x256xf32>
    %54 = arith.mulf %43, %53 : vector<256x256xf32>
    %c0_27 = arith.constant 0 : index
    %c0_28 = arith.constant 0 : index
    %55 = vector.load %arg9[%c0_27, %c0_28] : memref<256x32xf32, #tpu.memory_space<vmem>>, vector<256x32xf32>
    %cst_29 = arith.constant dense<0.000000e+00> : vector<256x32xf32>
    %56 = tpu.matmul %54, %55, %cst_29 {dimension_numbers = #tpu.dot_dimension_numbers<[1], [0], [0], [1], [0, 0, 1, 1], [], []>} : vector<256x256xf32>, vector<256x32xf32>, vector<256x32xf32> -> vector<256x32xf32>
    %c0_30 = arith.constant 0 : index
    %c0_31 = arith.constant 0 : index
    %57 = vector.load %arg10[%c0_30, %c0_31] : memref<1x32xf32, #tpu.memory_space<vmem>>, vector<1x32xf32>
    %58 = vector.broadcast %57 : vector<1x32xf32> to vector<256x32xf32>
    %59 = arith.addf %56, %58 : vector<256x32xf32>
    %c0_32 = arith.constant 0 : index
    %c0_33 = arith.constant 0 : index
    %60 = vector.load %arg11[%c0_32, %c0_33] : memref<256x32xf32, #tpu.memory_space<vmem>>, vector<256x32xf32>
    %cst_34 = arith.constant dense<0.000000e+00> : vector<256x32xf32>
    %61 = tpu.matmul %54, %60, %cst_34 {dimension_numbers = #tpu.dot_dimension_numbers<[1], [0], [0], [1], [0, 0, 1, 1], [], []>} : vector<256x256xf32>, vector<256x32xf32>, vector<256x32xf32> -> vector<256x32xf32>
    %c0_35 = arith.constant 0 : index
    %c0_36 = arith.constant 0 : index
    %62 = vector.load %arg12[%c0_35, %c0_36] : memref<1x32xf32, #tpu.memory_space<vmem>>, vector<1x32xf32>
    %63 = vector.broadcast %62 : vector<1x32xf32> to vector<256x32xf32>
    %64 = arith.addf %61, %63 : vector<256x32xf32>
    %cst_37 = arith.constant 2.000000e+00 : f32
    %65 = vector.broadcast %cst_37 : f32 to vector<256x32xf32>
    %66 = arith.addf %59, %65 : vector<256x32xf32>
    %cst_38 = arith.constant 0.000000e+00 : f32
    %67 = vector.broadcast %cst_38 : f32 to vector<256x32xf32>
    %68 = arith.subf %67, %66 : vector<256x32xf32>
    %69 = math.exp %68 : vector<256x32xf32>
    %cst_39 = arith.constant 1.000000e+00 : f32
    %70 = vector.broadcast %cst_39 : f32 to vector<256x32xf32>
    %71 = arith.addf %70, %69 : vector<256x32xf32>
    %cst_40 = arith.constant 1.000000e+00 : f32
    %72 = vector.broadcast %cst_40 : f32 to vector<256x32xf32>
    %73 = arith.divf %72, %71 : vector<256x32xf32>
    %c0_41 = arith.constant 0 : index
    %c0_42 = arith.constant 0 : index
    %74 = vector.load %arg2[%c0_41, %c0_42] : memref<256x32xf32, #tpu.memory_space<vmem>>, vector<256x32xf32>
    %c0_43 = arith.constant 0 : index
    %c0_44 = arith.constant 0 : index
    %75 = vector.load %arg13[%c0_43, %c0_44] : memref<32x32xf32, #tpu.memory_space<vmem>>, vector<32x32xf32>
    %cst_45 = arith.constant dense<0.000000e+00> : vector<256x32xf32>
    %76 = tpu.matmul %74, %75, %cst_45 {dimension_numbers = #tpu.dot_dimension_numbers<[1], [0], [0], [1], [0, 0, 1, 1], [], []>} : vector<256x32xf32>, vector<32x32xf32>, vector<256x32xf32> -> vector<256x32xf32>
    %77 = arith.addf %76, %64 : vector<256x32xf32>
    %78 = arith.mulf %77, %73 : vector<256x32xf32>
    %c0_46 = arith.constant 0 : index
    %c0_47 = arith.constant 0 : index
    %79 = vector.load %arg14[%c0_46, %c0_47] : memref<256x32xf32, #tpu.memory_space<vmem>>, vector<256x32xf32>
    tpu.vector_store %arg14[%c0_46, %c0_47], %78 {strides = array<i32>} : memref<256x32xf32, #tpu.memory_space<vmem>>, vector<256x32xf32>,
    %80 = math.log %73 : vector<256x32xf32>
    %cst_48 = arith.constant dense<0.000000e+00> : vector<256xf32>
    %81 = vector.multi_reduction <add>, %80, %cst_48 [1] : vector<256x32xf32> to vector<256xf32>
    %82 = vector.shape_cast %81 : vector<256xf32> to vector<256x1xf32>
    %c0_49 = arith.constant 0 : index
    %c0_50 = arith.constant 0 : index
    %83 = vector.load %arg15[%c0_49, %c0_50] : memref<256x1xf32, #tpu.memory_space<vmem>>, vector<256x1xf32>
    tpu.vector_store %arg15[%c0_49, %c0_50], %82 {strides = array<i32>} : memref<256x1xf32, #tpu.memory_space<vmem>>, vector<256x1xf32>,
    return
  }
  func.func @transform_0(%arg0: i32) -> (i32, i32) {
    %c0_i32 = arith.constant 0 : i32
    %c0_i32_0 = arith.constant 0 : i32
    return %arg0, %c0_i32 : i32, i32
  }
  func.func @transform_1(%arg0: i32) -> (i32, i32) {
    %c0_i32 = arith.constant 0 : i32
    %c0_i32_0 = arith.constant 0 : i32
    return %arg0, %c0_i32 : i32, i32
  }
  func.func @transform_2(%arg0: i32) -> (i32, i32) {
    %c0_i32 = arith.constant 0 : i32
    %c0_i32_0 = arith.constant 0 : i32
    %c0_i32_1 = arith.constant 0 : i32
    return %c0_i32, %c0_i32_0 : i32, i32
  }
  func.func @transform_3(%arg0: i32) -> (i32, i32) {
    %c0_i32 = arith.constant 0 : i32
    %c0_i32_0 = arith.constant 0 : i32
    %c0_i32_1 = arith.constant 0 : i32
    return %c0_i32, %c0_i32_0 : i32, i32
  }
  func.func @transform_4(%arg0: i32) -> (i32, i32) {
    %c0_i32 = arith.constant 0 : i32
    %c0_i32_0 = arith.constant 0 : i32
    %c0_i32_1 = arith.constant 0 : i32
    return %c0_i32, %c0_i32_0 : i32, i32
  }
  func.func @transform_5(%arg0: i32) -> (i32, i32) {
    %c0_i32 = arith.constant 0 : i32
    %c0_i32_0 = arith.constant 0 : i32
    %c0_i32_1 = arith.constant 0 : i32
    return %c0_i32, %c0_i32_0 : i32, i32
  }
  func.func @transform_6(%arg0: i32) -> (i32, i32) {
    %c0_i32 = arith.constant 0 : i32
    %c0_i32_0 = arith.constant 0 : i32
    %c0_i32_1 = arith.constant 0 : i32
    return %c0_i32, %c0_i32_0 : i32, i32
  }
  func.func @transform_7(%arg0: i32) -> (i32, i32) {
    %c0_i32 = arith.constant 0 : i32
    %c0_i32_0 = arith.constant 0 : i32
    %c0_i32_1 = arith.constant 0 : i32
    return %c0_i32, %c0_i32_0 : i32, i32
  }
  func.func @transform_8(%arg0: i32) -> (i32, i32) {
    %c0_i32 = arith.constant 0 : i32
    %c0_i32_0 = arith.constant 0 : i32
    %c0_i32_1 = arith.constant 0 : i32
    return %c0_i32, %c0_i32_0 : i32, i32
  }
  func.func @transform_9(%arg0: i32) -> (i32, i32) {
    %c0_i32 = arith.constant 0 : i32
    %c0_i32_0 = arith.constant 0 : i32
    %c0_i32_1 = arith.constant 0 : i32
    return %c0_i32, %c0_i32_0 : i32, i32
  }
  func.func @transform_10(%arg0: i32) -> (i32, i32) {
    %c0_i32 = arith.constant 0 : i32
    %c0_i32_0 = arith.constant 0 : i32
    %c0_i32_1 = arith.constant 0 : i32
    return %c0_i32, %c0_i32_0 : i32, i32
  }
  func.func @transform_11(%arg0: i32) -> (i32, i32) {
    %c0_i32 = arith.constant 0 : i32
    %c0_i32_0 = arith.constant 0 : i32
    %c0_i32_1 = arith.constant 0 : i32
    return %c0_i32, %c0_i32_0 : i32, i32
  }
  func.func @transform_12(%arg0: i32) -> (i32, i32) {
    %c0_i32 = arith.constant 0 : i32
    %c0_i32_0 = arith.constant 0 : i32
    %c0_i32_1 = arith.constant 0 : i32
    return %c0_i32, %c0_i32_0 : i32, i32
  }
  func.func @transform_13(%arg0: i32) -> (i32, i32) {
    %c0_i32 = arith.constant 0 : i32
    %c0_i32_0 = arith.constant 0 : i32
    return %arg0, %c0_i32 : i32, i32
  }
  func.func @transform_14(%arg0: i32) -> (i32, i32) {
    %c0_i32 = arith.constant 0 : i32
    %c0_i32_0 = arith.constant 0 : i32
    return %arg0, %c0_i32 : i32, i32
  }
}

</mosaic_0001>

<llo_original>
// kernel: tpu_custom_call.1
$region0: #{tpu_custom_call.1}
  #allocation0 [shape = 'u32[]', space=smem, size = 0x4, offset = 0x4, fixed_abs, tag = 'smem constant byte address 0x4 - core index']
  #allocation1 [shape = 'u32[144,128]{1,0:T(1,128)}', space=vmem, size = 0x12000, scoped, tag = 'internal scratch']
  %s0 = inlined_call_operand.vmem [shape: f32[512,32], index: 0, kind: input, shape index: {}]
  %s1 = inlined_call_operand.vmem [shape: f32[512,32], index: 1, kind: input, shape index: {}]
  %s2 = inlined_call_operand.vmem [shape: f32[32,256], index: 2, kind: input, shape index: {}]
  %s3 = inlined_call_operand.vmem [shape: f32[1,256], index: 3, kind: input, shape index: {}]
  %s4 = inlined_call_operand.vmem [shape: f32[256,256], index: 4, kind: input, shape index: {}]
  %s5 = inlined_call_operand.vmem [shape: f32[1,256], index: 5, kind: input, shape index: {}]
  %s6 = inlined_call_operand.vmem [shape: f32[256,256], index: 6, kind: input, shape index: {}]
  %s7 = inlined_call_operand.vmem [shape: f32[1,256], index: 7, kind: input, shape index: {}]
  %s8 = inlined_call_operand.vmem [shape: f32[256,32], index: 8, kind: input, shape index: {}]
  %s9 = inlined_call_operand.vmem [shape: f32[1,32], index: 9, kind: input, shape index: {}]
  %s10 = inlined_call_operand.vmem [shape: f32[256,32], index: 10, kind: input, shape index: {}]
  %s11 = inlined_call_operand.vmem [shape: f32[1,32], index: 11, kind: input, shape index: {}]
  %s12 = inlined_call_operand.vmem [shape: f32[32,32], index: 12, kind: input, shape index: {}]
  %s13 = inlined_call_operand.vmem [shape: f32[512,32], index: 13, kind: output, shape index: {0}]
  %s14 = inlined_call_operand.vmem [shape: f32[512,1], index: 14, kind: output, shape index: {1}]
  %15 = xla_tuple %s13, %s14
  %s16 = sld [smem:[#allocation0]]
  $region93: #{tpu_custom_call.1} parent=0
    _
  %s18 = ssub.s32 1, %s16
  %s19 = scalar_select 0, %s18, %s16
  loop: start=0, step=1, limit=4
  $region2: #{tpu_custom_call.1} parent=0 // loop_pre_header
    _
  $region3: #{tpu_custom_call.1} parent=0 // loop_header
    %s21 = sphi 0, %s25
    %p22 = scmp.ge.s32.totalorder %s21, 4
    %s31 = sphi 0, %s33
    %s34 = sphi 0, %s31
    %s35 = sphi 0, %s34
    %s51 = sphi 0, %s35
    %s57 = sphi 0, %s59
    %s60 = sphi 0, %s57
    %s61 = sphi 0, %s60
    %s77 = sphi 0, %s61
    %s81 = sphi 0, %s81
    %s83 = sphi 0, %s81
    %s84 = sphi 0, %s83
    %s98 = sphi 0, %s84
    %s102 = sphi 0, %s102
    %s104 = sphi 0, %s102
    %s105 = sphi 0, %s104
    %s119 = sphi 0, %s105
    %s123 = sphi 0, %s123
    %s125 = sphi 0, %s123
    %s126 = sphi 0, %s125
    %s140 = sphi 0, %s126
    %s144 = sphi 0, %s144
    %s146 = sphi 0, %s144
    %s147 = sphi 0, %s146
    %s161 = sphi 0, %s147
    %s165 = sphi 0, %s165
    %s167 = sphi 0, %s165
    %s168 = sphi 0, %s167
    %s182 = sphi 0, %s168
    %s186 = sphi 0, %s186
    %s188 = sphi 0, %s186
    %s189 = sphi 0, %s188
    %s203 = sphi 0, %s189
    %s207 = sphi 0, %s207
    %s209 = sphi 0, %s207
    %s210 = sphi 0, %s209
    %s224 = sphi 0, %s210
    %s228 = sphi 0, %s228
    %s230 = sphi 0, %s228
    %s231 = sphi 0, %s230
    %s245 = sphi 0, %s231
    %s249 = sphi 0, %s249
    %s251 = sphi 0, %s249
    %s252 = sphi 0, %s251
    %s266 = sphi 0, %s252
    %s270 = sphi 0, %s270
    %s272 = sphi 0, %s270
    %s273 = sphi 0, %s272
    %s287 = sphi 0, %s273
    %s291 = sphi 0, %s291
    %s293 = sphi 0, %s291
    %s294 = sphi 0, %s293
    %s308 = sphi 0, %s294
    %s314 = sphi 0, %s316
    %s317 = sphi 0, %s314
    %s318 = sphi 0, %s317
    %s334 = sphi 0, %s318
    %s340 = sphi 0, %s342
    %s343 = sphi 0, %s340
    %s344 = sphi 0, %s343
    %s360 = sphi 0, %s344
  $region4: #{tpu_custom_call.1} parent=0 // loop_header_branch
    %24 = sbr.rel (%p22) target = $region8
  $region5: #{tpu_custom_call.1} parent=0 // loop_body
    %s26 = ssub.s32 %s21, 1
    %s27 = ssub.s32 %s21, 2
    %s28 = sadd.s32 %s21, 1
    %s29 = ssub.s32 %s21, %s28
    %p30 = scmp.eq.s32.totalorder %s29, 0
    %s32 = sadd.s32 %s31, 1
    %s33 = scalar_select %p30, %s31, %s32
    %p36 = pneg %p30
    %p37 = scmp.eq.s32.totalorder %s21, 1
    %p38 = por %p36, %p37
    %p39 = scmp.ne.s32.totalorder %s31, %s34
    %p40 = scmp.eq.s32.totalorder %s21, 0
    %p41 = por %p39, %p40
    %p42 = scmp.ne.s32.totalorder %s31, %s34
    %p43 = scmp.eq.s32.totalorder %s26, 1
    %p44 = por %p42, %p43
    %p45 = scmp.ne.s32.totalorder %s34, %s35
    %p46 = scmp.eq.s32.totalorder %s26, 0
    %p47 = por %p45, %p46
    %p48 = scmp.ne.s32.totalorder %s34, %s35
    %p49 = scmp.eq.s32.totalorder %s27, 1
    %p50 = por %p48, %p49
    %p52 = scmp.ne.s32.totalorder %s35, %s51
    %p53 = scmp.eq.s32.totalorder %s27, 0
    %p54 = por %p52, %p53
    %s55 = ssub.s32 %s21, %s28
    %p56 = scmp.eq.s32.totalorder %s55, 0
    %s58 = sadd.s32 %s57, 1
    %s59 = scalar_select %p56, %s57, %s58
    %p62 = pneg %p56
    %p63 = scmp.eq.s32.totalorder %s21, 1
    %p64 = por %p62, %p63
    %p65 = scmp.ne.s32.totalorder %s57, %s60
    %p66 = scmp.eq.s32.totalorder %s21, 0
    %p67 = por %p65, %p66
    %p68 = scmp.ne.s32.totalorder %s57, %s60
    %p69 = scmp.eq.s32.totalorder %s26, 1
    %p70 = por %p68, %p69
    %p71 = scmp.ne.s32.totalorder %s60, %s61
    %p72 = scmp.eq.s32.totalorder %s26, 0
    %p73 = por %p71, %p72
    %p74 = scmp.ne.s32.totalorder %s60, %s61
    %p75 = scmp.eq.s32.totalorder %s27, 1
    %p76 = por %p74, %p75
    %p78 = scmp.ne.s32.totalorder %s61, %s77
    %p79 = scmp.eq.s32.totalorder %s27, 0
    %p80 = por %p78, %p79
    %s82 = sadd.s32 %s81, 1
    %p85 = scmp.eq.s32.totalorder %s21, 1
    %p86 = scmp.ne.s32.totalorder %s81, %s83
    %p87 = scmp.eq.s32.totalorder %s21, 0
    %p88 = por %p86, %p87
    %p89 = scmp.ne.s32.totalorder %s81, %s83
    %p90 = scmp.eq.s32.totalorder %s26, 1
    %p91 = por %p89, %p90
    %p92 = scmp.ne.s32.totalorder %s83, %s84
    %p93 = scmp.eq.s32.totalorder %s26, 0
    %p94 = por %p92, %p93
    %p95 = scmp.ne.s32.totalorder %s83, %s84
    %p96 = scmp.eq.s32.totalorder %s27, 1
    %p97 = por %p95, %p96
    %p99 = scmp.ne.s32.totalorder %s84, %s98
    %p100 = scmp.eq.s32.totalorder %s27, 0
    %p101 = por %p99, %p100
    %s103 = sadd.s32 %s102, 1
    %p106 = scmp.eq.s32.totalorder %s21, 1
    %p107 = scmp.ne.s32.totalorder %s102, %s104
    %p108 = scmp.eq.s32.totalorder %s21, 0
    %p109 = por %p107, %p108
    %p110 = scmp.ne.s32.totalorder %s102, %s104
    %p111 = scmp.eq.s32.totalorder %s26, 1
    %p112 = por %p110, %p111
    %p113 = scmp.ne.s32.totalorder %s104, %s105
    %p114 = scmp.eq.s32.totalorder %s26, 0
    %p115 = por %p113, %p114
    %p116 = scmp.ne.s32.totalorder %s104, %s105
    %p117 = scmp.eq.s32.totalorder %s27, 1
    %p118 = por %p116, %p117
    %p120 = scmp.ne.s32.totalorder %s105, %s119
    %p121 = scmp.eq.s32.totalorder %s27, 0
    %p122 = por %p120, %p121
    %s124 = sadd.s32 %s123, 1
    %p127 = scmp.eq.s32.totalorder %s21, 1
    %p128 = scmp.ne.s32.totalorder %s123, %s125
    %p129 = scmp.eq.s32.totalorder %s21, 0
    %p130 = por %p128, %p129
    %p131 = scmp.ne.s32.totalorder %s123, %s125
    %p132 = scmp.eq.s32.totalorder %s26, 1
    %p133 = por %p131, %p132
    %p134 = scmp.ne.s32.totalorder %s125, %s126
    %p135 = scmp.eq.s32.totalorder %s26, 0
    %p136 = por %p134, %p135
    %p137 = scmp.ne.s32.totalorder %s125, %s126
    %p138 = scmp.eq.s32.totalorder %s27, 1
    %p139 = por %p137, %p138
    %p141 = scmp.ne.s32.totalorder %s126, %s140
    %p142 = scmp.eq.s32.totalorder %s27, 0
    %p143 = por %p141, %p142
    %s145 = sadd.s32 %s144, 1
    %p148 = scmp.eq.s32.totalorder %s21, 1
    %p149 = scmp.ne.s32.totalorder %s144, %s146
    %p150 = scmp.eq.s32.totalorder %s21, 0
    %p151 = por %p149, %p150
    %p152 = scmp.ne.s32.totalorder %s144, %s146
    %p153 = scmp.eq.s32.totalorder %s26, 1
    %p154 = por %p152, %p153
    %p155 = scmp.ne.s32.totalorder %s146, %s147
    %p156 = scmp.eq.s32.totalorder %s26, 0
    %p157 = por %p155, %p156
    %p158 = scmp.ne.s32.totalorder %s146, %s147
    %p159 = scmp.eq.s32.totalorder %s27, 1
    %p160 = por %p158, %p159
    %p162 = scmp.ne.s32.totalorder %s147, %s161
    %p163 = scmp.eq.s32.totalorder %s27, 0
    %p164 = por %p162, %p163
    %s166 = sadd.s32 %s165, 1
    %p169 = scmp.eq.s32.totalorder %s21, 1
    %p170 = scmp.ne.s32.totalorder %s165, %s167
    %p171 = scmp.eq.s32.totalorder %s21, 0
    %p172 = por %p170, %p171
    %p173 = scmp.ne.s32.totalorder %s165, %s167
    %p174 = scmp.eq.s32.totalorder %s26, 1
    %p175 = por %p173, %p174
    %p176 = scmp.ne.s32.totalorder %s167, %s168
    %p177 = scmp.eq.s32.totalorder %s26, 0
    %p178 = por %p176, %p177
    %p179 = scmp.ne.s32.totalorder %s167, %s168
    %p180 = scmp.eq.s32.totalorder %s27, 1
    %p181 = por %p179, %p180
    %p183 = scmp.ne.s32.totalorder %s168, %s182
    %p184 = scmp.eq.s32.totalorder %s27, 0
    %p185 = por %p183, %p184
    %s187 = sadd.s32 %s186, 1
    %p190 = scmp.eq.s32.totalorder %s21, 1
    %p191 = scmp.ne.s32.totalorder %s186, %s188
    %p192 = scmp.eq.s32.totalorder %s21, 0
    %p193 = por %p191, %p192
    %p194 = scmp.ne.s32.totalorder %s186, %s188
    %p195 = scmp.eq.s32.totalorder %s26, 1
    %p196 = por %p194, %p195
    %p197 = scmp.ne.s32.totalorder %s188, %s189
    %p198 = scmp.eq.s32.totalorder %s26, 0
    %p199 = por %p197, %p198
    %p200 = scmp.ne.s32.totalorder %s188, %s189
    %p201 = scmp.eq.s32.totalorder %s27, 1
    %p202 = por %p200, %p201
    %p204 = scmp.ne.s32.totalorder %s189, %s203
    %p205 = scmp.eq.s32.totalorder %s27, 0
    %p206 = por %p204, %p205
    %s208 = sadd.s32 %s207, 1
    %p211 = scmp.eq.s32.totalorder %s21, 1
    %p212 = scmp.ne.s32.totalorder %s207, %s209
    %p213 = scmp.eq.s32.totalorder %s21, 0
    %p214 = por %p212, %p213
    %p215 = scmp.ne.s32.totalorder %s207, %s209
    %p216 = scmp.eq.s32.totalorder %s26, 1
    %p217 = por %p215, %p216
    %p218 = scmp.ne.s32.totalorder %s209, %s210
    %p219 = scmp.eq.s32.totalorder %s26, 0
    %p220 = por %p218, %p219
    %p221 = scmp.ne.s32.totalorder %s209, %s210
    %p222 = scmp.eq.s32.totalorder %s27, 1
    %p223 = por %p221, %p222
    %p225 = scmp.ne.s32.totalorder %s210, %s224
    %p226 = scmp.eq.s32.totalorder %s27, 0
    %p227 = por %p225, %p226
    %s229 = sadd.s32 %s228, 1
    %p232 = scmp.eq.s32.totalorder %s21, 1
    %p233 = scmp.ne.s32.totalorder %s228, %s230
    %p234 = scmp.eq.s32.totalorder %s21, 0
    %p235 = por %p233, %p234
    %p236 = scmp.ne.s32.totalorder %s228, %s230
    %p237 = scmp.eq.s32.totalorder %s26, 1
    %p238 = por %p236, %p237
    %p239 = scmp.ne.s32.totalorder %s230, %s231
    %p240 = scmp.eq.s32.totalorder %s26, 0
    %p241 = por %p239, %p240
    %p242 = scmp.ne.s32.totalorder %s230, %s231
    %p243 = scmp.eq.s32.totalorder %s27, 1
    %p244 = por %p242, %p243
    %p246 = scmp.ne.s32.totalorder %s231, %s245
    %p247 = scmp.eq.s32.totalorder %s27, 0
    %p248 = por %p246, %p247
    %s250 = sadd.s32 %s249, 1
    %p253 = scmp.eq.s32.totalorder %s21, 1
    %p254 = scmp.ne.s32.totalorder %s249, %s251
    %p255 = scmp.eq.s32.totalorder %s21, 0
    %p256 = por %p254, %p255
    %p257 = scmp.ne.s32.totalorder %s249, %s251
    %p258 = scmp.eq.s32.totalorder %s26, 1
    %p259 = por %p257, %p258
    %p260 = scmp.ne.s32.totalorder %s251, %s252
    %p261 = scmp.eq.s32.totalorder %s26, 0
    %p262 = por %p260, %p261
    %p263 = scmp.ne.s32.totalorder %s251, %s252
    %p264 = scmp.eq.s32.totalorder %s27, 1
    %p265 = por %p263, %p264
    %p267 = scmp.ne.s32.totalorder %s252, %s266
    %p268 = scmp.eq.s32.totalorder %s27, 0
    %p269 = por %p267, %p268
    %s271 = sadd.s32 %s270, 1
    %p274 = scmp.eq.s32.totalorder %s21, 1
    %p275 = scmp.ne.s32.totalorder %s270, %s272
    %p276 = scmp.eq.s32.totalorder %s21, 0
    %p277 = por %p275, %p276
    %p278 = scmp.ne.s32.totalorder %s270, %s272
    %p279 = scmp.eq.s32.totalorder %s26, 1
    %p280 = por %p278, %p279
    %p281 = scmp.ne.s32.totalorder %s272, %s273
    %p282 = scmp.eq.s32.totalorder %s26, 0
    %p283 = por %p281, %p282
    %p284 = scmp.ne.s32.totalorder %s272, %s273
    %p285 = scmp.eq.s32.totalorder %s27, 1
    %p286 = por %p284, %p285
    %p288 = scmp.ne.s32.totalorder %s273, %s287
    %p289 = scmp.eq.s32.totalorder %s27, 0
    %p290 = por %p288, %p289
    %s292 = sadd.s32 %s291, 1
    %p295 = scmp.eq.s32.totalorder %s21, 1
    %p296 = scmp.ne.s32.totalorder %s291, %s293
    %p297 = scmp.eq.s32.totalorder %s21, 0
    %p298 = por %p296, %p297
    %p299 = scmp.ne.s32.totalorder %s291, %s293
    %p300 = scmp.eq.s32.totalorder %s26, 1
    %p301 = por %p299, %p300
    %p302 = scmp.ne.s32.totalorder %s293, %s294
    %p303 = scmp.eq.s32.totalorder %s26, 0
    %p304 = por %p302, %p303
    %p305 = scmp.ne.s32.totalorder %s293, %s294
    %p306 = scmp.eq.s32.totalorder %s27, 1
    %p307 = por %p305, %p306
    %p309 = scmp.ne.s32.totalorder %s294, %s308
    %p310 = scmp.eq.s32.totalorder %s27, 0
    %p311 = por %p309, %p310
    %s312 = ssub.s32 %s21, %s28
    %p313 = scmp.eq.s32.totalorder %s312, 0
    %s315 = sadd.s32 %s314, 1
    %s316 = scalar_select %p313, %s314, %s315
    %p319 = pneg %p313
    %p320 = scmp.eq.s32.totalorder %s21, 1
    %p321 = por %p319, %p320
    %p322 = scmp.ne.s32.totalorder %s314, %s317
    %p323 = scmp.eq.s32.totalorder %s21, 0
    %p324 = por %p322, %p323
    %p325 = scmp.ne.s32.totalorder %s314, %s317
    %p326 = scmp.eq.s32.totalorder %s26, 1
    %p327 = por %p325, %p326
    %p328 = scmp.ne.s32.totalorder %s317, %s318
    %p329 = scmp.eq.s32.totalorder %s26, 0
    %p330 = por %p328, %p329
    %p331 = scmp.ne.s32.totalorder %s317, %s318
    %p332 = scmp.eq.s32.totalorder %s27, 1
    %p333 = por %p331, %p332
    %p335 = scmp.ne.s32.totalorder %s318, %s334
    %p336 = scmp.eq.s32.totalorder %s27, 0
    %p337 = por %p335, %p336
    %s338 = ssub.s32 %s21, %s28
    %p339 = scmp.eq.s32.totalorder %s338, 0
    %s341 = sadd.s32 %s340, 1
    %s342 = scalar_select %p339, %s340, %s341
    %p345 = pneg %p339
    %p346 = scmp.eq.s32.totalorder %s21, 1
    %p347 = por %p345, %p346
    %p348 = scmp.ne.s32.totalorder %s340, %s343
    %p349 = scmp.eq.s32.totalorder %s21, 0
    %p350 = por %p348, %p349
    %p351 = scmp.ne.s32.totalorder %s340, %s343
    %p352 = scmp.eq.s32.totalorder %s26, 1
    %p353 = por %p351, %p352
    %p354 = scmp.ne.s32.totalorder %s343, %s344
    %p355 = scmp.eq.s32.totalorder %s26, 0
    %p356 = por %p354, %p355
    %p357 = scmp.ne.s32.totalorder %s343, %s344
    %p358 = scmp.eq.s32.totalorder %s27, 1
    %p359 = por %p357, %p358
    %p361 = scmp.ne.s32.totalorder %s344, %s360
    %p362 = scmp.eq.s32.totalorder %s27, 0
    %p363 = por %p361, %p362
    %p364 = scmp.le.s32.totalorder 1, %s21
    %p365 = scmp.lt.s32.totalorder %s21, 3
    %p366 = pnand %p364, %p365
    %p367 = pneg %p366
    // Predicated region
    $region9: #{tpu_custom_call.1} parent=5 // pred_check
      _
    $region10: #{tpu_custom_call.1} parent=5 // pred_check_branch
      %369 = sbr.rel (%p366) target = $region12
    $region11: #{tpu_custom_call.1} parent=5 // pred_region
      %s370 = ssub.s32 %s21, 1
      // Predicated region
      $region13: #{tpu_custom_call.1} parent=11 // pred_check
        %p371 = pneg %p94
      $region14: #{tpu_custom_call.1} parent=11 // pred_check_branch
        %373 = sbr.rel (%p371) target = $region16
      $region15: #{tpu_custom_call.1} parent=11 // pred_region
        _
      $region16: #{tpu_custom_call.1} parent=11 // pred_fallthru
        _
      // Predicated region
      $region17: #{tpu_custom_call.1} parent=11 // pred_check
        %p374 = pneg %p115
      $region18: #{tpu_custom_call.1} parent=11 // pred_check_branch
        %376 = sbr.rel (%p374) target = $region20
      $region19: #{tpu_custom_call.1} parent=11 // pred_region
        _
      $region20: #{tpu_custom_call.1} parent=11 // pred_fallthru
        _
      // Predicated region
      $region21: #{tpu_custom_call.1} parent=11 // pred_check
        %p377 = pneg %p136
      $region22: #{tpu_custom_call.1} parent=11 // pred_check_branch
        %379 = sbr.rel (%p377) target = $region24
      $region23: #{tpu_custom_call.1} parent=11 // pred_region
        _
      $region24: #{tpu_custom_call.1} parent=11 // pred_fallthru
        _
      // Predicated region
      $region25: #{tpu_custom_call.1} parent=11 // pred_check
        %p380 = pneg %p157
      $region26: #{tpu_custom_call.1} parent=11 // pred_check_branch
        %382 = sbr.rel (%p380) target = $region28
      $region27: #{tpu_custom_call.1} parent=11 // pred_region
        _
      $region28: #{tpu_custom_call.1} parent=11 // pred_fallthru
        _
      // Predicated region
      $region29: #{tpu_custom_call.1} parent=11 // pred_check
        %p383 = pneg %p178
      $region30: #{tpu_custom_call.1} parent=11 // pred_check_branch
        %385 = sbr.rel (%p383) target = $region32
      $region31: #{tpu_custom_call.1} parent=11 // pred_region
        _
      $region32: #{tpu_custom_call.1} parent=11 // pred_fallthru
        _
      // Predicated region
      $region33: #{tpu_custom_call.1} parent=11 // pred_check
        %p386 = pneg %p199
      $region34: #{tpu_custom_call.1} parent=11 // pred_check_branch
        %388 = sbr.rel (%p386) target = $region36
      $region35: #{tpu_custom_call.1} parent=11 // pred_region
        _
      $region36: #{tpu_custom_call.1} parent=11 // pred_fallthru
        _
      // Predicated region
      $region37: #{tpu_custom_call.1} parent=11 // pred_check
        %p389 = pneg %p220
      $region38: #{tpu_custom_call.1} parent=11 // pred_check_branch
        %391 = sbr.rel (%p389) target = $region40
      $region39: #{tpu_custom_call.1} parent=11 // pred_region
        _
      $region40: #{tpu_custom_call.1} parent=11 // pred_fallthru
        _
      // Predicated region
      $region41: #{tpu_custom_call.1} parent=11 // pred_check
        %p392 = pneg %p241
      $region42: #{tpu_custom_call.1} parent=11 // pred_check_branch
        %394 = sbr.rel (%p392) target = $region44
      $region43: #{tpu_custom_call.1} parent=11 // pred_region
        _
      $region44: #{tpu_custom_call.1} parent=11 // pred_fallthru
        _
      // Predicated region
      $region45: #{tpu_custom_call.1} parent=11 // pred_check
        %p395 = pneg %p262
      $region46: #{tpu_custom_call.1} parent=11 // pred_check_branch
        %397 = sbr.rel (%p395) target = $region48
      $region47: #{tpu_custom_call.1} parent=11 // pred_region
        _
      $region48: #{tpu_custom_call.1} parent=11 // pred_fallthru
        _
      // Predicated region
      $region49: #{tpu_custom_call.1} parent=11 // pred_check
        %p398 = pneg %p283
      $region50: #{tpu_custom_call.1} parent=11 // pred_check_branch
        %400 = sbr.rel (%p398) target = $region52
      $region51: #{tpu_custom_call.1} parent=11 // pred_region
        _
      $region52: #{tpu_custom_call.1} parent=11 // pred_fallthru
        _
      // Predicated region
      $region53: #{tpu_custom_call.1} parent=11 // pred_check
        %p401 = pneg %p304
      $region54: #{tpu_custom_call.1} parent=11 // pred_check_branch
        %403 = sbr.rel (%p401) target = $region56
      $region55: #{tpu_custom_call.1} parent=11 // pred_region
        _
      $region56: #{tpu_custom_call.1} parent=11 // pred_fallthru
        _
    $region12: #{tpu_custom_call.1} parent=5 // pred_fallthru
      _
    %p404 = scmp.lt.s32.totalorder %s21, 2
    // Predicated region
    $region57: #{tpu_custom_call.1} parent=5 // pred_check
      %p405 = pneg %p404
    $region58: #{tpu_custom_call.1} parent=5 // pred_check_branch
      %407 = sbr.rel (%p405) target = $region60
    $region59: #{tpu_custom_call.1} parent=5 // pred_region
      // Predicated region
      $region61: #{tpu_custom_call.1} parent=59 // pred_check
        %p408 = pneg %p41
      $region62: #{tpu_custom_call.1} parent=59 // pred_check_branch
        %410 = sbr.rel (%p408) target = $region64
      $region63: #{tpu_custom_call.1} parent=59 // pred_region
        %s411 = smul.u32 32, %s21
        %p412 = scmp.lt.s32.totalorder %s411, 63
        %s413 = scalar_select %p412, %s411, 63
        %s414 = smul.addr %s413, 8
        %s415 = scalar_lea.vmem %s0, %s414
        %s416 = smul.u32 32, %s21
      $region64: #{tpu_custom_call.1} parent=59 // pred_fallthru
        _
      // Predicated region
      $region65: #{tpu_custom_call.1} parent=59 // pred_check
        %p417 = pneg %p67
      $region66: #{tpu_custom_call.1} parent=59 // pred_check_branch
        %419 = sbr.rel (%p417) target = $region68
      $region67: #{tpu_custom_call.1} parent=59 // pred_region
        %s420 = smul.u32 32, %s21
        %p421 = scmp.lt.s32.totalorder %s420, 63
        %s422 = scalar_select %p421, %s420, 63
        %s423 = smul.addr %s422, 8
        %s424 = scalar_lea.vmem %s1, %s423
        %s425 = smul.u32 32, %s21
      $region68: #{tpu_custom_call.1} parent=59 // pred_fallthru
        _
    $region60: #{tpu_custom_call.1} parent=5 // pred_fallthru
      _
    %p426 = scmp.le.s32.totalorder 1, %s21
    %p427 = scmp.lt.s32.totalorder %s21, 3
    %p428 = pnand %p426, %p427
    %p429 = pneg %p428
    // Predicated region
    $region69: #{tpu_custom_call.1} parent=5 // pred_check
      _
    $region70: #{tpu_custom_call.1} parent=5 // pred_check_branch
      %431 = sbr.rel (%p428) target = $region72
    $region71: #{tpu_custom_call.1} parent=5 // pred_region
      %s432 = ssub.s32 %s21, 1
      %s433 = smul.u32 32, %s26
      %p434 = scmp.lt.s32.totalorder %s433, 63
      %s435 = scalar_select %p434, %s433, 63
      %s436 = smul.addr %s435, 8
      %s437 = scalar_lea.vmem %s0, %s436
      %p438 = pneg %p47
      %p439 = pneg %p44
      %s440 = smul.u32 32, %s26
      %p441 = scmp.lt.s32.totalorder %s440, 63
      %s442 = scalar_select %p441, %s440, 63
      %s443 = smul.addr %s442, 8
      %s444 = scalar_lea.vmem %s1, %s443
      %p445 = pneg %p73
      %p446 = pneg %p70
      %p447 = pneg %p94
      %p448 = pneg %p91
      %p449 = pneg %p115
      %p450 = pneg %p112
      %p451 = pneg %p136
      %p452 = pneg %p133
      %p453 = pneg %p157
      %p454 = pneg %p154
      %p455 = pneg %p178
      %p456 = pneg %p175
      %p457 = pneg %p199
      %p458 = pneg %p196
      %p459 = pneg %p220
      %p460 = pneg %p217
      %p461 = pneg %p241
      %p462 = pneg %p238
      %p463 = pneg %p262
      %p464 = pneg %p259
      %p465 = pneg %p283
      %p466 = pneg %p280
      %p467 = pneg %p304
      %p468 = pneg %p301
      %p469 = pneg %p330
      %p470 = pneg %p327
      %s471 = smul.u32 32, %s26
      %p472 = scmp.lt.s32.totalorder %s471, 63
      %s473 = scalar_select %p472, %s471, 63
      %s474 = smul.addr %s473, 8
      %s475 = scalar_lea.vmem %s13, %s474
      %p476 = pneg %p356
      %p477 = pneg %p353
      %s478 = smul.u32 32, %s26
      %p479 = scmp.lt.s32.totalorder %s478, 63
      %s480 = scalar_select %p479, %s478, 63
      %s481 = smul.addr %s480, 8
      %s482 = scalar_lea.vmem %s14, %s481
      %s483 = smul.u32 32, %s26
      %p484 = scmp.lt.s32.totalorder %s483, 63
      %s485 = scalar_select %p484, %s483, 63
      %s486 = smul.addr %s485, 8
      %s487 = scalar_lea.vmem %s0, %s486
      %s488 = smul.u32 32, %s26
      %s489 = smul.u32 32, %s26
      %p490 = scmp.lt.s32.totalorder %s489, 63
      %s491 = scalar_select %p490, %s489, 63
      %s492 = smul.addr %s491, 8
      %s493 = scalar_lea.vmem %s1, %s492
      %s494 = smul.u32 32, %s26
      %s495 = smul.u32 32, %s26
      %p496 = scmp.lt.s32.totalorder %s495, 63
      %s497 = scalar_select %p496, %s495, 63
      %s498 = smul.addr %s497, 8
      %s499 = scalar_lea.vmem %s13, %s498
      %s500 = smul.u32 32, %s26
      %s501 = smul.u32 32, %s26
      %p502 = scmp.lt.s32.totalorder %s501, 63
      %s503 = scalar_select %p502, %s501, 63
      %s504 = smul.addr %s503, 8
      %s505 = scalar_lea.vmem %s14, %s504
      %s506 = smul.u32 32, %s26
      %v507 = vld [vmem:[%s487] sm:$0xff]
      %v508 = vld [vmem:[%s487 + $0x8] sm:$0xff]
      %v509 = vld [vmem:[%s487 + $0x10] sm:$0xff]
      %v510 = vld [vmem:[%s487 + $0x18] sm:$0xff]
      %v511 = vld [vmem:[%s487 + $0x20] sm:$0xff]
      %v512 = vld [vmem:[%s487 + $0x28] sm:$0xff]
      %v513 = vld [vmem:[%s487 + $0x30] sm:$0xff]
      %v514 = vld [vmem:[%s487 + $0x38] sm:$0xff]
      %v515 = vld [vmem:[%s487 + $0x40] sm:$0xff]
      %v516 = vld [vmem:[%s487 + $0x48] sm:$0xff]
      %v517 = vld [vmem:[%s487 + $0x50] sm:$0xff]
      %v518 = vld [vmem:[%s487 + $0x58] sm:$0xff]
      %v519 = vld [vmem:[%s487 + $0x60] sm:$0xff]
      %v520 = vld [vmem:[%s487 + $0x68] sm:$0xff]
      %v521 = vld [vmem:[%s487 + $0x70] sm:$0xff]
      %v522 = vld [vmem:[%s487 + $0x78] sm:$0xff]
      %v523 = vld [vmem:[%s487 + $0x80] sm:$0xff]
      %v524 = vld [vmem:[%s487 + $0x88] sm:$0xff]
      %v525 = vld [vmem:[%s487 + $0x90] sm:$0xff]
      %v526 = vld [vmem:[%s487 + $0x98] sm:$0xff]
      %v527 = vld [vmem:[%s487 + $0xa0] sm:$0xff]
      %v528 = vld [vmem:[%s487 + $0xa8] sm:$0xff]
      %v529 = vld [vmem:[%s487 + $0xb0] sm:$0xff]
      %v530 = vld [vmem:[%s487 + $0xb8] sm:$0xff]
      %v531 = vld [vmem:[%s487 + $0xc0] sm:$0xff]
      %v532 = vld [vmem:[%s487 + $0xc8] sm:$0xff]
      %v533 = vld [vmem:[%s487 + $0xd0] sm:$0xff]
      %v534 = vld [vmem:[%s487 + $0xd8] sm:$0xff]
      %v535 = vld [vmem:[%s487 + $0xe0] sm:$0xff]
      %v536 = vld [vmem:[%s487 + $0xe8] sm:$0xff]
      %v537 = vld [vmem:[%s487 + $0xf0] sm:$0xff]
      %v538 = vld [vmem:[%s487 + $0xf8] sm:$0xff]
      %v539 = vld [vmem:[%s2] sm:$0xff]
      %v540 = vld [vmem:[%s2 + $0x8] sm:$0xff]
      %v541 = vld [vmem:[%s2 + $0x10] sm:$0xff]
      %v542 = vld [vmem:[%s2 + $0x18] sm:$0xff]
      %v543 = vld [vmem:[%s2 + $0x20] sm:$0xff]
      %v544 = vld [vmem:[%s2 + $0x28] sm:$0xff]
      %v545 = vld [vmem:[%s2 + $0x30] sm:$0xff]
      %v546 = vld [vmem:[%s2 + $0x38] sm:$0xff]
      %v547 = vld [vmem:[%s3] sm:$0x3]
      %v549 = vlaneseq
      %v550 = vshrl.u32 %v549, 7
      %v551 = vsub.s32 0, %v550
      %v552 = vrot.slane %v547, %v551
      %v553 = vlaneseq
      %v554 = vshrl.u32 %v553, 7
      %v555 = vsub.s32 1, %v554
      %v556 = vrot.slane %v547, %v555
      %vm559 = vcmask 261120
      %v561 = vsel %vm559, %v507, 0
      %v564 = vsel %vm559, %v508, 0
      %v567 = vsel %vm559, %v509, 0
      %v570 = vsel %vm559, %v510, 0
      %v573 = vsel %vm559, %v511, 0
      %v576 = vsel %vm559, %v512, 0
      %v579 = vsel %vm559, %v513, 0
      %v582 = vsel %vm559, %v514, 0
      %v585 = vsel %vm559, %v515, 0
      %v588 = vsel %vm559, %v516, 0
      %v591 = vsel %vm559, %v517, 0
      %v594 = vsel %vm559, %v518, 0
      %v597 = vsel %vm559, %v519, 0
      %v600 = vsel %vm559, %v520, 0
      %v603 = vsel %vm559, %v521, 0
      %v606 = vsel %vm559, %v522, 0
      %v609 = vsel %vm559, %v523, 0
      %v612 = vsel %vm559, %v524, 0
      %v615 = vsel %vm559, %v525, 0
      %v618 = vsel %vm559, %v526, 0
      %v621 = vsel %vm559, %v527, 0
      %v624 = vsel %vm559, %v528, 0
      %v627 = vsel %vm559, %v529, 0
      %v630 = vsel %vm559, %v530, 0
      %v633 = vsel %vm559, %v531, 0
      %v636 = vsel %vm559, %v532, 0
      %v639 = vsel %vm559, %v533, 0
      %v642 = vsel %vm559, %v534, 0
      %v645 = vsel %vm559, %v535, 0
      %v648 = vsel %vm559, %v536, 0
      %v651 = vsel %vm559, %v537, 0
      %v654 = vsel %vm559, %v538, 0
      %656 = vmatprep.subr.mxu0 0.0
      %657 = vmatpush1.msra.mxu0 0.0
      %658 = vmatprep.subr.mxu0 0.0
      %659 = vmatpush1.msra.mxu0 0.0
      %660 = vmatprep.subr.mxu0 0.0
      %661 = vmatpush1.msra.mxu0 0.0
      %662 = vmatprep.subr.mxu0 0.0
      %663 = vmatpush1.msra.mxu0 0.0
      %664 = vmatprep.subr.mxu0 0.0
      %665 = vmatpush1.msra.mxu0 0.0
      %666 = vmatprep.subr.mxu0 0.0
      %667 = vmatpush1.msra.mxu0 0.0
      %668 = vmatprep.subr.mxu0 0.0
      %669 = vmatpush1.msra.mxu0 0.0
      %670 = vmatprep.subr.mxu0 0.0
      %671 = vmatpush1.msra.mxu0 0.0
      %672 = vmatprep.subr.mxu0 0.0
      %673 = vmatpush1.msra.mxu0 0.0
      %674 = vmatprep.subr.mxu0 0.0
      %675 = vmatpush1.msra.mxu0 0.0
      %676 = vmatprep.subr.mxu0 0.0
      %677 = vmatpush1.msra.mxu0 0.0
      %678 = vmatprep.subr.mxu0 0.0
      %679 = vmatpush1.msra.mxu0 0.0
      %680 = vmatprep.subr.mxu0 %v546
      %681 = vmatpush1.msra.mxu0 %v545
      %682 = vmatprep.subr.mxu0 %v544
      %683 = vmatpush1.msra.mxu0 %v543
      %684 = vmatprep.subr.mxu0 %v542
      %685 = vmatpush1.msra.mxu0 %v541
      %686 = vmatprep.subr.mxu0 %v540
      %687 = vmatpush1.msra.mxu0 %v539
      %688 = vmatprep.subr.mxu0 0.0
      %689 = vmatpush2.msra.mxu0 0.0
      %690 = vmatprep.subr.mxu0 0.0
      %691 = vmatpush2.msra.mxu0 0.0
      %692 = vmatprep.subr.mxu0 0.0
      %693 = vmatpush2.msra.mxu0 0.0
      %694 = vmatprep.subr.mxu0 0.0
      %695 = vmatpush2.msra.mxu0 0.0
      %696 = vmatprep.subr.mxu0 0.0
      %697 = vmatpush2.msra.mxu0 0.0
      %698 = vmatprep.subr.mxu0 0.0
      %699 = vmatpush2.msra.mxu0 0.0
      %700 = vmatprep.subr.mxu0 0.0
      %701 = vmatpush2.msra.mxu0 0.0
      %702 = vmatprep.subr.mxu0 0.0
      %703 = vmatpush2.msra.mxu0 0.0
      %704 = vmatprep.subr.mxu0 0.0
      %705 = vmatpush2.msra.mxu0 0.0
      %706 = vmatprep.subr.mxu0 0.0
      %707 = vmatpush2.msra.mxu0 0.0
      %708 = vmatprep.subr.mxu0 0.0
      %709 = vmatpush2.msra.mxu0 0.0
      %710 = vmatprep.subr.mxu0 0.0
      %711 = vmatpush2.msra.mxu0 0.0
      %712 = vmatprep.subr.mxu0 0.0
      %713 = vmatpush2.msra.mxu0 0.0
      %714 = vmatprep.subr.mxu0 0.0
      %715 = vmatpush2.msra.mxu0 0.0
      %716 = vmatprep.subr.mxu0 0.0
      %717 = vmatpush2.msra.mxu0 0.0
      %718 = vmatprep.subr.mxu0 0.0
      %719 = vmatpush2.msra.mxu0 0.0
      %720 = vmatprep.mubr.f32.mxu0 0.0
      %721 = vmatmul.mubr.f32.gmra.mxu0 %v561
      %v722 = vpop.f32.mrf.mxu0
      %v723 = vadd.f32 %v552, %v722
      %v724 = vpop.f32.mrf.mxu0
      %v725 = vadd.f32 %v556, %v724
      %726 = vmatprep.mubr.f32.mxu0 0.0
      %727 = vmatmul.mubr.f32.gmra.mxu0 %v564
      %v728 = vpop.f32.mrf.mxu0
      %v729 = vadd.f32 %v552, %v728
      %v730 = vpop.f32.mrf.mxu0
      %v731 = vadd.f32 %v556, %v730
      %732 = vmatprep.mubr.f32.mxu0 0.0
      %733 = vmatmul.mubr.f32.gmra.mxu0 %v567
      %v734 = vpop.f32.mrf.mxu0
      %v735 = vadd.f32 %v552, %v734
      %v736 = vpop.f32.mrf.mxu0
      %v737 = vadd.f32 %v556, %v736
      %738 = vmatprep.mubr.f32.mxu0 0.0
      %739 = vmatmul.mubr.f32.gmra.mxu0 %v570
      %v740 = vpop.f32.mrf.mxu0
      %v741 = vadd.f32 %v552, %v740
      %v742 = vpop.f32.mrf.mxu0
      %v743 = vadd.f32 %v556, %v742
      %744 = vmatprep.mubr.f32.mxu0 0.0
      %745 = vmatmul.mubr.f32.gmra.mxu0 %v573
      %v746 = vpop.f32.mrf.mxu0
      %v747 = vadd.f32 %v552, %v746
      %v748 = vpop.f32.mrf.mxu0
      %v749 = vadd.f32 %v556, %v748
      %750 = vmatprep.mubr.f32.mxu0 0.0
      %751 = vmatmul.mubr.f32.gmra.mxu0 %v576
      %v752 = vpop.f32.mrf.mxu0
      %v753 = vadd.f32 %v552, %v752
      %v754 = vpop.f32.mrf.mxu0
      %v755 = vadd.f32 %v556, %v754
      %756 = vmatprep.mubr.f32.mxu0 0.0
      %757 = vmatmul.mubr.f32.gmra.mxu0 %v579
      %v758 = vpop.f32.mrf.mxu0
      %v759 = vadd.f32 %v552, %v758
      %v760 = vpop.f32.mrf.mxu0
      %v761 = vadd.f32 %v556, %v760
      %762 = vmatprep.mubr.f32.mxu0 0.0
      %763 = vmatmul.mubr.f32.gmra.mxu0 %v582
      %v764 = vpop.f32.mrf.mxu0
      %v765 = vadd.f32 %v552, %v764
      %v766 = vpop.f32.mrf.mxu0
      %v767 = vadd.f32 %v556, %v766
      %768 = vmatprep.mubr.f32.mxu0 0.0
      %769 = vmatmul.mubr.f32.gmra.mxu0 %v585
      %v770 = vpop.f32.mrf.mxu0
      %v771 = vadd.f32 %v552, %v770
      %v772 = vpop.f32.mrf.mxu0
      %v773 = vadd.f32 %v556, %v772
      %774 = vmatprep.mubr.f32.mxu0 0.0
      %775 = vmatmul.mubr.f32.gmra.mxu0 %v588
      %v776 = vpop.f32.mrf.mxu0
      %v777 = vadd.f32 %v552, %v776
      %v778 = vpop.f32.mrf.mxu0
      %v779 = vadd.f32 %v556, %v778
      %780 = vmatprep.mubr.f32.mxu0 0.0
      %781 = vmatmul.mubr.f32.gmra.mxu0 %v591
      %v782 = vpop.f32.mrf.mxu0
      %v783 = vadd.f32 %v552, %v782
      %v784 = vpop.f32.mrf.mxu0
      %v785 = vadd.f32 %v556, %v784
      %786 = vmatprep.mubr.f32.mxu0 0.0
      %787 = vmatmul.mubr.f32.gmra.mxu0 %v594
      %v788 = vpop.f32.mrf.mxu0
      %v789 = vadd.f32 %v552, %v788
      %v790 = vpop.f32.mrf.mxu0
      %v791 = vadd.f32 %v556, %v790
      %792 = vmatprep.mubr.f32.mxu0 0.0
      %793 = vmatmul.mubr.f32.gmra.mxu0 %v597
      %v794 = vpop.f32.mrf.mxu0
      %v795 = vadd.f32 %v552, %v794
      %v796 = vpop.f32.mrf.mxu0
      %v797 = vadd.f32 %v556, %v796
      %798 = vmatprep.mubr.f32.mxu0 0.0
      %799 = vmatmul.mubr.f32.gmra.mxu0 %v600
      %v800 = vpop.f32.mrf.mxu0
      %v801 = vadd.f32 %v552, %v800
      %v802 = vpop.f32.mrf.mxu0
      %v803 = vadd.f32 %v556, %v802
      %804 = vmatprep.mubr.f32.mxu0 0.0
      %805 = vmatmul.mubr.f32.gmra.mxu0 %v603
      %v806 = vpop.f32.mrf.mxu0
      %v807 = vadd.f32 %v552, %v806
      %v808 = vpop.f32.mrf.mxu0
      %v809 = vadd.f32 %v556, %v808
      %810 = vmatprep.mubr.f32.mxu0 0.0
      %811 = vmatmul.mubr.f32.gmra.mxu0 %v606
      %v812 = vpop.f32.mrf.mxu0
      %v813 = vadd.f32 %v552, %v812
      %v814 = vpop.f32.mrf.mxu0
      %v815 = vadd.f32 %v556, %v814
      %816 = vmatprep.mubr.f32.mxu0 0.0
      %817 = vmatmul.mubr.f32.gmra.mxu0 %v609
      %v818 = vpop.f32.mrf.mxu0
      %v819 = vadd.f32 %v552, %v818
      %v820 = vpop.f32.mrf.mxu0
      %v821 = vadd.f32 %v556, %v820
      %822 = vmatprep.mubr.f32.mxu0 0.0
      %823 = vmatmul.mubr.f32.gmra.mxu0 %v612
      %v824 = vpop.f32.mrf.mxu0
      %v825 = vadd.f32 %v552, %v824
      %v826 = vpop.f32.mrf.mxu0
      %v827 = vadd.f32 %v556, %v826
      %828 = vmatprep.mubr.f32.mxu0 0.0
      %829 = vmatmul.mubr.f32.gmra.mxu0 %v615
      %v830 = vpop.f32.mrf.mxu0
      %v831 = vadd.f32 %v552, %v830
      %v832 = vpop.f32.mrf.mxu0
      %v833 = vadd.f32 %v556, %v832
      %834 = vmatprep.mubr.f32.mxu0 0.0
      %835 = vmatmul.mubr.f32.gmra.mxu0 %v618
      %v836 = vpop.f32.mrf.mxu0
      %v837 = vadd.f32 %v552, %v836
      %v838 = vpop.f32.mrf.mxu0
      %v839 = vadd.f32 %v556, %v838
      %840 = vmatprep.mubr.f32.mxu0 0.0
      %841 = vmatmul.mubr.f32.gmra.mxu0 %v621
      %v842 = vpop.f32.mrf.mxu0
      %v843 = vadd.f32 %v552, %v842
      %v844 = vpop.f32.mrf.mxu0
      %v845 = vadd.f32 %v556, %v844
      %846 = vmatprep.mubr.f32.mxu0 0.0
      %847 = vmatmul.mubr.f32.gmra.mxu0 %v624
      %v848 = vpop.f32.mrf.mxu0
      %v849 = vadd.f32 %v552, %v848
      %v850 = vpop.f32.mrf.mxu0
      %v851 = vadd.f32 %v556, %v850
      %852 = vmatprep.mubr.f32.mxu0 0.0
      %853 = vmatmul.mubr.f32.gmra.mxu0 %v627
      %v854 = vpop.f32.mrf.mxu0
      %v855 = vadd.f32 %v552, %v854
      %v856 = vpop.f32.mrf.mxu0
      %v857 = vadd.f32 %v556, %v856
      %858 = vmatprep.mubr.f32.mxu0 0.0
      %859 = vmatmul.mubr.f32.gmra.mxu0 %v630
      %v860 = vpop.f32.mrf.mxu0
      %v861 = vadd.f32 %v552, %v860
      %v862 = vpop.f32.mrf.mxu0
      %v863 = vadd.f32 %v556, %v862
      %864 = vmatprep.mubr.f32.mxu0 0.0
      %865 = vmatmul.mubr.f32.gmra.mxu0 %v633
      %v866 = vpop.f32.mrf.mxu0
      %v867 = vadd.f32 %v552, %v866
      %v868 = vpop.f32.mrf.mxu0
      %v869 = vadd.f32 %v556, %v868
      %870 = vmatprep.mubr.f32.mxu0 0.0
      %871 = vmatmul.mubr.f32.gmra.mxu0 %v636
      %v872 = vpop.f32.mrf.mxu0
      %v873 = vadd.f32 %v552, %v872
      %v874 = vpop.f32.mrf.mxu0
      %v875 = vadd.f32 %v556, %v874
      %876 = vmatprep.mubr.f32.mxu0 0.0
      %877 = vmatmul.mubr.f32.gmra.mxu0 %v639
      %v878 = vpop.f32.mrf.mxu0
      %v879 = vadd.f32 %v552, %v878
      %v880 = vpop.f32.mrf.mxu0
      %v881 = vadd.f32 %v556, %v880
      %882 = vmatprep.mubr.f32.mxu0 0.0
      %883 = vmatmul.mubr.f32.gmra.mxu0 %v642
      %v884 = vpop.f32.mrf.mxu0
      %v885 = vadd.f32 %v552, %v884
      %v886 = vpop.f32.mrf.mxu0
      %v887 = vadd.f32 %v556, %v886
      %888 = vmatprep.mubr.f32.mxu0 0.0
      %889 = vmatmul.mubr.f32.gmra.mxu0 %v645
      %v890 = vpop.f32.mrf.mxu0
      %v891 = vadd.f32 %v552, %v890
      %v892 = vpop.f32.mrf.mxu0
      %v893 = vadd.f32 %v556, %v892
      %894 = vmatprep.mubr.f32.mxu0 0.0
      %895 = vmatmul.mubr.f32.gmra.mxu0 %v648
      %v896 = vpop.f32.mrf.mxu0
      %v897 = vadd.f32 %v552, %v896
      %v898 = vpop.f32.mrf.mxu0
      %v899 = vadd.f32 %v556, %v898
      %900 = vmatprep.mubr.f32.mxu0 0.0
      %901 = vmatmul.mubr.f32.gmra.mxu0 %v651
      %v902 = vpop.f32.mrf.mxu0
      %v903 = vadd.f32 %v552, %v902
      %v904 = vpop.f32.mrf.mxu0
      %v905 = vadd.f32 %v556, %v904
      %906 = vmatprep.mubr.f32.mxu0 0.0
      %907 = vmatmul.mubr.f32.gmra.mxu0 %v654
      %v908 = vpop.f32.mrf.mxu0
      %v909 = vadd.f32 %v552, %v908
      %v910 = vpop.f32.mrf.mxu0
      %v911 = vadd.f32 %v556, %v910
      %912 = vdwg.mxu0
      %v913 = vmul.f32 %v723, 0.5
      %v914 = vmul.f32 %v725, 0.5
      %v915 = vmul.f32 %v729, 0.5
      %v916 = vmul.f32 %v731, 0.5
      %v917 = vmul.f32 %v735, 0.5
      %v918 = vmul.f32 %v737, 0.5
      %v919 = vmul.f32 %v741, 0.5
      %v920 = vmul.f32 %v743, 0.5
      %v921 = vmul.f32 %v747, 0.5
      %v922 = vmul.f32 %v749, 0.5
      %v923 = vmul.f32 %v753, 0.5
      %v924 = vmul.f32 %v755, 0.5
      %v925 = vmul.f32 %v759, 0.5
      %v926 = vmul.f32 %v761, 0.5
      %v927 = vmul.f32 %v765, 0.5
      %v928 = vmul.f32 %v767, 0.5
      %v929 = vmul.f32 %v771, 0.5
      %v930 = vmul.f32 %v773, 0.5
      %v931 = vmul.f32 %v777, 0.5
      %v932 = vmul.f32 %v779, 0.5
      %v933 = vmul.f32 %v783, 0.5
      %v934 = vmul.f32 %v785, 0.5
      %v935 = vmul.f32 %v789, 0.5
      %v936 = vmul.f32 %v791, 0.5
      %v937 = vmul.f32 %v795, 0.5
      %v938 = vmul.f32 %v797, 0.5
      %v939 = vmul.f32 %v801, 0.5
      %v940 = vmul.f32 %v803, 0.5
      %v941 = vmul.f32 %v807, 0.5
      %v942 = vmul.f32 %v809, 0.5
      %v943 = vmul.f32 %v813, 0.5
      %v944 = vmul.f32 %v815, 0.5
      %v945 = vmul.f32 %v819, 0.5
      %v946 = vmul.f32 %v821, 0.5
      %v947 = vmul.f32 %v825, 0.5
      %v948 = vmul.f32 %v827, 0.5
      %v949 = vmul.f32 %v831, 0.5
      %v950 = vmul.f32 %v833, 0.5
      %v951 = vmul.f32 %v837, 0.5
      %v952 = vmul.f32 %v839, 0.5
      %v953 = vmul.f32 %v843, 0.5
      %v954 = vmul.f32 %v845, 0.5
      %v955 = vmul.f32 %v849, 0.5
      %v956 = vmul.f32 %v851, 0.5
      %v957 = vmul.f32 %v855, 0.5
      %v958 = vmul.f32 %v857, 0.5
      %v959 = vmul.f32 %v861, 0.5
      %v960 = vmul.f32 %v863, 0.5
      %v961 = vmul.f32 %v867, 0.5
      %v962 = vmul.f32 %v869, 0.5
      %v963 = vmul.f32 %v873, 0.5
      %v964 = vmul.f32 %v875, 0.5
      %v965 = vmul.f32 %v879, 0.5
      %v966 = vmul.f32 %v881, 0.5
      %v967 = vmul.f32 %v885, 0.5
      %v968 = vmul.f32 %v887, 0.5
      %v969 = vmul.f32 %v891, 0.5
      %v970 = vmul.f32 %v893, 0.5
      %v971 = vmul.f32 %v897, 0.5
      %v972 = vmul.f32 %v899, 0.5
      %v973 = vmul.f32 %v903, 0.5
      %v974 = vmul.f32 %v905, 0.5
      %v975 = vmul.f32 %v909, 0.5
      %v976 = vmul.f32 %v911, 0.5
      %v977 = vmul.f32 %v723, 0.044715
      %v978 = vmul.f32 %v725, 0.044715
      %v979 = vmul.f32 %v729, 0.044715
      %v980 = vmul.f32 %v731, 0.044715
      %v981 = vmul.f32 %v735, 0.044715
      %v982 = vmul.f32 %v737, 0.044715
      %v983 = vmul.f32 %v741, 0.044715
      %v984 = vmul.f32 %v743, 0.044715
      %v985 = vmul.f32 %v747, 0.044715
      %v986 = vmul.f32 %v749, 0.044715
      %v987 = vmul.f32 %v753, 0.044715
      %v988 = vmul.f32 %v755, 0.044715
      %v989 = vmul.f32 %v759, 0.044715
      %v990 = vmul.f32 %v761, 0.044715
      %v991 = vmul.f32 %v765, 0.044715
      %v992 = vmul.f32 %v767, 0.044715
      %v993 = vmul.f32 %v771, 0.044715
      %v994 = vmul.f32 %v773, 0.044715
      %v995 = vmul.f32 %v777, 0.044715
      %v996 = vmul.f32 %v779, 0.044715
      %v997 = vmul.f32 %v783, 0.044715
      %v998 = vmul.f32 %v785, 0.044715
      %v999 = vmul.f32 %v789, 0.044715
      %v1000 = vmul.f32 %v791, 0.044715
      %v1001 = vmul.f32 %v795, 0.044715
      %v1002 = vmul.f32 %v797, 0.044715
      %v1003 = vmul.f32 %v801, 0.044715
      %v1004 = vmul.f32 %v803, 0.044715
      %v1005 = vmul.f32 %v807, 0.044715
      %v1006 = vmul.f32 %v809, 0.044715
      %v1007 = vmul.f32 %v813, 0.044715
      %v1008 = vmul.f32 %v815, 0.044715
      %v1009 = vmul.f32 %v819, 0.044715
      %v1010 = vmul.f32 %v821, 0.044715
      %v1011 = vmul.f32 %v825, 0.044715
      %v1012 = vmul.f32 %v827, 0.044715
      %v1013 = vmul.f32 %v831, 0.044715
      %v1014 = vmul.f32 %v833, 0.044715
      %v1015 = vmul.f32 %v837, 0.044715
      %v1016 = vmul.f32 %v839, 0.044715
      %v1017 = vmul.f32 %v843, 0.044715
      %v1018 = vmul.f32 %v845, 0.044715
      %v1019 = vmul.f32 %v849, 0.044715
      %v1020 = vmul.f32 %v851, 0.044715
      %v1021 = vmul.f32 %v855, 0.044715
      %v1022 = vmul.f32 %v857, 0.044715
      %v1023 = vmul.f32 %v861, 0.044715
      %v1024 = vmul.f32 %v863, 0.044715
      %v1025 = vmul.f32 %v867, 0.044715
      %v1026 = vmul.f32 %v869, 0.044715
      %v1027 = vmul.f32 %v873, 0.044715
      %v1028 = vmul.f32 %v875, 0.044715
      %v1029 = vmul.f32 %v879, 0.044715
      %v1030 = vmul.f32 %v881, 0.044715
      %v1031 = vmul.f32 %v885, 0.044715
      %v1032 = vmul.f32 %v887, 0.044715
      %v1033 = vmul.f32 %v891, 0.044715
      %v1034 = vmul.f32 %v893, 0.044715
      %v1035 = vmul.f32 %v897, 0.044715
      %v1036 = vmul.f32 %v899, 0.044715
      %v1037 = vmul.f32 %v903, 0.044715
      %v1038 = vmul.f32 %v905, 0.044715
      %v1039 = vmul.f32 %v909, 0.044715
      %v1040 = vmul.f32 %v911, 0.044715
      %v1041 = vmul.f32 %v977, %v723
      %v1042 = vmul.f32 %v978, %v725
      %v1043 = vmul.f32 %v979, %v729
      %v1044 = vmul.f32 %v980, %v731
      %v1045 = vmul.f32 %v981, %v735
      %v1046 = vmul.f32 %v982, %v737
      %v1047 = vmul.f32 %v983, %v741
      %v1048 = vmul.f32 %v984, %v743
      %v1049 = vmul.f32 %v985, %v747
      %v1050 = vmul.f32 %v986, %v749
      %v1051 = vmul.f32 %v987, %v753
      %v1052 = vmul.f32 %v988, %v755
      %v1053 = vmul.f32 %v989, %v759
      %v1054 = vmul.f32 %v990, %v761
      %v1055 = vmul.f32 %v991, %v765
      %v1056 = vmul.f32 %v992, %v767
      %v1057 = vmul.f32 %v993, %v771
      %v1058 = vmul.f32 %v994, %v773
      %v1059 = vmul.f32 %v995, %v777
      %v1060 = vmul.f32 %v996, %v779
      %v1061 = vmul.f32 %v997, %v783
      %v1062 = vmul.f32 %v998, %v785
      %v1063 = vmul.f32 %v999, %v789
      %v1064 = vmul.f32 %v1000, %v791
      %v1065 = vmul.f32 %v1001, %v795
      %v1066 = vmul.f32 %v1002, %v797
      %v1067 = vmul.f32 %v1003, %v801
      %v1068 = vmul.f32 %v1004, %v803
      %v1069 = vmul.f32 %v1005, %v807
      %v1070 = vmul.f32 %v1006, %v809
      %v1071 = vmul.f32 %v1007, %v813
      %v1072 = vmul.f32 %v1008, %v815
      %v1073 = vmul.f32 %v1009, %v819
      %v1074 = vmul.f32 %v1010, %v821
      %v1075 = vmul.f32 %v1011, %v825
      %v1076 = vmul.f32 %v1012, %v827
      %v1077 = vmul.f32 %v1013, %v831
      %v1078 = vmul.f32 %v1014, %v833
      %v1079 = vmul.f32 %v1015, %v837
      %v1080 = vmul.f32 %v1016, %v839
      %v1081 = vmul.f32 %v1017, %v843
      %v1082 = vmul.f32 %v1018, %v845
      %v1083 = vmul.f32 %v1019, %v849
      %v1084 = vmul.f32 %v1020, %v851
      %v1085 = vmul.f32 %v1021, %v855
      %v1086 = vmul.f32 %v1022, %v857
      %v1087 = vmul.f32 %v1023, %v861
      %v1088 = vmul.f32 %v1024, %v863
      %v1089 = vmul.f32 %v1025, %v867
      %v1090 = vmul.f32 %v1026, %v869
      %v1091 = vmul.f32 %v1027, %v873
      %v1092 = vmul.f32 %v1028, %v875
      %v1093 = vmul.f32 %v1029, %v879
      %v1094 = vmul.f32 %v1030, %v881
      %v1095 = vmul.f32 %v1031, %v885
      %v1096 = vmul.f32 %v1032, %v887
      %v1097 = vmul.f32 %v1033, %v891
      %v1098 = vmul.f32 %v1034, %v893
      %v1099 = vmul.f32 %v1035, %v897
      %v1100 = vmul.f32 %v1036, %v899
      %v1101 = vmul.f32 %v1037, %v903
      %v1102 = vmul.f32 %v1038, %v905
      %v1103 = vmul.f32 %v1039, %v909
      %v1104 = vmul.f32 %v1040, %v911
      %v1105 = vmul.f32 %v1041, %v723
      %v1106 = vmul.f32 %v1042, %v725
      %v1107 = vmul.f32 %v1043, %v729
      %v1108 = vmul.f32 %v1044, %v731
      %v1109 = vmul.f32 %v1045, %v735
      %v1110 = vmul.f32 %v1046, %v737
      %v1111 = vmul.f32 %v1047, %v741
      %v1112 = vmul.f32 %v1048, %v743
      %v1113 = vmul.f32 %v1049, %v747
      %v1114 = vmul.f32 %v1050, %v749
      %v1115 = vmul.f32 %v1051, %v753
      %v1116 = vmul.f32 %v1052, %v755
      %v1117 = vmul.f32 %v1053, %v759
      %v1118 = vmul.f32 %v1054, %v761
      %v1119 = vmul.f32 %v1055, %v765
      %v1120 = vmul.f32 %v1056, %v767
      %v1121 = vmul.f32 %v1057, %v771
      %v1122 = vmul.f32 %v1058, %v773
      %v1123 = vmul.f32 %v1059, %v777
      %v1124 = vmul.f32 %v1060, %v779
      %v1125 = vmul.f32 %v1061, %v783
      %v1126 = vmul.f32 %v1062, %v785
      %v1127 = vmul.f32 %v1063, %v789
      %v1128 = vmul.f32 %v1064, %v791
      %v1129 = vmul.f32 %v1065, %v795
      %v1130 = vmul.f32 %v1066, %v797
      %v1131 = vmul.f32 %v1067, %v801
      %v1132 = vmul.f32 %v1068, %v803
      %v1133 = vmul.f32 %v1069, %v807
      %v1134 = vmul.f32 %v1070, %v809
      %v1135 = vmul.f32 %v1071, %v813
      %v1136 = vmul.f32 %v1072, %v815
      %v1137 = vmul.f32 %v1073, %v819
      %v1138 = vmul.f32 %v1074, %v821
      %v1139 = vmul.f32 %v1075, %v825
      %v1140 = vmul.f32 %v1076, %v827
      %v1141 = vmul.f32 %v1077, %v831
      %v1142 = vmul.f32 %v1078, %v833
      %v1143 = vmul.f32 %v1079, %v837
      %v1144 = vmul.f32 %v1080, %v839
      %v1145 = vmul.f32 %v1081, %v843
      %v1146 = vmul.f32 %v1082, %v845
      %v1147 = vmul.f32 %v1083, %v849
      %v1148 = vmul.f32 %v1084, %v851
      %v1149 = vmul.f32 %v1085, %v855
      %v1150 = vmul.f32 %v1086, %v857
      %v1151 = vmul.f32 %v1087, %v861
      %v1152 = vmul.f32 %v1088, %v863
      %v1153 = vmul.f32 %v1089, %v867
      %v1154 = vmul.f32 %v1090, %v869
      %v1155 = vmul.f32 %v1091, %v873
      %v1156 = vmul.f32 %v1092, %v875
      %v1157 = vmul.f32 %v1093, %v879
      %v1158 = vmul.f32 %v1094, %v881
      %v1159 = vmul.f32 %v1095, %v885
      %v1160 = vmul.f32 %v1096, %v887
      %v1161 = vmul.f32 %v1097, %v891
      %v1162 = vmul.f32 %v1098, %v893
      %v1163 = vmul.f32 %v1099, %v897
      %v1164 = vmul.f32 %v1100, %v899
      %v1165 = vmul.f32 %v1101, %v903
      %v1166 = vmul.f32 %v1102, %v905
      %v1167 = vmul.f32 %v1103, %v909
      %v1168 = vmul.f32 %v1104, %v911
      %v1169 = vadd.f32 %v723, %v1105
      %v1170 = vadd.f32 %v725, %v1106
      %v1171 = vadd.f32 %v729, %v1107
      %v1172 = vadd.f32 %v731, %v1108
      %v1173 = vadd.f32 %v735, %v1109
      %v1174 = vadd.f32 %v737, %v1110
      %v1175 = vadd.f32 %v741, %v1111
      %v1176 = vadd.f32 %v743, %v1112
      %v1177 = vadd.f32 %v747, %v1113
      %v1178 = vadd.f32 %v749, %v1114
      %v1179 = vadd.f32 %v753, %v1115
      %v1180 = vadd.f32 %v755, %v1116
      %v1181 = vadd.f32 %v759, %v1117
      %v1182 = vadd.f32 %v761, %v1118
      %v1183 = vadd.f32 %v765, %v1119
      %v1184 = vadd.f32 %v767, %v1120
      %v1185 = vadd.f32 %v771, %v1121
      %v1186 = vadd.f32 %v773, %v1122
      %v1187 = vadd.f32 %v777, %v1123
      %v1188 = vadd.f32 %v779, %v1124
      %v1189 = vadd.f32 %v783, %v1125
      %v1190 = vadd.f32 %v785, %v1126
      %v1191 = vadd.f32 %v789, %v1127
      %v1192 = vadd.f32 %v791, %v1128
      %v1193 = vadd.f32 %v795, %v1129
      %v1194 = vadd.f32 %v797, %v1130
      %v1195 = vadd.f32 %v801, %v1131
      %v1196 = vadd.f32 %v803, %v1132
      %v1197 = vadd.f32 %v807, %v1133
      %v1198 = vadd.f32 %v809, %v1134
      %v1199 = vadd.f32 %v813, %v1135
      %v1200 = vadd.f32 %v815, %v1136
      %v1201 = vadd.f32 %v819, %v1137
      %v1202 = vadd.f32 %v821, %v1138
      %v1203 = vadd.f32 %v825, %v1139
      %v1204 = vadd.f32 %v827, %v1140
      %v1205 = vadd.f32 %v831, %v1141
      %v1206 = vadd.f32 %v833, %v1142
      %v1207 = vadd.f32 %v837, %v1143
      %v1208 = vadd.f32 %v839, %v1144
      %v1209 = vadd.f32 %v843, %v1145
      %v1210 = vadd.f32 %v845, %v1146
      %v1211 = vadd.f32 %v849, %v1147
      %v1212 = vadd.f32 %v851, %v1148
      %v1213 = vadd.f32 %v855, %v1149
      %v1214 = vadd.f32 %v857, %v1150
      %v1215 = vadd.f32 %v861, %v1151
      %v1216 = vadd.f32 %v863, %v1152
      %v1217 = vadd.f32 %v867, %v1153
      %v1218 = vadd.f32 %v869, %v1154
      %v1219 = vadd.f32 %v873, %v1155
      %v1220 = vadd.f32 %v875, %v1156
      %v1221 = vadd.f32 %v879, %v1157
      %v1222 = vadd.f32 %v881, %v1158
      %v1223 = vadd.f32 %v885, %v1159
      %v1224 = vadd.f32 %v887, %v1160
      %v1225 = vadd.f32 %v891, %v1161
      %v1226 = vadd.f32 %v893, %v1162
      %v1227 = vadd.f32 %v897, %v1163
      %v1228 = vadd.f32 %v899, %v1164
      %v1229 = vadd.f32 %v903, %v1165
      %v1230 = vadd.f32 %v905, %v1166
      %v1231 = vadd.f32 %v909, %v1167
      %v1232 = vadd.f32 %v911, %v1168
      %v1233 = vmul.f32 %v1169, 0.7978846
      %v1234 = vmul.f32 %v1170, 0.7978846
      %v1235 = vmul.f32 %v1171, 0.7978846
      %v1236 = vmul.f32 %v1172, 0.7978846
      %v1237 = vmul.f32 %v1173, 0.7978846
      %v1238 = vmul.f32 %v1174, 0.7978846
      %v1239 = vmul.f32 %v1175, 0.7978846
      %v1240 = vmul.f32 %v1176, 0.7978846
      %v1241 = vmul.f32 %v1177, 0.7978846
      %v1242 = vmul.f32 %v1178, 0.7978846
      %v1243 = vmul.f32 %v1179, 0.7978846
      %v1244 = vmul.f32 %v1180, 0.7978846
      %v1245 = vmul.f32 %v1181, 0.7978846
      %v1246 = vmul.f32 %v1182, 0.7978846
      %v1247 = vmul.f32 %v1183, 0.7978846
      %v1248 = vmul.f32 %v1184, 0.7978846
      %v1249 = vmul.f32 %v1185, 0.7978846
      %v1250 = vmul.f32 %v1186, 0.7978846
      %v1251 = vmul.f32 %v1187, 0.7978846
      %v1252 = vmul.f32 %v1188, 0.7978846
      %v1253 = vmul.f32 %v1189, 0.7978846
      %v1254 = vmul.f32 %v1190, 0.7978846
      %v1255 = vmul.f32 %v1191, 0.7978846
      %v1256 = vmul.f32 %v1192, 0.7978846
      %v1257 = vmul.f32 %v1193, 0.7978846
      %v1258 = vmul.f32 %v1194, 0.7978846
      %v1259 = vmul.f32 %v1195, 0.7978846
      %v1260 = vmul.f32 %v1196, 0.7978846
      %v1261 = vmul.f32 %v1197, 0.7978846
      %v1262 = vmul.f32 %v1198, 0.7978846
      %v1263 = vmul.f32 %v1199, 0.7978846
      %v1264 = vmul.f32 %v1200, 0.7978846
      %v1265 = vmul.f32 %v1201, 0.7978846
      %v1266 = vmul.f32 %v1202, 0.7978846
      %v1267 = vmul.f32 %v1203, 0.7978846
      %v1268 = vmul.f32 %v1204, 0.7978846
      %v1269 = vmul.f32 %v1205, 0.7978846
      %v1270 = vmul.f32 %v1206, 0.7978846
      %v1271 = vmul.f32 %v1207, 0.7978846
      %v1272 = vmul.f32 %v1208, 0.7978846
      %v1273 = vmul.f32 %v1209, 0.7978846
      %v1274 = vmul.f32 %v1210, 0.7978846
      %v1275 = vmul.f32 %v1211, 0.7978846
      %v1276 = vmul.f32 %v1212, 0.7978846
      %v1277 = vmul.f32 %v1213, 0.7978846
      %v1278 = vmul.f32 %v1214, 0.7978846
      %v1279 = vmul.f32 %v1215, 0.7978846
      %v1280 = vmul.f32 %v1216, 0.7978846
      %v1281 = vmul.f32 %v1217, 0.7978846
      %v1282 = vmul.f32 %v1218, 0.7978846
      %v1283 = vmul.f32 %v1219, 0.7978846
      %v1284 = vmul.f32 %v1220, 0.7978846
      %v1285 = vmul.f32 %v1221, 0.7978846
      %v1286 = vmul.f32 %v1222, 0.7978846
      %v1287 = vmul.f32 %v1223, 0.7978846
      %v1288 = vmul.f32 %v1224, 0.7978846
      %v1289 = vmul.f32 %v1225, 0.7978846
      %v1290 = vmul.f32 %v1226, 0.7978846
      %v1291 = vmul.f32 %v1227, 0.7978846
      %v1292 = vmul.f32 %v1228, 0.7978846
      %v1293 = vmul.f32 %v1229, 0.7978846
      %v1294 = vmul.f32 %v1230, 0.7978846
      %v1295 = vmul.f32 %v1231, 0.7978846
      %v1296 = vmul.f32 %v1232, 0.7978846
      %v1297 = vtanh.pop %v1233
      %v1298 = vtanh.pop %v1234
      %v1299 = vtanh.pop %v1235
      %v1300 = vtanh.pop %v1236
      %v1301 = vtanh.pop %v1237
      %v1302 = vtanh.pop %v1238
      %v1303 = vtanh.pop %v1239
      %v1304 = vtanh.pop %v1240
      %v1305 = vtanh.pop %v1241
      %v1306 = vtanh.pop %v1242
      %v1307 = vtanh.pop %v1243
      %v1308 = vtanh.pop %v1244
      %v1309 = vtanh.pop %v1245
      %v1310 = vtanh.pop %v1246
      %v1311 = vtanh.pop %v1247
      %v1312 = vtanh.pop %v1248
      %v1313 = vtanh.pop %v1249
      %v1314 = vtanh.pop %v1250
      %v1315 = vtanh.pop %v1251
      %v1316 = vtanh.pop %v1252
      %v1317 = vtanh.pop %v1253
      %v1318 = vtanh.pop %v1254
      %v1319 = vtanh.pop %v1255
      %v1320 = vtanh.pop %v1256
      %v1321 = vtanh.pop %v1257
      %v1322 = vtanh.pop %v1258
      %v1323 = vtanh.pop %v1259
      %v1324 = vtanh.pop %v1260
      %v1325 = vtanh.pop %v1261
      %v1326 = vtanh.pop %v1262
      %v1327 = vtanh.pop %v1263
      %v1328 = vtanh.pop %v1264
      %v1329 = vtanh.pop %v1265
      %v1330 = vtanh.pop %v1266
      %v1331 = vtanh.pop %v1267
      %v1332 = vtanh.pop %v1268
      %v1333 = vtanh.pop %v1269
      %v1334 = vtanh.pop %v1270
      %v1335 = vtanh.pop %v1271
      %v1336 = vtanh.pop %v1272
      %v1337 = vtanh.pop %v1273
      %v1338 = vtanh.pop %v1274
      %v1339 = vtanh.pop %v1275
      %v1340 = vtanh.pop %v1276
      %v1341 = vtanh.pop %v1277
      %v1342 = vtanh.pop %v1278
      %v1343 = vtanh.pop %v1279
      %v1344 = vtanh.pop %v1280
      %v1345 = vtanh.pop %v1281
      %v1346 = vtanh.pop %v1282
      %v1347 = vtanh.pop %v1283
      %v1348 = vtanh.pop %v1284
      %v1349 = vtanh.pop %v1285
      %v1350 = vtanh.pop %v1286
      %v1351 = vtanh.pop %v1287
      %v1352 = vtanh.pop %v1288
      %v1353 = vtanh.pop %v1289
      %v1354 = vtanh.pop %v1290
      %v1355 = vtanh.pop %v1291
      %v1356 = vtanh.pop %v1292
      %v1357 = vtanh.pop %v1293
      %v1358 = vtanh.pop %v1294
      %v1359 = vtanh.pop %v1295
      %v1360 = vtanh.pop %v1296
      %v1361 = vadd.f32 %v1297, 1.0
      %v1362 = vadd.f32 %v1298, 1.0
      %v1363 = vadd.f32 %v1299, 1.0
      %v1364 = vadd.f32 %v1300, 1.0
      %v1365 = vadd.f32 %v1301, 1.0
      %v1366 = vadd.f32 %v1302, 1.0
      %v1367 = vadd.f32 %v1303, 1.0
      %v1368 = vadd.f32 %v1304, 1.0
      %v1369 = vadd.f32 %v1305, 1.0
      %v1370 = vadd.f32 %v1306, 1.0
      %v1371 = vadd.f32 %v1307, 1.0
      %v1372 = vadd.f32 %v1308, 1.0
      %v1373 = vadd.f32 %v1309, 1.0
      %v1374 = vadd.f32 %v1310, 1.0
      %v1375 = vadd.f32 %v1311, 1.0
      %v1376 = vadd.f32 %v1312, 1.0
      %v1377 = vadd.f32 %v1313, 1.0
      %v1378 = vadd.f32 %v1314, 1.0
      %v1379 = vadd.f32 %v1315, 1.0
      %v1380 = vadd.f32 %v1316, 1.0
      %v1381 = vadd.f32 %v1317, 1.0
      %v1382 = vadd.f32 %v1318, 1.0
      %v1383 = vadd.f32 %v1319, 1.0
      %v1384 = vadd.f32 %v1320, 1.0
      %v1385 = vadd.f32 %v1321, 1.0
      %v1386 = vadd.f32 %v1322, 1.0
      %v1387 = vadd.f32 %v1323, 1.0
      %v1388 = vadd.f32 %v1324, 1.0
      %v1389 = vadd.f32 %v1325, 1.0
      %v1390 = vadd.f32 %v1326, 1.0
      %v1391 = vadd.f32 %v1327, 1.0
      %v1392 = vadd.f32 %v1328, 1.0
      %v1393 = vadd.f32 %v1329, 1.0
      %v1394 = vadd.f32 %v1330, 1.0
      %v1395 = vadd.f32 %v1331, 1.0
      %v1396 = vadd.f32 %v1332, 1.0
      %v1397 = vadd.f32 %v1333, 1.0
      %v1398 = vadd.f32 %v1334, 1.0
      %v1399 = vadd.f32 %v1335, 1.0
      %v1400 = vadd.f32 %v1336, 1.0
      %v1401 = vadd.f32 %v1337, 1.0
      %v1402 = vadd.f32 %v1338, 1.0
      %v1403 = vadd.f32 %v1339, 1.0
      %v1404 = vadd.f32 %v1340, 1.0
      %v1405 = vadd.f32 %v1341, 1.0
      %v1406 = vadd.f32 %v1342, 1.0
      %v1407 = vadd.f32 %v1343, 1.0
      %v1408 = vadd.f32 %v1344, 1.0
      %v1409 = vadd.f32 %v1345, 1.0
      %v1410 = vadd.f32 %v1346, 1.0
      %v1411 = vadd.f32 %v1347, 1.0
      %v1412 = vadd.f32 %v1348, 1.0
      %v1413 = vadd.f32 %v1349, 1.0
      %v1414 = vadd.f32 %v1350, 1.0
      %v1415 = vadd.f32 %v1351, 1.0
      %v1416 = vadd.f32 %v1352, 1.0
      %v1417 = vadd.f32 %v1353, 1.0
      %v1418 = vadd.f32 %v1354, 1.0
      %v1419 = vadd.f32 %v1355, 1.0
      %v1420 = vadd.f32 %v1356, 1.0
      %v1421 = vadd.f32 %v1357, 1.0
      %v1422 = vadd.f32 %v1358, 1.0
      %v1423 = vadd.f32 %v1359, 1.0
      %v1424 = vadd.f32 %v1360, 1.0
      %v1425 = vmul.f32 %v913, %v1361
      %v1426 = vmul.f32 %v914, %v1362
      %v1427 = vmul.f32 %v915, %v1363
      %v1428 = vmul.f32 %v916, %v1364
      %v1429 = vmul.f32 %v917, %v1365
      %v1430 = vmul.f32 %v918, %v1366
      %v1431 = vmul.f32 %v919, %v1367
      %v1432 = vmul.f32 %v920, %v1368
      %v1433 = vmul.f32 %v921, %v1369
      %v1434 = vmul.f32 %v922, %v1370
      %v1435 = vmul.f32 %v923, %v1371
      %v1436 = vmul.f32 %v924, %v1372
      %v1437 = vmul.f32 %v925, %v1373
      %v1438 = vmul.f32 %v926, %v1374
      %v1439 = vmul.f32 %v927, %v1375
      %v1440 = vmul.f32 %v928, %v1376
      %v1441 = vmul.f32 %v929, %v1377
      %v1442 = vmul.f32 %v930, %v1378
      %v1443 = vmul.f32 %v931, %v1379
      %v1444 = vmul.f32 %v932, %v1380
      %v1445 = vmul.f32 %v933, %v1381
      %v1446 = vmul.f32 %v934, %v1382
      %v1447 = vmul.f32 %v935, %v1383
      %v1448 = vmul.f32 %v936, %v1384
      %v1449 = vmul.f32 %v937, %v1385
      %v1450 = vmul.f32 %v938, %v1386
      %v1451 = vmul.f32 %v939, %v1387
      %v1452 = vmul.f32 %v940, %v1388
      %v1453 = vmul.f32 %v941, %v1389
      %v1454 = vmul.f32 %v942, %v1390
      %v1455 = vmul.f32 %v943, %v1391
      %v1456 = vmul.f32 %v944, %v1392
      %v1457 = vmul.f32 %v945, %v1393
      %v1458 = vmul.f32 %v946, %v1394
      %v1459 = vmul.f32 %v947, %v1395
      %v1460 = vmul.f32 %v948, %v1396
      %v1461 = vmul.f32 %v949, %v1397
      %v1462 = vmul.f32 %v950, %v1398
      %v1463 = vmul.f32 %v951, %v1399
      %v1464 = vmul.f32 %v952, %v1400
      %v1465 = vmul.f32 %v953, %v1401
      %v1466 = vmul.f32 %v954, %v1402
      %v1467 = vmul.f32 %v955, %v1403
      %v1468 = vmul.f32 %v956, %v1404
      %v1469 = vmul.f32 %v957, %v1405
      %v1470 = vmul.f32 %v958, %v1406
      %v1471 = vmul.f32 %v959, %v1407
      %v1472 = vmul.f32 %v960, %v1408
      %v1473 = vmul.f32 %v961, %v1409
      %v1474 = vmul.f32 %v962, %v1410
      %v1475 = vmul.f32 %v963, %v1411
      %v1476 = vmul.f32 %v964, %v1412
      %v1477 = vmul.f32 %v965, %v1413
      %v1478 = vmul.f32 %v966, %v1414
      %v1479 = vmul.f32 %v967, %v1415
      %v1480 = vmul.f32 %v968, %v1416
      %v1481 = vmul.f32 %v969, %v1417
      %v1482 = vmul.f32 %v970, %v1418
      %v1483 = vmul.f32 %v971, %v1419
      %v1484 = vmul.f32 %v972, %v1420
      %v1485 = vmul.f32 %v973, %v1421
      %v1486 = vmul.f32 %v974, %v1422
      %v1487 = vmul.f32 %v975, %v1423
      %v1488 = vmul.f32 %v976, %v1424
      %v1489 = vld [vmem:[%s4] sm:$0xff]
      %v1490 = vld [vmem:[%s4 + $0x8] sm:$0xff]
      %v1491 = vld [vmem:[%s4 + $0x10] sm:$0xff]
      %v1492 = vld [vmem:[%s4 + $0x18] sm:$0xff]
      %v1493 = vld [vmem:[%s4 + $0x20] sm:$0xff]
      %v1494 = vld [vmem:[%s4 + $0x28] sm:$0xff]
      %v1495 = vld [vmem:[%s4 + $0x30] sm:$0xff]
      %v1496 = vld [vmem:[%s4 + $0x38] sm:$0xff]
      %v1497 = vld [vmem:[%s4 + $0x40] sm:$0xff]
      %v1498 = vld [vmem:[%s4 + $0x48] sm:$0xff]
      %v1499 = vld [vmem:[%s4 + $0x50] sm:$0xff]
      %v1500 = vld [vmem:[%s4 + $0x58] sm:$0xff]
      %v1501 = vld [vmem:[%s4 + $0x60] sm:$0xff]
      %v1502 = vld [vmem:[%s4 + $0x68] sm:$0xff]
      %v1503 = vld [vmem:[%s4 + $0x70] sm:$0xff]
      %v1504 = vld [vmem:[%s4 + $0x78] sm:$0xff]
      %v1505 = vld [vmem:[%s4 + $0x80] sm:$0xff]
      %v1506 = vld [vmem:[%s4 + $0x88] sm:$0xff]
      %v1507 = vld [vmem:[%s4 + $0x90] sm:$0xff]
      %v1508 = vld [vmem:[%s4 + $0x98] sm:$0xff]
      %v1509 = vld [vmem:[%s4 + $0xa0] sm:$0xff]
      %v1510 = vld [vmem:[%s4 + $0xa8] sm:$0xff]
      %v1511 = vld [vmem:[%s4 + $0xb0] sm:$0xff]
      %v1512 = vld [vmem:[%s4 + $0xb8] sm:$0xff]
      %v1513 = vld [vmem:[%s4 + $0xc0] sm:$0xff]
      %v1514 = vld [vmem:[%s4 + $0xc8] sm:$0xff]
      %v1515 = vld [vmem:[%s4 + $0xd0] sm:$0xff]
      %v1516 = vld [vmem:[%s4 + $0xd8] sm:$0xff]
      %v1517 = vld [vmem:[%s4 + $0xe0] sm:$0xff]
      %v1518 = vld [vmem:[%s4 + $0xe8] sm:$0xff]
      %v1519 = vld [vmem:[%s4 + $0xf0] sm:$0xff]
      %v1520 = vld [vmem:[%s4 + $0xf8] sm:$0xff]
      %v1521 = vld [vmem:[%s4 + $0x100] sm:$0xff]
      %v1522 = vld [vmem:[%s4 + $0x108] sm:$0xff]
      %v1523 = vld [vmem:[%s4 + $0x110] sm:$0xff]
      %v1524 = vld [vmem:[%s4 + $0x118] sm:$0xff]
      %v1525 = vld [vmem:[%s4 + $0x120] sm:$0xff]
      %v1526 = vld [vmem:[%s4 + $0x128] sm:$0xff]
      %v1527 = vld [vmem:[%s4 + $0x130] sm:$0xff]
      %v1528 = vld [vmem:[%s4 + $0x138] sm:$0xff]
      %v1529 = vld [vmem:[%s4 + $0x140] sm:$0xff]
      %v1530 = vld [vmem:[%s4 + $0x148] sm:$0xff]
      %v1531 = vld [vmem:[%s4 + $0x150] sm:$0xff]
      %v1532 = vld [vmem:[%s4 + $0x158] sm:$0xff]
      %v1533 = vld [vmem:[%s4 + $0x160] sm:$0xff]
      %v1534 = vld [vmem:[%s4 + $0x168] sm:$0xff]
      %v1535 = vld [vmem:[%s4 + $0x170] sm:$0xff]
      %v1536 = vld [vmem:[%s4 + $0x178] sm:$0xff]
      %v1537 = vld [vmem:[%s4 + $0x180] sm:$0xff]
      %v1538 = vld [vmem:[%s4 + $0x188] sm:$0xff]
      %v1539 = vld [vmem:[%s4 + $0x190] sm:$0xff]
      %v1540 = vld [vmem:[%s4 + $0x198] sm:$0xff]
      %v1541 = vld [vmem:[%s4 + $0x1a0] sm:$0xff]
      %v1542 = vld [vmem:[%s4 + $0x1a8] sm:$0xff]
      %v1543 = vld [vmem:[%s4 + $0x1b0] sm:$0xff]
      %v1544 = vld [vmem:[%s4 + $0x1b8] sm:$0xff]
      %v1545 = vld [vmem:[%s4 + $0x1c0] sm:$0xff]
      %v1546 = vld [vmem:[%s4 + $0x1c8] sm:$0xff]
      %v1547 = vld [vmem:[%s4 + $0x1d0] sm:$0xff]
      %v1548 = vld [vmem:[%s4 + $0x1d8] sm:$0xff]
      %v1549 = vld [vmem:[%s4 + $0x1e0] sm:$0xff]
      %v1550 = vld [vmem:[%s4 + $0x1e8] sm:$0xff]
      %v1551 = vld [vmem:[%s4 + $0x1f0] sm:$0xff]
      %v1552 = vld [vmem:[%s4 + $0x1f8] sm:$0xff]
      %v1553 = vld [vmem:[%s5] sm:$0x3]
      %v1555 = vlaneseq
      %v1556 = vshrl.u32 %v1555, 7
      %v1557 = vsub.s32 0, %v1556
      %v1558 = vrot.slane %v1553, %v1557
      %v1559 = vlaneseq
      %v1560 = vshrl.u32 %v1559, 7
      %v1561 = vsub.s32 1, %v1560
      %v1562 = vrot.slane %v1553, %v1561
      %1565 = vmatprep.subr.mxu0 %v1520
      %1566 = vmatpush1.msra.mxu0 %v1519
      %1567 = vmatprep.subr.mxu0 %v1518
      %1568 = vmatpush1.msra.mxu0 %v1517
      %1569 = vmatprep.subr.mxu0 %v1516
      %1570 = vmatpush1.msra.mxu0 %v1515
      %1571 = vmatprep.subr.mxu0 %v1514
      %1572 = vmatpush1.msra.mxu0 %v1513
      %1573 = vmatprep.subr.mxu0 %v1512
      %1574 = vmatpush1.msra.mxu0 %v1511
      %1575 = vmatprep.subr.mxu0 %v1510
      %1576 = vmatpush1.msra.mxu0 %v1509
      %1577 = vmatprep.subr.mxu0 %v1508
      %1578 = vmatpush1.msra.mxu0 %v1507
      %1579 = vmatprep.subr.mxu0 %v1506
      %1580 = vmatpush1.msra.mxu0 %v1505
      %1581 = vmatprep.subr.mxu0 %v1504
      %1582 = vmatpush1.msra.mxu0 %v1503
      %1583 = vmatprep.subr.mxu0 %v1502
      %1584 = vmatpush1.msra.mxu0 %v1501
      %1585 = vmatprep.subr.mxu0 %v1500
      %1586 = vmatpush1.msra.mxu0 %v1499
      %1587 = vmatprep.subr.mxu0 %v1498
      %1588 = vmatpush1.msra.mxu0 %v1497
      %1589 = vmatprep.subr.mxu0 %v1496
      %1590 = vmatpush1.msra.mxu0 %v1495
      %1591 = vmatprep.subr.mxu0 %v1494
      %1592 = vmatpush1.msra.mxu0 %v1493
      %1593 = vmatprep.subr.mxu0 %v1492
      %1594 = vmatpush1.msra.mxu0 %v1491
      %1595 = vmatprep.subr.mxu0 %v1490
      %1596 = vmatpush1.msra.mxu0 %v1489
      %1597 = vmatprep.subr.mxu0 %v1552
      %1598 = vmatpush2.msra.mxu0 %v1551
      %1599 = vmatprep.subr.mxu0 %v1550
      %1600 = vmatpush2.msra.mxu0 %v1549
      %1601 = vmatprep.subr.mxu0 %v1548
      %1602 = vmatpush2.msra.mxu0 %v1547
      %1603 = vmatprep.subr.mxu0 %v1546
      %1604 = vmatpush2.msra.mxu0 %v1545
      %1605 = vmatprep.subr.mxu0 %v1544
      %1606 = vmatpush2.msra.mxu0 %v1543
      %1607 = vmatprep.subr.mxu0 %v1542
      %1608 = vmatpush2.msra.mxu0 %v1541
      %1609 = vmatprep.subr.mxu0 %v1540
      %1610 = vmatpush2.msra.mxu0 %v1539
      %1611 = vmatprep.subr.mxu0 %v1538
      %1612 = vmatpush2.msra.mxu0 %v1537
      %1613 = vmatprep.subr.mxu0 %v1536
      %1614 = vmatpush2.msra.mxu0 %v1535
      %1615 = vmatprep.subr.mxu0 %v1534
      %1616 = vmatpush2.msra.mxu0 %v1533
      %1617 = vmatprep.subr.mxu0 %v1532
      %1618 = vmatpush2.msra.mxu0 %v1531
      %1619 = vmatprep.subr.mxu0 %v1530
      %1620 = vmatpush2.msra.mxu0 %v1529
      %1621 = vmatprep.subr.mxu0 %v1528
      %1622 = vmatpush2.msra.mxu0 %v1527
      %1623 = vmatprep.subr.mxu0 %v1526
      %1624 = vmatpush2.msra.mxu0 %v1525
      %1625 = vmatprep.subr.mxu0 %v1524
      %1626 = vmatpush2.msra.mxu0 %v1523
      %1627 = vmatprep.subr.mxu0 %v1522
      %1628 = vmatpush2.msra.mxu0 %v1521
      %1629 = vmatprep.mubr.f32.mxu0 %v1426
      %1630 = vmatmul.mubr.f32.gmra.mxu0 %v1425
      %v1631 = vpop.f32.mrf.mxu0
      %v1632 = vadd.f32 %v1558, %v1631
      %v1633 = vpop.f32.mrf.mxu0
      %v1634 = vadd.f32 %v1562, %v1633
      %1635 = vmatprep.mubr.f32.mxu0 %v1428
      %1636 = vmatmul.mubr.f32.gmra.mxu0 %v1427
      %v1637 = vpop.f32.mrf.mxu0
      %v1638 = vadd.f32 %v1558, %v1637
      %v1639 = vpop.f32.mrf.mxu0
      %v1640 = vadd.f32 %v1562, %v1639
      %1641 = vmatprep.mubr.f32.mxu0 %v1430
      %1642 = vmatmul.mubr.f32.gmra.mxu0 %v1429
      %v1643 = vpop.f32.mrf.mxu0
      %v1644 = vadd.f32 %v1558, %v1643
      %v1645 = vpop.f32.mrf.mxu0
      %v1646 = vadd.f32 %v1562, %v1645
      %1647 = vmatprep.mubr.f32.mxu0 %v1432
      %1648 = vmatmul.mubr.f32.gmra.mxu0 %v1431
      %v1649 = vpop.f32.mrf.mxu0
      %v1650 = vadd.f32 %v1558, %v1649
      %v1651 = vpop.f32.mrf.mxu0
      %v1652 = vadd.f32 %v1562, %v1651
      %1653 = vmatprep.mubr.f32.mxu0 %v1434
      %1654 = vmatmul.mubr.f32.gmra.mxu0 %v1433
      %v1655 = vpop.f32.mrf.mxu0
      %v1656 = vadd.f32 %v1558, %v1655
      %v1657 = vpop.f32.mrf.mxu0
      %v1658 = vadd.f32 %v1562, %v1657
      %1659 = vmatprep.mubr.f32.mxu0 %v1436
      %1660 = vmatmul.mubr.f32.gmra.mxu0 %v1435
      %v1661 = vpop.f32.mrf.mxu0
      %v1662 = vadd.f32 %v1558, %v1661
      %v1663 = vpop.f32.mrf.mxu0
      %v1664 = vadd.f32 %v1562, %v1663
      %1665 = vmatprep.mubr.f32.mxu0 %v1438
      %1666 = vmatmul.mubr.f32.gmra.mxu0 %v1437
      %v1667 = vpop.f32.mrf.mxu0
      %v1668 = vadd.f32 %v1558, %v1667
      %v1669 = vpop.f32.mrf.mxu0
      %v1670 = vadd.f32 %v1562, %v1669
      %1671 = vmatprep.mubr.f32.mxu0 %v1440
      %1672 = vmatmul.mubr.f32.gmra.mxu0 %v1439
      %v1673 = vpop.f32.mrf.mxu0
      %v1674 = vadd.f32 %v1558, %v1673
      %v1675 = vpop.f32.mrf.mxu0
      %v1676 = vadd.f32 %v1562, %v1675
      %1677 = vmatprep.mubr.f32.mxu0 %v1442
      %1678 = vmatmul.mubr.f32.gmra.mxu0 %v1441
      %v1679 = vpop.f32.mrf.mxu0
      %v1680 = vadd.f32 %v1558, %v1679
      %v1681 = vpop.f32.mrf.mxu0
      %v1682 = vadd.f32 %v1562, %v1681
      %1683 = vmatprep.mubr.f32.mxu0 %v1444
      %1684 = vmatmul.mubr.f32.gmra.mxu0 %v1443
      %v1685 = vpop.f32.mrf.mxu0
      %v1686 = vadd.f32 %v1558, %v1685
      %v1687 = vpop.f32.mrf.mxu0
      %v1688 = vadd.f32 %v1562, %v1687
      %1689 = vmatprep.mubr.f32.mxu0 %v1446
      %1690 = vmatmul.mubr.f32.gmra.mxu0 %v1445
      %v1691 = vpop.f32.mrf.mxu0
      %v1692 = vadd.f32 %v1558, %v1691
      %v1693 = vpop.f32.mrf.mxu0
      %v1694 = vadd.f32 %v1562, %v1693
      %1695 = vmatprep.mubr.f32.mxu0 %v1448
      %1696 = vmatmul.mubr.f32.gmra.mxu0 %v1447
      %v1697 = vpop.f32.mrf.mxu0
      %v1698 = vadd.f32 %v1558, %v1697
      %v1699 = vpop.f32.mrf.mxu0
      %v1700 = vadd.f32 %v1562, %v1699
      %1701 = vmatprep.mubr.f32.mxu0 %v1450
      %1702 = vmatmul.mubr.f32.gmra.mxu0 %v1449
      %v1703 = vpop.f32.mrf.mxu0
      %v1704 = vadd.f32 %v1558, %v1703
      %v1705 = vpop.f32.mrf.mxu0
      %v1706 = vadd.f32 %v1562, %v1705
      %1707 = vmatprep.mubr.f32.mxu0 %v1452
      %1708 = vmatmul.mubr.f32.gmra.mxu0 %v1451
      %v1709 = vpop.f32.mrf.mxu0
      %v1710 = vadd.f32 %v1558, %v1709
      %v1711 = vpop.f32.mrf.mxu0
      %v1712 = vadd.f32 %v1562, %v1711
      %1713 = vmatprep.mubr.f32.mxu0 %v1454
      %1714 = vmatmul.mubr.f32.gmra.mxu0 %v1453
      %v1715 = vpop.f32.mrf.mxu0
      %v1716 = vadd.f32 %v1558, %v1715
      %v1717 = vpop.f32.mrf.mxu0
      %v1718 = vadd.f32 %v1562, %v1717
      %1719 = vmatprep.mubr.f32.mxu0 %v1456
      %1720 = vmatmul.mubr.f32.gmra.mxu0 %v1455
      %v1721 = vpop.f32.mrf.mxu0
      %v1722 = vadd.f32 %v1558, %v1721
      %v1723 = vpop.f32.mrf.mxu0
      %v1724 = vadd.f32 %v1562, %v1723
      %1725 = vmatprep.mubr.f32.mxu0 %v1458
      %1726 = vmatmul.mubr.f32.gmra.mxu0 %v1457
      %v1727 = vpop.f32.mrf.mxu0
      %v1728 = vadd.f32 %v1558, %v1727
      %v1729 = vpop.f32.mrf.mxu0
      %v1730 = vadd.f32 %v1562, %v1729
      %1731 = vmatprep.mubr.f32.mxu0 %v1460
      %1732 = vmatmul.mubr.f32.gmra.mxu0 %v1459
      %v1733 = vpop.f32.mrf.mxu0
      %v1734 = vadd.f32 %v1558, %v1733
      %v1735 = vpop.f32.mrf.mxu0
      %v1736 = vadd.f32 %v1562, %v1735
      %1737 = vmatprep.mubr.f32.mxu0 %v1462
      %1738 = vmatmul.mubr.f32.gmra.mxu0 %v1461
      %v1739 = vpop.f32.mrf.mxu0
      %v1740 = vadd.f32 %v1558, %v1739
      %v1741 = vpop.f32.mrf.mxu0
      %v1742 = vadd.f32 %v1562, %v1741
      %1743 = vmatprep.mubr.f32.mxu0 %v1464
      %1744 = vmatmul.mubr.f32.gmra.mxu0 %v1463
      %v1745 = vpop.f32.mrf.mxu0
      %v1746 = vadd.f32 %v1558, %v1745
      %v1747 = vpop.f32.mrf.mxu0
      %v1748 = vadd.f32 %v1562, %v1747
      %1749 = vmatprep.mubr.f32.mxu0 %v1466
      %1750 = vmatmul.mubr.f32.gmra.mxu0 %v1465
      %v1751 = vpop.f32.mrf.mxu0
      %v1752 = vadd.f32 %v1558, %v1751
      %v1753 = vpop.f32.mrf.mxu0
      %v1754 = vadd.f32 %v1562, %v1753
      %1755 = vmatprep.mubr.f32.mxu0 %v1468
      %1756 = vmatmul.mubr.f32.gmra.mxu0 %v1467
      %v1757 = vpop.f32.mrf.mxu0
      %v1758 = vadd.f32 %v1558, %v1757
      %v1759 = vpop.f32.mrf.mxu0
      %v1760 = vadd.f32 %v1562, %v1759
      %1761 = vmatprep.mubr.f32.mxu0 %v1470
      %1762 = vmatmul.mubr.f32.gmra.mxu0 %v1469
      %v1763 = vpop.f32.mrf.mxu0
      %v1764 = vadd.f32 %v1558, %v1763
      %v1765 = vpop.f32.mrf.mxu0
      %v1766 = vadd.f32 %v1562, %v1765
      %1767 = vmatprep.mubr.f32.mxu0 %v1472
      %1768 = vmatmul.mubr.f32.gmra.mxu0 %v1471
      %v1769 = vpop.f32.mrf.mxu0
      %v1770 = vadd.f32 %v1558, %v1769
      %v1771 = vpop.f32.mrf.mxu0
      %v1772 = vadd.f32 %v1562, %v1771
      %1773 = vmatprep.mubr.f32.mxu0 %v1474
      %1774 = vmatmul.mubr.f32.gmra.mxu0 %v1473
      %v1775 = vpop.f32.mrf.mxu0
      %v1776 = vadd.f32 %v1558, %v1775
      %v1777 = vpop.f32.mrf.mxu0
      %v1778 = vadd.f32 %v1562, %v1777
      %1779 = vmatprep.mubr.f32.mxu0 %v1476
      %1780 = vmatmul.mubr.f32.gmra.mxu0 %v1475
      %v1781 = vpop.f32.mrf.mxu0
      %v1782 = vadd.f32 %v1558, %v1781
      %v1783 = vpop.f32.mrf.mxu0
      %v1784 = vadd.f32 %v1562, %v1783
      %1785 = vmatprep.mubr.f32.mxu0 %v1478
      %1786 = vmatmul.mubr.f32.gmra.mxu0 %v1477
      %v1787 = vpop.f32.mrf.mxu0
      %v1788 = vadd.f32 %v1558, %v1787
      %v1789 = vpop.f32.mrf.mxu0
      %v1790 = vadd.f32 %v1562, %v1789
      %1791 = vmatprep.mubr.f32.mxu0 %v1480
      %1792 = vmatmul.mubr.f32.gmra.mxu0 %v1479
      %v1793 = vpop.f32.mrf.mxu0
      %v1794 = vadd.f32 %v1558, %v1793
      %v1795 = vpop.f32.mrf.mxu0
      %v1796 = vadd.f32 %v1562, %v1795
      %1797 = vmatprep.mubr.f32.mxu0 %v1482
      %1798 = vmatmul.mubr.f32.gmra.mxu0 %v1481
      %v1799 = vpop.f32.mrf.mxu0
      %v1800 = vadd.f32 %v1558, %v1799
      %v1801 = vpop.f32.mrf.mxu0
      %v1802 = vadd.f32 %v1562, %v1801
      %1803 = vmatprep.mubr.f32.mxu0 %v1484
      %1804 = vmatmul.mubr.f32.gmra.mxu0 %v1483
      %v1805 = vpop.f32.mrf.mxu0
      %v1806 = vadd.f32 %v1558, %v1805
      %v1807 = vpop.f32.mrf.mxu0
      %v1808 = vadd.f32 %v1562, %v1807
      %1809 = vmatprep.mubr.f32.mxu0 %v1486
      %1810 = vmatmul.mubr.f32.gmra.mxu0 %v1485
      %v1811 = vpop.f32.mrf.mxu0
      %v1812 = vadd.f32 %v1558, %v1811
      %v1813 = vpop.f32.mrf.mxu0
      %v1814 = vadd.f32 %v1562, %v1813
      %1815 = vmatprep.mubr.f32.mxu0 %v1488
      %1816 = vmatmul.mubr.f32.gmra.mxu0 %v1487
      %v1817 = vpop.f32.mrf.mxu0
      %v1818 = vadd.f32 %v1558, %v1817
      %v1819 = vpop.f32.mrf.mxu0
      %v1820 = vadd.f32 %v1562, %v1819
      %1821 = vdwg.mxu0
      %v1822 = vmul.f32 %v1632, 0.5
      %v1823 = vmul.f32 %v1634, 0.5
      %v1824 = vmul.f32 %v1638, 0.5
      %v1825 = vmul.f32 %v1640, 0.5
      %v1826 = vmul.f32 %v1644, 0.5
      %v1827 = vmul.f32 %v1646, 0.5
      %v1828 = vmul.f32 %v1650, 0.5
      %v1829 = vmul.f32 %v1652, 0.5
      %v1830 = vmul.f32 %v1656, 0.5
      %v1831 = vmul.f32 %v1658, 0.5
      %v1832 = vmul.f32 %v1662, 0.5
      %v1833 = vmul.f32 %v1664, 0.5
      %v1834 = vmul.f32 %v1668, 0.5
      %v1835 = vmul.f32 %v1670, 0.5
      %v1836 = vmul.f32 %v1674, 0.5
      %v1837 = vmul.f32 %v1676, 0.5
      %v1838 = vmul.f32 %v1680, 0.5
      %v1839 = vmul.f32 %v1682, 0.5
      %v1840 = vmul.f32 %v1686, 0.5
      %v1841 = vmul.f32 %v1688, 0.5
      %v1842 = vmul.f32 %v1692, 0.5
      %v1843 = vmul.f32 %v1694, 0.5
      %v1844 = vmul.f32 %v1698, 0.5
      %v1845 = vmul.f32 %v1700, 0.5
      %v1846 = vmul.f32 %v1704, 0.5
      %v1847 = vmul.f32 %v1706, 0.5
      %v1848 = vmul.f32 %v1710, 0.5
      %v1849 = vmul.f32 %v1712, 0.5
      %v1850 = vmul.f32 %v1716, 0.5
      %v1851 = vmul.f32 %v1718, 0.5
      %v1852 = vmul.f32 %v1722, 0.5
      %v1853 = vmul.f32 %v1724, 0.5
      %v1854 = vmul.f32 %v1728, 0.5
      %v1855 = vmul.f32 %v1730, 0.5
      %v1856 = vmul.f32 %v1734, 0.5
      %v1857 = vmul.f32 %v1736, 0.5
      %v1858 = vmul.f32 %v1740, 0.5
      %v1859 = vmul.f32 %v1742, 0.5
      %v1860 = vmul.f32 %v1746, 0.5
      %v1861 = vmul.f32 %v1748, 0.5
      %v1862 = vmul.f32 %v1752, 0.5
      %v1863 = vmul.f32 %v1754, 0.5
      %v1864 = vmul.f32 %v1758, 0.5
      %v1865 = vmul.f32 %v1760, 0.5
      %v1866 = vmul.f32 %v1764, 0.5
      %v1867 = vmul.f32 %v1766, 0.5
      %v1868 = vmul.f32 %v1770, 0.5
      %v1869 = vmul.f32 %v1772, 0.5
      %v1870 = vmul.f32 %v1776, 0.5
      %v1871 = vmul.f32 %v1778, 0.5
      %v1872 = vmul.f32 %v1782, 0.5
      %v1873 = vmul.f32 %v1784, 0.5
      %v1874 = vmul.f32 %v1788, 0.5
      %v1875 = vmul.f32 %v1790, 0.5
      %v1876 = vmul.f32 %v1794, 0.5
      %v1877 = vmul.f32 %v1796, 0.5
      %v1878 = vmul.f32 %v1800, 0.5
      %v1879 = vmul.f32 %v1802, 0.5
      %v1880 = vmul.f32 %v1806, 0.5
      %v1881 = vmul.f32 %v1808, 0.5
      %v1882 = vmul.f32 %v1812, 0.5
      %v1883 = vmul.f32 %v1814, 0.5
      %v1884 = vmul.f32 %v1818, 0.5
      %v1885 = vmul.f32 %v1820, 0.5
      %v1886 = vmul.f32 %v1632, 0.044715
      %v1887 = vmul.f32 %v1634, 0.044715
      %v1888 = vmul.f32 %v1638, 0.044715
      %v1889 = vmul.f32 %v1640, 0.044715
      %v1890 = vmul.f32 %v1644, 0.044715
      %v1891 = vmul.f32 %v1646, 0.044715
      %v1892 = vmul.f32 %v1650, 0.044715
      %v1893 = vmul.f32 %v1652, 0.044715
      %v1894 = vmul.f32 %v1656, 0.044715
      %v1895 = vmul.f32 %v1658, 0.044715
      %v1896 = vmul.f32 %v1662, 0.044715
      %v1897 = vmul.f32 %v1664, 0.044715
      %v1898 = vmul.f32 %v1668, 0.044715
      %v1899 = vmul.f32 %v1670, 0.044715
      %v1900 = vmul.f32 %v1674, 0.044715
      %v1901 = vmul.f32 %v1676, 0.044715
      %v1902 = vmul.f32 %v1680, 0.044715
      %v1903 = vmul.f32 %v1682, 0.044715
      %v1904 = vmul.f32 %v1686, 0.044715
      %v1905 = vmul.f32 %v1688, 0.044715
      %v1906 = vmul.f32 %v1692, 0.044715
      %v1907 = vmul.f32 %v1694, 0.044715
      %v1908 = vmul.f32 %v1698, 0.044715
      %v1909 = vmul.f32 %v1700, 0.044715
      %v1910 = vmul.f32 %v1704, 0.044715
      %v1911 = vmul.f32 %v1706, 0.044715
      %v1912 = vmul.f32 %v1710, 0.044715
      %v1913 = vmul.f32 %v1712, 0.044715
      %v1914 = vmul.f32 %v1716, 0.044715
      %v1915 = vmul.f32 %v1718, 0.044715
      %v1916 = vmul.f32 %v1722, 0.044715
      %v1917 = vmul.f32 %v1724, 0.044715
      %v1918 = vmul.f32 %v1728, 0.044715
      %v1919 = vmul.f32 %v1730, 0.044715
      %v1920 = vmul.f32 %v1734, 0.044715
      %v1921 = vmul.f32 %v1736, 0.044715
      %v1922 = vmul.f32 %v1740, 0.044715
      %v1923 = vmul.f32 %v1742, 0.044715
      %v1924 = vmul.f32 %v1746, 0.044715
      %v1925 = vmul.f32 %v1748, 0.044715
      %v1926 = vmul.f32 %v1752, 0.044715
      %v1927 = vmul.f32 %v1754, 0.044715
      %v1928 = vmul.f32 %v1758, 0.044715
      %v1929 = vmul.f32 %v1760, 0.044715
      %v1930 = vmul.f32 %v1764, 0.044715
      %v1931 = vmul.f32 %v1766, 0.044715
      %v1932 = vmul.f32 %v1770, 0.044715
      %v1933 = vmul.f32 %v1772, 0.044715
      %v1934 = vmul.f32 %v1776, 0.044715
      %v1935 = vmul.f32 %v1778, 0.044715
      %v1936 = vmul.f32 %v1782, 0.044715
      %v1937 = vmul.f32 %v1784, 0.044715
      %v1938 = vmul.f32 %v1788, 0.044715
      %v1939 = vmul.f32 %v1790, 0.044715
      %v1940 = vmul.f32 %v1794, 0.044715
      %v1941 = vmul.f32 %v1796, 0.044715
      %v1942 = vmul.f32 %v1800, 0.044715
      %v1943 = vmul.f32 %v1802, 0.044715
      %v1944 = vmul.f32 %v1806, 0.044715
      %v1945 = vmul.f32 %v1808, 0.044715
      %v1946 = vmul.f32 %v1812, 0.044715
      %v1947 = vmul.f32 %v1814, 0.044715
      %v1948 = vmul.f32 %v1818, 0.044715
      %v1949 = vmul.f32 %v1820, 0.044715
      %v1950 = vmul.f32 %v1886, %v1632
      %v1951 = vmul.f32 %v1887, %v1634
      %v1952 = vmul.f32 %v1888, %v1638
      %v1953 = vmul.f32 %v1889, %v1640
      %v1954 = vmul.f32 %v1890, %v1644
      %v1955 = vmul.f32 %v1891, %v1646
      %v1956 = vmul.f32 %v1892, %v1650
      %v1957 = vmul.f32 %v1893, %v1652
      %v1958 = vmul.f32 %v1894, %v1656
      %v1959 = vmul.f32 %v1895, %v1658
      %v1960 = vmul.f32 %v1896, %v1662
      %v1961 = vmul.f32 %v1897, %v1664
      %v1962 = vmul.f32 %v1898, %v1668
      %v1963 = vmul.f32 %v1899, %v1670
      %v1964 = vmul.f32 %v1900, %v1674
      %v1965 = vmul.f32 %v1901, %v1676
      %v1966 = vmul.f32 %v1902, %v1680
      %v1967 = vmul.f32 %v1903, %v1682
      %v1968 = vmul.f32 %v1904, %v1686
      %v1969 = vmul.f32 %v1905, %v1688
      %v1970 = vmul.f32 %v1906, %v1692
      %v1971 = vmul.f32 %v1907, %v1694
      %v1972 = vmul.f32 %v1908, %v1698
      %v1973 = vmul.f32 %v1909, %v1700
      %v1974 = vmul.f32 %v1910, %v1704
      %v1975 = vmul.f32 %v1911, %v1706
      %v1976 = vmul.f32 %v1912, %v1710
      %v1977 = vmul.f32 %v1913, %v1712
      %v1978 = vmul.f32 %v1914, %v1716
      %v1979 = vmul.f32 %v1915, %v1718
      %v1980 = vmul.f32 %v1916, %v1722
      %v1981 = vmul.f32 %v1917, %v1724
      %v1982 = vmul.f32 %v1918, %v1728
      %v1983 = vmul.f32 %v1919, %v1730
      %v1984 = vmul.f32 %v1920, %v1734
      %v1985 = vmul.f32 %v1921, %v1736
      %v1986 = vmul.f32 %v1922, %v1740
      %v1987 = vmul.f32 %v1923, %v1742
      %v1988 = vmul.f32 %v1924, %v1746
      %v1989 = vmul.f32 %v1925, %v1748
      %v1990 = vmul.f32 %v1926, %v1752
      %v1991 = vmul.f32 %v1927, %v1754
      %v1992 = vmul.f32 %v1928, %v1758
      %v1993 = vmul.f32 %v1929, %v1760
      %v1994 = vmul.f32 %v1930, %v1764
      %v1995 = vmul.f32 %v1931, %v1766
      %v1996 = vmul.f32 %v1932, %v1770
      %v1997 = vmul.f32 %v1933, %v1772
      %v1998 = vmul.f32 %v1934, %v1776
      %v1999 = vmul.f32 %v1935, %v1778
      %v2000 = vmul.f32 %v1936, %v1782
      %v2001 = vmul.f32 %v1937, %v1784
      %v2002 = vmul.f32 %v1938, %v1788
      %v2003 = vmul.f32 %v1939, %v1790
      %v2004 = vmul.f32 %v1940, %v1794
      %v2005 = vmul.f32 %v1941, %v1796
      %v2006 = vmul.f32 %v1942, %v1800
      %v2007 = vmul.f32 %v1943, %v1802
      %v2008 = vmul.f32 %v1944, %v1806
      %v2009 = vmul.f32 %v1945, %v1808
      %v2010 = vmul.f32 %v1946, %v1812
      %v2011 = vmul.f32 %v1947, %v1814
      %v2012 = vmul.f32 %v1948, %v1818
      %v2013 = vmul.f32 %v1949, %v1820
      %v2014 = vmul.f32 %v1950, %v1632
      %v2015 = vmul.f32 %v1951, %v1634
      %v2016 = vmul.f32 %v1952, %v1638
      %v2017 = vmul.f32 %v1953, %v1640
      %v2018 = vmul.f32 %v1954, %v1644
      %v2019 = vmul.f32 %v1955, %v1646
      %v2020 = vmul.f32 %v1956, %v1650
      %v2021 = vmul.f32 %v1957, %v1652
      %v2022 = vmul.f32 %v1958, %v1656
      %v2023 = vmul.f32 %v1959, %v1658
      %v2024 = vmul.f32 %v1960, %v1662
      %v2025 = vmul.f32 %v1961, %v1664
      %v2026 = vmul.f32 %v1962, %v1668
      %v2027 = vmul.f32 %v1963, %v1670
      %v2028 = vmul.f32 %v1964, %v1674
      %v2029 = vmul.f32 %v1965, %v1676
      %v2030 = vmul.f32 %v1966, %v1680
      %v2031 = vmul.f32 %v1967, %v1682
      %v2032 = vmul.f32 %v1968, %v1686
      %v2033 = vmul.f32 %v1969, %v1688
      %v2034 = vmul.f32 %v1970, %v1692
      %v2035 = vmul.f32 %v1971, %v1694
      %v2036 = vmul.f32 %v1972, %v1698
      %v2037 = vmul.f32 %v1973, %v1700
      %v2038 = vmul.f32 %v1974, %v1704
      %v2039 = vmul.f32 %v1975, %v1706
      %v2040 = vmul.f32 %v1976, %v1710
      %v2041 = vmul.f32 %v1977, %v1712
      %v2042 = vmul.f32 %v1978, %v1716
      %v2043 = vmul.f32 %v1979, %v1718
      %v2044 = vmul.f32 %v1980, %v1722
      %v2045 = vmul.f32 %v1981, %v1724
      %v2046 = vmul.f32 %v1982, %v1728
      %v2047 = vmul.f32 %v1983, %v1730
      %v2048 = vmul.f32 %v1984, %v1734
      %v2049 = vmul.f32 %v1985, %v1736
      %v2050 = vmul.f32 %v1986, %v1740
      %v2051 = vmul.f32 %v1987, %v1742
      %v2052 = vmul.f32 %v1988, %v1746
      %v2053 = vmul.f32 %v1989, %v1748
      %v2054 = vmul.f32 %v1990, %v1752
      %v2055 = vmul.f32 %v1991, %v1754
      %v2056 = vmul.f32 %v1992, %v1758
      %v2057 = vmul.f32 %v1993, %v1760
      %v2058 = vmul.f32 %v1994, %v1764
      %v2059 = vmul.f32 %v1995, %v1766
      %v2060 = vmul.f32 %v1996, %v1770
      %v2061 = vmul.f32 %v1997, %v1772
      %v2062 = vmul.f32 %v1998, %v1776
      %v2063 = vmul.f32 %v1999, %v1778
      %v2064 = vmul.f32 %v2000, %v1782
      %v2065 = vmul.f32 %v2001, %v1784
      %v2066 = vmul.f32 %v2002, %v1788
      %v2067 = vmul.f32 %v2003, %v1790
      %v2068 = vmul.f32 %v2004, %v1794
      %v2069 = vmul.f32 %v2005, %v1796
      %v2070 = vmul.f32 %v2006, %v1800
      %v2071 = vmul.f32 %v2007, %v1802
      %v2072 = vmul.f32 %v2008, %v1806
      %v2073 = vmul.f32 %v2009, %v1808
      %v2074 = vmul.f32 %v2010, %v1812
      %v2075 = vmul.f32 %v2011, %v1814
      %v2076 = vmul.f32 %v2012, %v1818
      %v2077 = vmul.f32 %v2013, %v1820
      %v2078 = vadd.f32 %v1632, %v2014
      %v2079 = vadd.f32 %v1634, %v2015
      %v2080 = vadd.f32 %v1638, %v2016
      %v2081 = vadd.f32 %v1640, %v2017
      %v2082 = vadd.f32 %v1644, %v2018
      %v2083 = vadd.f32 %v1646, %v2019
      %v2084 = vadd.f32 %v1650, %v2020
      %v2085 = vadd.f32 %v1652, %v2021
      %v2086 = vadd.f32 %v1656, %v2022
      %v2087 = vadd.f32 %v1658, %v2023
      %v2088 = vadd.f32 %v1662, %v2024
      %v2089 = vadd.f32 %v1664, %v2025
      %v2090 = vadd.f32 %v1668, %v2026
      %v2091 = vadd.f32 %v1670, %v2027
      %v2092 = vadd.f32 %v1674, %v2028
      %v2093 = vadd.f32 %v1676, %v2029
      %v2094 = vadd.f32 %v1680, %v2030
      %v2095 = vadd.f32 %v1682, %v2031
      %v2096 = vadd.f32 %v1686, %v2032
      %v2097 = vadd.f32 %v1688, %v2033
      %v2098 = vadd.f32 %v1692, %v2034
      %v2099 = vadd.f32 %v1694, %v2035
      %v2100 = vadd.f32 %v1698, %v2036
      %v2101 = vadd.f32 %v1700, %v2037
      %v2102 = vadd.f32 %v1704, %v2038
      %v2103 = vadd.f32 %v1706, %v2039
      %v2104 = vadd.f32 %v1710, %v2040
      %v2105 = vadd.f32 %v1712, %v2041
      %v2106 = vadd.f32 %v1716, %v2042
      %v2107 = vadd.f32 %v1718, %v2043
      %v2108 = vadd.f32 %v1722, %v2044
      %v2109 = vadd.f32 %v1724, %v2045
      %v2110 = vadd.f32 %v1728, %v2046
      %v2111 = vadd.f32 %v1730, %v2047
      %v2112 = vadd.f32 %v1734, %v2048
      %v2113 = vadd.f32 %v1736, %v2049
      %v2114 = vadd.f32 %v1740, %v2050
      %v2115 = vadd.f32 %v1742, %v2051
      %v2116 = vadd.f32 %v1746, %v2052
      %v2117 = vadd.f32 %v1748, %v2053
      %v2118 = vadd.f32 %v1752, %v2054
      %v2119 = vadd.f32 %v1754, %v2055
      %v2120 = vadd.f32 %v1758, %v2056
      %v2121 = vadd.f32 %v1760, %v2057
      %v2122 = vadd.f32 %v1764, %v2058
      %v2123 = vadd.f32 %v1766, %v2059
      %v2124 = vadd.f32 %v1770, %v2060
      %v2125 = vadd.f32 %v1772, %v2061
      %v2126 = vadd.f32 %v1776, %v2062
      %v2127 = vadd.f32 %v1778, %v2063
      %v2128 = vadd.f32 %v1782, %v2064
      %v2129 = vadd.f32 %v1784, %v2065
      %v2130 = vadd.f32 %v1788, %v2066
      %v2131 = vadd.f32 %v1790, %v2067
      %v2132 = vadd.f32 %v1794, %v2068
      %v2133 = vadd.f32 %v1796, %v2069
      %v2134 = vadd.f32 %v1800, %v2070
      %v2135 = vadd.f32 %v1802, %v2071
      %v2136 = vadd.f32 %v1806, %v2072
      %v2137 = vadd.f32 %v1808, %v2073
      %v2138 = vadd.f32 %v1812, %v2074
      %v2139 = vadd.f32 %v1814, %v2075
      %v2140 = vadd.f32 %v1818, %v2076
      %v2141 = vadd.f32 %v1820, %v2077
      %v2142 = vmul.f32 %v2078, 0.7978846
      %v2143 = vmul.f32 %v2079, 0.7978846
      %v2144 = vmul.f32 %v2080, 0.7978846
      %v2145 = vmul.f32 %v2081, 0.7978846
      %v2146 = vmul.f32 %v2082, 0.7978846
      %v2147 = vmul.f32 %v2083, 0.7978846
      %v2148 = vmul.f32 %v2084, 0.7978846
      %v2149 = vmul.f32 %v2085, 0.7978846
      %v2150 = vmul.f32 %v2086, 0.7978846
      %v2151 = vmul.f32 %v2087, 0.7978846
      %v2152 = vmul.f32 %v2088, 0.7978846
      %v2153 = vmul.f32 %v2089, 0.7978846
      %v2154 = vmul.f32 %v2090, 0.7978846
      %v2155 = vmul.f32 %v2091, 0.7978846
      %v2156 = vmul.f32 %v2092, 0.7978846
      %v2157 = vmul.f32 %v2093, 0.7978846
      %v2158 = vmul.f32 %v2094, 0.7978846
      %v2159 = vmul.f32 %v2095, 0.7978846
      %v2160 = vmul.f32 %v2096, 0.7978846
      %v2161 = vmul.f32 %v2097, 0.7978846
      %v2162 = vmul.f32 %v2098, 0.7978846
      %v2163 = vmul.f32 %v2099, 0.7978846
      %v2164 = vmul.f32 %v2100, 0.7978846
      %v2165 = vmul.f32 %v2101, 0.7978846
      %v2166 = vmul.f32 %v2102, 0.7978846
      %v2167 = vmul.f32 %v2103, 0.7978846
      %v2168 = vmul.f32 %v2104, 0.7978846
      %v2169 = vmul.f32 %v2105, 0.7978846
      %v2170 = vmul.f32 %v2106, 0.7978846
      %v2171 = vmul.f32 %v2107, 0.7978846
      %v2172 = vmul.f32 %v2108, 0.7978846
      %v2173 = vmul.f32 %v2109, 0.7978846
      %v2174 = vmul.f32 %v2110, 0.7978846
      %v2175 = vmul.f32 %v2111, 0.7978846
      %v2176 = vmul.f32 %v2112, 0.7978846
      %v2177 = vmul.f32 %v2113, 0.7978846
      %v2178 = vmul.f32 %v2114, 0.7978846
      %v2179 = vmul.f32 %v2115, 0.7978846
      %v2180 = vmul.f32 %v2116, 0.7978846
      %v2181 = vmul.f32 %v2117, 0.7978846
      %v2182 = vmul.f32 %v2118, 0.7978846
      %v2183 = vmul.f32 %v2119, 0.7978846
      %v2184 = vmul.f32 %v2120, 0.7978846
      %v2185 = vmul.f32 %v2121, 0.7978846
      %v2186 = vmul.f32 %v2122, 0.7978846
      %v2187 = vmul.f32 %v2123, 0.7978846
      %v2188 = vmul.f32 %v2124, 0.7978846
      %v2189 = vmul.f32 %v2125, 0.7978846
      %v2190 = vmul.f32 %v2126, 0.7978846
      %v2191 = vmul.f32 %v2127, 0.7978846
      %v2192 = vmul.f32 %v2128, 0.7978846
      %v2193 = vmul.f32 %v2129, 0.7978846
      %v2194 = vmul.f32 %v2130, 0.7978846
      %v2195 = vmul.f32 %v2131, 0.7978846
      %v2196 = vmul.f32 %v2132, 0.7978846
      %v2197 = vmul.f32 %v2133, 0.7978846
      %v2198 = vmul.f32 %v2134, 0.7978846
      %v2199 = vmul.f32 %v2135, 0.7978846
      %v2200 = vmul.f32 %v2136, 0.7978846
      %v2201 = vmul.f32 %v2137, 0.7978846
      %v2202 = vmul.f32 %v2138, 0.7978846
      %v2203 = vmul.f32 %v2139, 0.7978846
      %v2204 = vmul.f32 %v2140, 0.7978846
      %v2205 = vmul.f32 %v2141, 0.7978846
      %v2206 = vtanh.pop %v2142
      %v2207 = vtanh.pop %v2143
      %v2208 = vtanh.pop %v2144
      %v2209 = vtanh.pop %v2145
      %v2210 = vtanh.pop %v2146
      %v2211 = vtanh.pop %v2147
      %v2212 = vtanh.pop %v2148
      %v2213 = vtanh.pop %v2149
      %v2214 = vtanh.pop %v2150
      %v2215 = vtanh.pop %v2151
      %v2216 = vtanh.pop %v2152
      %v2217 = vtanh.pop %v2153
      %v2218 = vtanh.pop %v2154
      %v2219 = vtanh.pop %v2155
      %v2220 = vtanh.pop %v2156
      %v2221 = vtanh.pop %v2157
      %v2222 = vtanh.pop %v2158
      %v2223 = vtanh.pop %v2159
      %v2224 = vtanh.pop %v2160
      %v2225 = vtanh.pop %v2161
      %v2226 = vtanh.pop %v2162
      %v2227 = vtanh.pop %v2163
      %v2228 = vtanh.pop %v2164
      %v2229 = vtanh.pop %v2165
      %v2230 = vtanh.pop %v2166
      %v2231 = vtanh.pop %v2167
      %v2232 = vtanh.pop %v2168
      %v2233 = vtanh.pop %v2169
      %v2234 = vtanh.pop %v2170
      %v2235 = vtanh.pop %v2171
      %v2236 = vtanh.pop %v2172
      %v2237 = vtanh.pop %v2173
      %v2238 = vtanh.pop %v2174
      %v2239 = vtanh.pop %v2175
      %v2240 = vtanh.pop %v2176
      %v2241 = vtanh.pop %v2177
      %v2242 = vtanh.pop %v2178
      %v2243 = vtanh.pop %v2179
      %v2244 = vtanh.pop %v2180
      %v2245 = vtanh.pop %v2181
      %v2246 = vtanh.pop %v2182
      %v2247 = vtanh.pop %v2183
      %v2248 = vtanh.pop %v2184
      %v2249 = vtanh.pop %v2185
      %v2250 = vtanh.pop %v2186
      %v2251 = vtanh.pop %v2187
      %v2252 = vtanh.pop %v2188
      %v2253 = vtanh.pop %v2189
      %v2254 = vtanh.pop %v2190
      %v2255 = vtanh.pop %v2191
      %v2256 = vtanh.pop %v2192
      %v2257 = vtanh.pop %v2193
      %v2258 = vtanh.pop %v2194
      %v2259 = vtanh.pop %v2195
      %v2260 = vtanh.pop %v2196
      %v2261 = vtanh.pop %v2197
      %v2262 = vtanh.pop %v2198
      %v2263 = vtanh.pop %v2199
      %v2264 = vtanh.pop %v2200
      %v2265 = vtanh.pop %v2201
      %v2266 = vtanh.pop %v2202
      %v2267 = vtanh.pop %v2203
      %v2268 = vtanh.pop %v2204
      %v2269 = vtanh.pop %v2205
      %v2270 = vadd.f32 %v2206, 1.0
      %v2271 = vadd.f32 %v2207, 1.0
      %v2272 = vadd.f32 %v2208, 1.0
      %v2273 = vadd.f32 %v2209, 1.0
      %v2274 = vadd.f32 %v2210, 1.0
      %v2275 = vadd.f32 %v2211, 1.0
      %v2276 = vadd.f32 %v2212, 1.0
      %v2277 = vadd.f32 %v2213, 1.0
      %v2278 = vadd.f32 %v2214, 1.0
      %v2279 = vadd.f32 %v2215, 1.0
      %v2280 = vadd.f32 %v2216, 1.0
      %v2281 = vadd.f32 %v2217, 1.0
      %v2282 = vadd.f32 %v2218, 1.0
      %v2283 = vadd.f32 %v2219, 1.0
      %v2284 = vadd.f32 %v2220, 1.0
      %v2285 = vadd.f32 %v2221, 1.0
      %v2286 = vadd.f32 %v2222, 1.0
      %v2287 = vadd.f32 %v2223, 1.0
      %v2288 = vadd.f32 %v2224, 1.0
      %v2289 = vadd.f32 %v2225, 1.0
      %v2290 = vadd.f32 %v2226, 1.0
      %v2291 = vadd.f32 %v2227, 1.0
      %v2292 = vadd.f32 %v2228, 1.0
      %v2293 = vadd.f32 %v2229, 1.0
      %v2294 = vadd.f32 %v2230, 1.0
      %v2295 = vadd.f32 %v2231, 1.0
      %v2296 = vadd.f32 %v2232, 1.0
      %v2297 = vadd.f32 %v2233, 1.0
      %v2298 = vadd.f32 %v2234, 1.0
      %v2299 = vadd.f32 %v2235, 1.0
      %v2300 = vadd.f32 %v2236, 1.0
      %v2301 = vadd.f32 %v2237, 1.0
      %v2302 = vadd.f32 %v2238, 1.0
      %v2303 = vadd.f32 %v2239, 1.0
      %v2304 = vadd.f32 %v2240, 1.0
      %v2305 = vadd.f32 %v2241, 1.0
      %v2306 = vadd.f32 %v2242, 1.0
      %v2307 = vadd.f32 %v2243, 1.0
      %v2308 = vadd.f32 %v2244, 1.0
      %v2309 = vadd.f32 %v2245, 1.0
      %v2310 = vadd.f32 %v2246, 1.0
      %v2311 = vadd.f32 %v2247, 1.0
      %v2312 = vadd.f32 %v2248, 1.0
      %v2313 = vadd.f32 %v2249, 1.0
      %v2314 = vadd.f32 %v2250, 1.0
      %v2315 = vadd.f32 %v2251, 1.0
      %v2316 = vadd.f32 %v2252, 1.0
      %v2317 = vadd.f32 %v2253, 1.0
      %v2318 = vadd.f32 %v2254, 1.0
      %v2319 = vadd.f32 %v2255, 1.0
      %v2320 = vadd.f32 %v2256, 1.0
      %v2321 = vadd.f32 %v2257, 1.0
      %v2322 = vadd.f32 %v2258, 1.0
      %v2323 = vadd.f32 %v2259, 1.0
      %v2324 = vadd.f32 %v2260, 1.0
      %v2325 = vadd.f32 %v2261, 1.0
      %v2326 = vadd.f32 %v2262, 1.0
      %v2327 = vadd.f32 %v2263, 1.0
      %v2328 = vadd.f32 %v2264, 1.0
      %v2329 = vadd.f32 %v2265, 1.0
      %v2330 = vadd.f32 %v2266, 1.0
      %v2331 = vadd.f32 %v2267, 1.0
      %v2332 = vadd.f32 %v2268, 1.0
      %v2333 = vadd.f32 %v2269, 1.0
      %v2334 = vmul.f32 %v1822, %v2270
      %v2335 = vmul.f32 %v1823, %v2271
      %v2336 = vmul.f32 %v1824, %v2272
      %v2337 = vmul.f32 %v1825, %v2273
      %v2338 = vmul.f32 %v1826, %v2274
      %v2339 = vmul.f32 %v1827, %v2275
      %v2340 = vmul.f32 %v1828, %v2276
      %v2341 = vmul.f32 %v1829, %v2277
      %v2342 = vmul.f32 %v1830, %v2278
      %v2343 = vmul.f32 %v1831, %v2279
      %v2344 = vmul.f32 %v1832, %v2280
      %v2345 = vmul.f32 %v1833, %v2281
      %v2346 = vmul.f32 %v1834, %v2282
      %v2347 = vmul.f32 %v1835, %v2283
      %v2348 = vmul.f32 %v1836, %v2284
      %v2349 = vmul.f32 %v1837, %v2285
      %v2350 = vmul.f32 %v1838, %v2286
      %v2351 = vmul.f32 %v1839, %v2287
      %v2352 = vmul.f32 %v1840, %v2288
      %v2353 = vmul.f32 %v1841, %v2289
      %v2354 = vmul.f32 %v1842, %v2290
      %v2355 = vmul.f32 %v1843, %v2291
      %v2356 = vmul.f32 %v1844, %v2292
      %v2357 = vmul.f32 %v1845, %v2293
      %v2358 = vmul.f32 %v1846, %v2294
      %v2359 = vmul.f32 %v1847, %v2295
      %v2360 = vmul.f32 %v1848, %v2296
      %v2361 = vmul.f32 %v1849, %v2297
      %v2362 = vmul.f32 %v1850, %v2298
      %v2363 = vmul.f32 %v1851, %v2299
      %v2364 = vmul.f32 %v1852, %v2300
      %v2365 = vmul.f32 %v1853, %v2301
      %v2366 = vmul.f32 %v1854, %v2302
      %v2367 = vmul.f32 %v1855, %v2303
      %v2368 = vmul.f32 %v1856, %v2304
      %v2369 = vmul.f32 %v1857, %v2305
      %v2370 = vmul.f32 %v1858, %v2306
      %v2371 = vmul.f32 %v1859, %v2307
      %v2372 = vmul.f32 %v1860, %v2308
      %v2373 = vmul.f32 %v1861, %v2309
      %v2374 = vmul.f32 %v1862, %v2310
      %v2375 = vmul.f32 %v1863, %v2311
      %v2376 = vmul.f32 %v1864, %v2312
      %v2377 = vmul.f32 %v1865, %v2313
      %v2378 = vmul.f32 %v1866, %v2314
      %v2379 = vmul.f32 %v1867, %v2315
      %v2380 = vmul.f32 %v1868, %v2316
      %v2381 = vmul.f32 %v1869, %v2317
      %v2382 = vmul.f32 %v1870, %v2318
      %v2383 = vmul.f32 %v1871, %v2319
      %v2384 = vmul.f32 %v1872, %v2320
      %v2385 = vmul.f32 %v1873, %v2321
      %v2386 = vmul.f32 %v1874, %v2322
      %v2387 = vmul.f32 %v1875, %v2323
      %v2388 = vmul.f32 %v1876, %v2324
      %v2389 = vmul.f32 %v1877, %v2325
      %v2390 = vmul.f32 %v1878, %v2326
      %v2391 = vmul.f32 %v1879, %v2327
      %v2392 = vmul.f32 %v1880, %v2328
      %v2393 = vmul.f32 %v1881, %v2329
      %v2394 = vmul.f32 %v1882, %v2330
      %v2395 = vmul.f32 %v1883, %v2331
      %v2396 = vmul.f32 %v1884, %v2332
      %v2397 = vmul.f32 %v1885, %v2333
      %v2398 = vld [vmem:[%s6] sm:$0xff]
      %v2399 = vld [vmem:[%s6 + $0x8] sm:$0xff]
      %v2400 = vld [vmem:[%s6 + $0x10] sm:$0xff]
      %v2401 = vld [vmem:[%s6 + $0x18] sm:$0xff]
      %v2402 = vld [vmem:[%s6 + $0x20] sm:$0xff]
      %v2403 = vld [vmem:[%s6 + $0x28] sm:$0xff]
      %v2404 = vld [vmem:[%s6 + $0x30] sm:$0xff]
      %v2405 = vld [vmem:[%s6 + $0x38] sm:$0xff]
      %v2406 = vld [vmem:[%s6 + $0x40] sm:$0xff]
      %v2407 = vld [vmem:[%s6 + $0x48] sm:$0xff]
      %v2408 = vld [vmem:[%s6 + $0x50] sm:$0xff]
      %v2409 = vld [vmem:[%s6 + $0x58] sm:$0xff]
      %v2410 = vld [vmem:[%s6 + $0x60] sm:$0xff]
      %v2411 = vld [vmem:[%s6 + $0x68] sm:$0xff]
      %v2412 = vld [vmem:[%s6 + $0x70] sm:$0xff]
      %v2413 = vld [vmem:[%s6 + $0x78] sm:$0xff]
      %v2414 = vld [vmem:[%s6 + $0x80] sm:$0xff]
      %v2415 = vld [vmem:[%s6 + $0x88] sm:$0xff]
      %v2416 = vld [vmem:[%s6 + $0x90] sm:$0xff]
      %v2417 = vld [vmem:[%s6 + $0x98] sm:$0xff]
      %v2418 = vld [vmem:[%s6 + $0xa0] sm:$0xff]
      %v2419 = vld [vmem:[%s6 + $0xa8] sm:$0xff]
      %v2420 = vld [vmem:[%s6 + $0xb0] sm:$0xff]
      %v2421 = vld [vmem:[%s6 + $0xb8] sm:$0xff]
      %v2422 = vld [vmem:[%s6 + $0xc0] sm:$0xff]
      %v2423 = vld [vmem:[%s6 + $0xc8] sm:$0xff]
      %v2424 = vld [vmem:[%s6 + $0xd0] sm:$0xff]
      %v2425 = vld [vmem:[%s6 + $0xd8] sm:$0xff]
      %v2426 = vld [vmem:[%s6 + $0xe0] sm:$0xff]
      %v2427 = vld [vmem:[%s6 + $0xe8] sm:$0xff]
      %v2428 = vld [vmem:[%s6 + $0xf0] sm:$0xff]
      %v2429 = vld [vmem:[%s6 + $0xf8] sm:$0xff]
      %v2430 = vld [vmem:[%s6 + $0x100] sm:$0xff]
      %v2431 = vld [vmem:[%s6 + $0x108] sm:$0xff]
      %v2432 = vld [vmem:[%s6 + $0x110] sm:$0xff]
      %v2433 = vld [vmem:[%s6 + $0x118] sm:$0xff]
      %v2434 = vld [vmem:[%s6 + $0x120] sm:$0xff]
      %v2435 = vld [vmem:[%s6 + $0x128] sm:$0xff]
      %v2436 = vld [vmem:[%s6 + $0x130] sm:$0xff]
      %v2437 = vld [vmem:[%s6 + $0x138] sm:$0xff]
      %v2438 = vld [vmem:[%s6 + $0x140] sm:$0xff]
      %v2439 = vld [vmem:[%s6 + $0x148] sm:$0xff]
      %v2440 = vld [vmem:[%s6 + $0x150] sm:$0xff]
      %v2441 = vld [vmem:[%s6 + $0x158] sm:$0xff]
      %v2442 = vld [vmem:[%s6 + $0x160] sm:$0xff]
      %v2443 = vld [vmem:[%s6 + $0x168] sm:$0xff]
      %v2444 = vld [vmem:[%s6 + $0x170] sm:$0xff]
      %v2445 = vld [vmem:[%s6 + $0x178] sm:$0xff]
      %v2446 = vld [vmem:[%s6 + $0x180] sm:$0xff]
      %v2447 = vld [vmem:[%s6 + $0x188] sm:$0xff]
      %v2448 = vld [vmem:[%s6 + $0x190] sm:$0xff]
      %v2449 = vld [vmem:[%s6 + $0x198] sm:$0xff]
      %v2450 = vld [vmem:[%s6 + $0x1a0] sm:$0xff]
      %v2451 = vld [vmem:[%s6 + $0x1a8] sm:$0xff]
      %v2452 = vld [vmem:[%s6 + $0x1b0] sm:$0xff]
      %v2453 = vld [vmem:[%s6 + $0x1b8] sm:$0xff]
      %v2454 = vld [vmem:[%s6 + $0x1c0] sm:$0xff]
      %v2455 = vld [vmem:[%s6 + $0x1c8] sm:$0xff]
      %v2456 = vld [vmem:[%s6 + $0x1d0] sm:$0xff]
      %v2457 = vld [vmem:[%s6 + $0x1d8] sm:$0xff]
      %v2458 = vld [vmem:[%s6 + $0x1e0] sm:$0xff]
      %v2459 = vld [vmem:[%s6 + $0x1e8] sm:$0xff]
      %v2460 = vld [vmem:[%s6 + $0x1f0] sm:$0xff]
      %v2461 = vld [vmem:[%s6 + $0x1f8] sm:$0xff]
      %v2462 = vld [vmem:[%s7] sm:$0x3]
      %v2464 = vlaneseq
      %v2465 = vshrl.u32 %v2464, 7
      %v2466 = vsub.s32 0, %v2465
      %v2467 = vrot.slane %v2462, %v2466
      %v2468 = vlaneseq
      %v2469 = vshrl.u32 %v2468, 7
      %v2470 = vsub.s32 1, %v2469
      %v2471 = vrot.slane %v2462, %v2470
      %2474 = vmatprep.subr.mxu0 %v2429
      %2475 = vmatpush1.msra.mxu0 %v2428
      %2476 = vmatprep.subr.mxu0 %v2427
      %2477 = vmatpush1.msra.mxu0 %v2426
      %2478 = vmatprep.subr.mxu0 %v2425
      %2479 = vmatpush1.msra.mxu0 %v2424
      %2480 = vmatprep.subr.mxu0 %v2423
      %2481 = vmatpush1.msra.mxu0 %v2422
      %2482 = vmatprep.subr.mxu0 %v2421
      %2483 = vmatpush1.msra.mxu0 %v2420
      %2484 = vmatprep.subr.mxu0 %v2419
      %2485 = vmatpush1.msra.mxu0 %v2418
      %2486 = vmatprep.subr.mxu0 %v2417
      %2487 = vmatpush1.msra.mxu0 %v2416
      %2488 = vmatprep.subr.mxu0 %v2415
      %2489 = vmatpush1.msra.mxu0 %v2414
      %2490 = vmatprep.subr.mxu0 %v2413
      %2491 = vmatpush1.msra.mxu0 %v2412
      %2492 = vmatprep.subr.mxu0 %v2411
      %2493 = vmatpush1.msra.mxu0 %v2410
      %2494 = vmatprep.subr.mxu0 %v2409
      %2495 = vmatpush1.msra.mxu0 %v2408
      %2496 = vmatprep.subr.mxu0 %v2407
      %2497 = vmatpush1.msra.mxu0 %v2406
      %2498 = vmatprep.subr.mxu0 %v2405
      %2499 = vmatpush1.msra.mxu0 %v2404
      %2500 = vmatprep.subr.mxu0 %v2403
      %2501 = vmatpush1.msra.mxu0 %v2402
      %2502 = vmatprep.subr.mxu0 %v2401
      %2503 = vmatpush1.msra.mxu0 %v2400
      %2504 = vmatprep.subr.mxu0 %v2399
      %2505 = vmatpush1.msra.mxu0 %v2398
      %2506 = vmatprep.subr.mxu0 %v2461
      %2507 = vmatpush2.msra.mxu0 %v2460
      %2508 = vmatprep.subr.mxu0 %v2459
      %2509 = vmatpush2.msra.mxu0 %v2458
      %2510 = vmatprep.subr.mxu0 %v2457
      %2511 = vmatpush2.msra.mxu0 %v2456
      %2512 = vmatprep.subr.mxu0 %v2455
      %2513 = vmatpush2.msra.mxu0 %v2454
      %2514 = vmatprep.subr.mxu0 %v2453
      %2515 = vmatpush2.msra.mxu0 %v2452
      %2516 = vmatprep.subr.mxu0 %v2451
      %2517 = vmatpush2.msra.mxu0 %v2450
      %2518 = vmatprep.subr.mxu0 %v2449
      %2519 = vmatpush2.msra.mxu0 %v2448
      %2520 = vmatprep.subr.mxu0 %v2447
      %2521 = vmatpush2.msra.mxu0 %v2446
      %2522 = vmatprep.subr.mxu0 %v2445
      %2523 = vmatpush2.msra.mxu0 %v2444
      %2524 = vmatprep.subr.mxu0 %v2443
      %2525 = vmatpush2.msra.mxu0 %v2442
      %2526 = vmatprep.subr.mxu0 %v2441
      %2527 = vmatpush2.msra.mxu0 %v2440
      %2528 = vmatprep.subr.mxu0 %v2439
      %2529 = vmatpush2.msra.mxu0 %v2438
      %2530 = vmatprep.subr.mxu0 %v2437
      %2531 = vmatpush2.msra.mxu0 %v2436
      %2532 = vmatprep.subr.mxu0 %v2435
      %2533 = vmatpush2.msra.mxu0 %v2434
      %2534 = vmatprep.subr.mxu0 %v2433
      %2535 = vmatpush2.msra.mxu0 %v2432
      %2536 = vmatprep.subr.mxu0 %v2431
      %2537 = vmatpush2.msra.mxu0 %v2430
      %2538 = vmatprep.mubr.f32.mxu0 %v2335
      %2539 = vmatmul.mubr.f32.gmra.mxu0 %v2334
      %v2540 = vpop.f32.mrf.mxu0
      %v2541 = vadd.f32 %v2467, %v2540
      %v2542 = vpop.f32.mrf.mxu0
      %v2543 = vadd.f32 %v2471, %v2542
      %2544 = vmatprep.mubr.f32.mxu0 %v2337
      %2545 = vmatmul.mubr.f32.gmra.mxu0 %v2336
      %v2546 = vpop.f32.mrf.mxu0
      %v2547 = vadd.f32 %v2467, %v2546
      %v2548 = vpop.f32.mrf.mxu0
      %v2549 = vadd.f32 %v2471, %v2548
      %2550 = vmatprep.mubr.f32.mxu0 %v2339
      %2551 = vmatmul.mubr.f32.gmra.mxu0 %v2338
      %v2552 = vpop.f32.mrf.mxu0
      %v2553 = vadd.f32 %v2467, %v2552
      %v2554 = vpop.f32.mrf.mxu0
      %v2555 = vadd.f32 %v2471, %v2554
      %2556 = vmatprep.mubr.f32.mxu0 %v2341
      %2557 = vmatmul.mubr.f32.gmra.mxu0 %v2340
      %v2558 = vpop.f32.mrf.mxu0
      %v2559 = vadd.f32 %v2467, %v2558
      %v2560 = vpop.f32.mrf.mxu0
      %v2561 = vadd.f32 %v2471, %v2560
      %2562 = vmatprep.mubr.f32.mxu0 %v2343
      %2563 = vmatmul.mubr.f32.gmra.mxu0 %v2342
      %v2564 = vpop.f32.mrf.mxu0
      %v2565 = vadd.f32 %v2467, %v2564
      %v2566 = vpop.f32.mrf.mxu0
      %v2567 = vadd.f32 %v2471, %v2566
      %2568 = vmatprep.mubr.f32.mxu0 %v2345
      %2569 = vmatmul.mubr.f32.gmra.mxu0 %v2344
      %v2570 = vpop.f32.mrf.mxu0
      %v2571 = vadd.f32 %v2467, %v2570
      %v2572 = vpop.f32.mrf.mxu0
      %v2573 = vadd.f32 %v2471, %v2572
      %2574 = vmatprep.mubr.f32.mxu0 %v2347
      %2575 = vmatmul.mubr.f32.gmra.mxu0 %v2346
      %v2576 = vpop.f32.mrf.mxu0
      %v2577 = vadd.f32 %v2467, %v2576
      %v2578 = vpop.f32.mrf.mxu0
      %v2579 = vadd.f32 %v2471, %v2578
      %2580 = vmatprep.mubr.f32.mxu0 %v2349
      %2581 = vmatmul.mubr.f32.gmra.mxu0 %v2348
      %v2582 = vpop.f32.mrf.mxu0
      %v2583 = vadd.f32 %v2467, %v2582
      %v2584 = vpop.f32.mrf.mxu0
      %v2585 = vadd.f32 %v2471, %v2584
      %2586 = vmatprep.mubr.f32.mxu0 %v2351
      %2587 = vmatmul.mubr.f32.gmra.mxu0 %v2350
      %v2588 = vpop.f32.mrf.mxu0
      %v2589 = vadd.f32 %v2467, %v2588
      %v2590 = vpop.f32.mrf.mxu0
      %v2591 = vadd.f32 %v2471, %v2590
      %2592 = vmatprep.mubr.f32.mxu0 %v2353
      %2593 = vmatmul.mubr.f32.gmra.mxu0 %v2352
      %v2594 = vpop.f32.mrf.mxu0
      %v2595 = vadd.f32 %v2467, %v2594
      %v2596 = vpop.f32.mrf.mxu0
      %v2597 = vadd.f32 %v2471, %v2596
      %2598 = vmatprep.mubr.f32.mxu0 %v2355
      %2599 = vmatmul.mubr.f32.gmra.mxu0 %v2354
      %v2600 = vpop.f32.mrf.mxu0
      %v2601 = vadd.f32 %v2467, %v2600
      %v2602 = vpop.f32.mrf.mxu0
      %v2603 = vadd.f32 %v2471, %v2602
      %2604 = vmatprep.mubr.f32.mxu0 %v2357
      %2605 = vmatmul.mubr.f32.gmra.mxu0 %v2356
      %v2606 = vpop.f32.mrf.mxu0
      %v2607 = vadd.f32 %v2467, %v2606
      %v2608 = vpop.f32.mrf.mxu0
      %v2609 = vadd.f32 %v2471, %v2608
      %2610 = vmatprep.mubr.f32.mxu0 %v2359
      %2611 = vmatmul.mubr.f32.gmra.mxu0 %v2358
      %v2612 = vpop.f32.mrf.mxu0
      %v2613 = vadd.f32 %v2467, %v2612
      %v2614 = vpop.f32.mrf.mxu0
      %v2615 = vadd.f32 %v2471, %v2614
      %2616 = vmatprep.mubr.f32.mxu0 %v2361
      %2617 = vmatmul.mubr.f32.gmra.mxu0 %v2360
      %v2618 = vpop.f32.mrf.mxu0
      %v2619 = vadd.f32 %v2467, %v2618
      %v2620 = vpop.f32.mrf.mxu0
      %v2621 = vadd.f32 %v2471, %v2620
      %2622 = vmatprep.mubr.f32.mxu0 %v2363
      %2623 = vmatmul.mubr.f32.gmra.mxu0 %v2362
      %v2624 = vpop.f32.mrf.mxu0
      %v2625 = vadd.f32 %v2467, %v2624
      %v2626 = vpop.f32.mrf.mxu0
      %v2627 = vadd.f32 %v2471, %v2626
      %2628 = vmatprep.mubr.f32.mxu0 %v2365
      %2629 = vmatmul.mubr.f32.gmra.mxu0 %v2364
      %v2630 = vpop.f32.mrf.mxu0
      %v2631 = vadd.f32 %v2467, %v2630
      %v2632 = vpop.f32.mrf.mxu0
      %v2633 = vadd.f32 %v2471, %v2632
      %2634 = vmatprep.mubr.f32.mxu0 %v2367
      %2635 = vmatmul.mubr.f32.gmra.mxu0 %v2366
      %v2636 = vpop.f32.mrf.mxu0
      %v2637 = vadd.f32 %v2467, %v2636
      %v2638 = vpop.f32.mrf.mxu0
      %v2639 = vadd.f32 %v2471, %v2638
      %2640 = vmatprep.mubr.f32.mxu0 %v2369
      %2641 = vmatmul.mubr.f32.gmra.mxu0 %v2368
      %v2642 = vpop.f32.mrf.mxu0
      %v2643 = vadd.f32 %v2467, %v2642
      %v2644 = vpop.f32.mrf.mxu0
      %v2645 = vadd.f32 %v2471, %v2644
      %2646 = vmatprep.mubr.f32.mxu0 %v2371
      %2647 = vmatmul.mubr.f32.gmra.mxu0 %v2370
      %v2648 = vpop.f32.mrf.mxu0
      %v2649 = vadd.f32 %v2467, %v2648
      %v2650 = vpop.f32.mrf.mxu0
      %v2651 = vadd.f32 %v2471, %v2650
      %2652 = vmatprep.mubr.f32.mxu0 %v2373
      %2653 = vmatmul.mubr.f32.gmra.mxu0 %v2372
      %v2654 = vpop.f32.mrf.mxu0
      %v2655 = vadd.f32 %v2467, %v2654
      %v2656 = vpop.f32.mrf.mxu0
      %v2657 = vadd.f32 %v2471, %v2656
      %2658 = vmatprep.mubr.f32.mxu0 %v2375
      %2659 = vmatmul.mubr.f32.gmra.mxu0 %v2374
      %v2660 = vpop.f32.mrf.mxu0
      %v2661 = vadd.f32 %v2467, %v2660
      %v2662 = vpop.f32.mrf.mxu0
      %v2663 = vadd.f32 %v2471, %v2662
      %2664 = vmatprep.mubr.f32.mxu0 %v2377
      %2665 = vmatmul.mubr.f32.gmra.mxu0 %v2376
      %v2666 = vpop.f32.mrf.mxu0
      %v2667 = vadd.f32 %v2467, %v2666
      %v2668 = vpop.f32.mrf.mxu0
      %v2669 = vadd.f32 %v2471, %v2668
      %2670 = vmatprep.mubr.f32.mxu0 %v2379
      %2671 = vmatmul.mubr.f32.gmra.mxu0 %v2378
      %v2672 = vpop.f32.mrf.mxu0
      %v2673 = vadd.f32 %v2467, %v2672
      %v2674 = vpop.f32.mrf.mxu0
      %v2675 = vadd.f32 %v2471, %v2674
      %2676 = vmatprep.mubr.f32.mxu0 %v2381
      %2677 = vmatmul.mubr.f32.gmra.mxu0 %v2380
      %v2678 = vpop.f32.mrf.mxu0
      %v2679 = vadd.f32 %v2467, %v2678
      %v2680 = vpop.f32.mrf.mxu0
      %v2681 = vadd.f32 %v2471, %v2680
      %2682 = vmatprep.mubr.f32.mxu0 %v2383
      %2683 = vmatmul.mubr.f32.gmra.mxu0 %v2382
      %v2684 = vpop.f32.mrf.mxu0
      %v2685 = vadd.f32 %v2467, %v2684
      %v2686 = vpop.f32.mrf.mxu0
      %v2687 = vadd.f32 %v2471, %v2686
      %2688 = vmatprep.mubr.f32.mxu0 %v2385
      %2689 = vmatmul.mubr.f32.gmra.mxu0 %v2384
      %v2690 = vpop.f32.mrf.mxu0
      %v2691 = vadd.f32 %v2467, %v2690
      %v2692 = vpop.f32.mrf.mxu0
      %v2693 = vadd.f32 %v2471, %v2692
      %2694 = vmatprep.mubr.f32.mxu0 %v2387
      %2695 = vmatmul.mubr.f32.gmra.mxu0 %v2386
      %v2696 = vpop.f32.mrf.mxu0
      %v2697 = vadd.f32 %v2467, %v2696
      %v2698 = vpop.f32.mrf.mxu0
      %v2699 = vadd.f32 %v2471, %v2698
      %2700 = vmatprep.mubr.f32.mxu0 %v2389
      %2701 = vmatmul.mubr.f32.gmra.mxu0 %v2388
      %v2702 = vpop.f32.mrf.mxu0
      %v2703 = vadd.f32 %v2467, %v2702
      %v2704 = vpop.f32.mrf.mxu0
      %v2705 = vadd.f32 %v2471, %v2704
      %2706 = vmatprep.mubr.f32.mxu0 %v2391
      %2707 = vmatmul.mubr.f32.gmra.mxu0 %v2390
      %v2708 = vpop.f32.mrf.mxu0
      %v2709 = vadd.f32 %v2467, %v2708
      %v2710 = vpop.f32.mrf.mxu0
      %v2711 = vadd.f32 %v2471, %v2710
      %2712 = vmatprep.mubr.f32.mxu0 %v2393
      %2713 = vmatmul.mubr.f32.gmra.mxu0 %v2392
      %v2714 = vpop.f32.mrf.mxu0
      %v2715 = vadd.f32 %v2467, %v2714
      %v2716 = vpop.f32.mrf.mxu0
      %v2717 = vadd.f32 %v2471, %v2716
      %2718 = vmatprep.mubr.f32.mxu0 %v2395
      %2719 = vmatmul.mubr.f32.gmra.mxu0 %v2394
      %v2720 = vpop.f32.mrf.mxu0
      %v2721 = vadd.f32 %v2467, %v2720
      %v2722 = vpop.f32.mrf.mxu0
      %v2723 = vadd.f32 %v2471, %v2722
      %2724 = vmatprep.mubr.f32.mxu0 %v2397
      %2725 = vmatmul.mubr.f32.gmra.mxu0 %v2396
      %v2726 = vpop.f32.mrf.mxu0
      %v2727 = vadd.f32 %v2467, %v2726
      %v2728 = vpop.f32.mrf.mxu0
      %v2729 = vadd.f32 %v2471, %v2728
      %2730 = vdwg.mxu0
      %v2731 = vmul.f32 %v2541, 0.5
      %v2732 = vmul.f32 %v2543, 0.5
      %v2733 = vmul.f32 %v2547, 0.5
      %v2734 = vmul.f32 %v2549, 0.5
      %v2735 = vmul.f32 %v2553, 0.5
      %v2736 = vmul.f32 %v2555, 0.5
      %v2737 = vmul.f32 %v2559, 0.5
      %v2738 = vmul.f32 %v2561, 0.5
      %v2739 = vmul.f32 %v2565, 0.5
      %v2740 = vmul.f32 %v2567, 0.5
      %v2741 = vmul.f32 %v2571, 0.5
      %v2742 = vmul.f32 %v2573, 0.5
      %v2743 = vmul.f32 %v2577, 0.5
      %v2744 = vmul.f32 %v2579, 0.5
      %v2745 = vmul.f32 %v2583, 0.5
      %v2746 = vmul.f32 %v2585, 0.5
      %v2747 = vmul.f32 %v2589, 0.5
      %v2748 = vmul.f32 %v2591, 0.5
      %v2749 = vmul.f32 %v2595, 0.5
      %v2750 = vmul.f32 %v2597, 0.5
      %v2751 = vmul.f32 %v2601, 0.5
      %v2752 = vmul.f32 %v2603, 0.5
      %v2753 = vmul.f32 %v2607, 0.5
      %v2754 = vmul.f32 %v2609, 0.5
      %v2755 = vmul.f32 %v2613, 0.5
      %v2756 = vmul.f32 %v2615, 0.5
      %v2757 = vmul.f32 %v2619, 0.5
      %v2758 = vmul.f32 %v2621, 0.5
      %v2759 = vmul.f32 %v2625, 0.5
      %v2760 = vmul.f32 %v2627, 0.5
      %v2761 = vmul.f32 %v2631, 0.5
      %v2762 = vmul.f32 %v2633, 0.5
      %v2763 = vmul.f32 %v2637, 0.5
      %v2764 = vmul.f32 %v2639, 0.5
      %v2765 = vmul.f32 %v2643, 0.5
      %v2766 = vmul.f32 %v2645, 0.5
      %v2767 = vmul.f32 %v2649, 0.5
      %v2768 = vmul.f32 %v2651, 0.5
      %v2769 = vmul.f32 %v2655, 0.5
      %v2770 = vmul.f32 %v2657, 0.5
      %v2771 = vmul.f32 %v2661, 0.5
      %v2772 = vmul.f32 %v2663, 0.5
      %v2773 = vmul.f32 %v2667, 0.5
      %v2774 = vmul.f32 %v2669, 0.5
      %v2775 = vmul.f32 %v2673, 0.5
      %v2776 = vmul.f32 %v2675, 0.5
      %v2777 = vmul.f32 %v2679, 0.5
      %v2778 = vmul.f32 %v2681, 0.5
      %v2779 = vmul.f32 %v2685, 0.5
      %v2780 = vmul.f32 %v2687, 0.5
      %v2781 = vmul.f32 %v2691, 0.5
      %v2782 = vmul.f32 %v2693, 0.5
      %v2783 = vmul.f32 %v2697, 0.5
      %v2784 = vmul.f32 %v2699, 0.5
      %v2785 = vmul.f32 %v2703, 0.5
      %v2786 = vmul.f32 %v2705, 0.5
      %v2787 = vmul.f32 %v2709, 0.5
      %v2788 = vmul.f32 %v2711, 0.5
      %v2789 = vmul.f32 %v2715, 0.5
      %v2790 = vmul.f32 %v2717, 0.5
      %v2791 = vmul.f32 %v2721, 0.5
      %v2792 = vmul.f32 %v2723, 0.5
      %v2793 = vmul.f32 %v2727, 0.5
      %v2794 = vmul.f32 %v2729, 0.5
      %v2795 = vmul.f32 %v2541, 0.044715
      %v2796 = vmul.f32 %v2543, 0.044715
      %v2797 = vmul.f32 %v2547, 0.044715
      %v2798 = vmul.f32 %v2549, 0.044715
      %v2799 = vmul.f32 %v2553, 0.044715
      %v2800 = vmul.f32 %v2555, 0.044715
      %v2801 = vmul.f32 %v2559, 0.044715
      %v2802 = vmul.f32 %v2561, 0.044715
      %v2803 = vmul.f32 %v2565, 0.044715
      %v2804 = vmul.f32 %v2567, 0.044715
      %v2805 = vmul.f32 %v2571, 0.044715
      %v2806 = vmul.f32 %v2573, 0.044715
      %v2807 = vmul.f32 %v2577, 0.044715
      %v2808 = vmul.f32 %v2579, 0.044715
      %v2809 = vmul.f32 %v2583, 0.044715
      %v2810 = vmul.f32 %v2585, 0.044715
      %v2811 = vmul.f32 %v2589, 0.044715
      %v2812 = vmul.f32 %v2591, 0.044715
      %v2813 = vmul.f32 %v2595, 0.044715
      %v2814 = vmul.f32 %v2597, 0.044715
      %v2815 = vmul.f32 %v2601, 0.044715
      %v2816 = vmul.f32 %v2603, 0.044715
      %v2817 = vmul.f32 %v2607, 0.044715
      %v2818 = vmul.f32 %v2609, 0.044715
      %v2819 = vmul.f32 %v2613, 0.044715
      %v2820 = vmul.f32 %v2615, 0.044715
      %v2821 = vmul.f32 %v2619, 0.044715
      %v2822 = vmul.f32 %v2621, 0.044715
      %v2823 = vmul.f32 %v2625, 0.044715
      %v2824 = vmul.f32 %v2627, 0.044715
      %v2825 = vmul.f32 %v2631, 0.044715
      %v2826 = vmul.f32 %v2633, 0.044715
      %v2827 = vmul.f32 %v2637, 0.044715
      %v2828 = vmul.f32 %v2639, 0.044715
      %v2829 = vmul.f32 %v2643, 0.044715
      %v2830 = vmul.f32 %v2645, 0.044715
      %v2831 = vmul.f32 %v2649, 0.044715
      %v2832 = vmul.f32 %v2651, 0.044715
      %v2833 = vmul.f32 %v2655, 0.044715
      %v2834 = vmul.f32 %v2657, 0.044715
      %v2835 = vmul.f32 %v2661, 0.044715
      %v2836 = vmul.f32 %v2663, 0.044715
      %v2837 = vmul.f32 %v2667, 0.044715
      %v2838 = vmul.f32 %v2669, 0.044715
      %v2839 = vmul.f32 %v2673, 0.044715
      %v2840 = vmul.f32 %v2675, 0.044715
      %v2841 = vmul.f32 %v2679, 0.044715
      %v2842 = vmul.f32 %v2681, 0.044715
      %v2843 = vmul.f32 %v2685, 0.044715
      %v2844 = vmul.f32 %v2687, 0.044715
      %v2845 = vmul.f32 %v2691, 0.044715
      %v2846 = vmul.f32 %v2693, 0.044715
      %v2847 = vmul.f32 %v2697, 0.044715
      %v2848 = vmul.f32 %v2699, 0.044715
      %v2849 = vmul.f32 %v2703, 0.044715
      %v2850 = vmul.f32 %v2705, 0.044715
      %v2851 = vmul.f32 %v2709, 0.044715
      %v2852 = vmul.f32 %v2711, 0.044715
      %v2853 = vmul.f32 %v2715, 0.044715
      %v2854 = vmul.f32 %v2717, 0.044715
      %v2855 = vmul.f32 %v2721, 0.044715
      %v2856 = vmul.f32 %v2723, 0.044715
      %v2857 = vmul.f32 %v2727, 0.044715
      %v2858 = vmul.f32 %v2729, 0.044715
      %v2859 = vmul.f32 %v2795, %v2541
      %v2860 = vmul.f32 %v2796, %v2543
      %v2861 = vmul.f32 %v2797, %v2547
      %v2862 = vmul.f32 %v2798, %v2549
      %v2863 = vmul.f32 %v2799, %v2553
      %v2864 = vmul.f32 %v2800, %v2555
      %v2865 = vmul.f32 %v2801, %v2559
      %v2866 = vmul.f32 %v2802, %v2561
      %v2867 = vmul.f32 %v2803, %v2565
      %v2868 = vmul.f32 %v2804, %v2567
      %v2869 = vmul.f32 %v2805, %v2571
      %v2870 = vmul.f32 %v2806, %v2573
      %v2871 = vmul.f32 %v2807, %v2577
      %v2872 = vmul.f32 %v2808, %v2579
      %v2873 = vmul.f32 %v2809, %v2583
      %v2874 = vmul.f32 %v2810, %v2585
      %v2875 = vmul.f32 %v2811, %v2589
      %v2876 = vmul.f32 %v2812, %v2591
      %v2877 = vmul.f32 %v2813, %v2595
      %v2878 = vmul.f32 %v2814, %v2597
      %v2879 = vmul.f32 %v2815, %v2601
      %v2880 = vmul.f32 %v2816, %v2603
      %v2881 = vmul.f32 %v2817, %v2607
      %v2882 = vmul.f32 %v2818, %v2609
      %v2883 = vmul.f32 %v2819, %v2613
      %v2884 = vmul.f32 %v2820, %v2615
      %v2885 = vmul.f32 %v2821, %v2619
      %v2886 = vmul.f32 %v2822, %v2621
      %v2887 = vmul.f32 %v2823, %v2625
      %v2888 = vmul.f32 %v2824, %v2627
      %v2889 = vmul.f32 %v2825, %v2631
      %v2890 = vmul.f32 %v2826, %v2633
      %v2891 = vmul.f32 %v2827, %v2637
      %v2892 = vmul.f32 %v2828, %v2639
      %v2893 = vmul.f32 %v2829, %v2643
      %v2894 = vmul.f32 %v2830, %v2645
      %v2895 = vmul.f32 %v2831, %v2649
      %v2896 = vmul.f32 %v2832, %v2651
      %v2897 = vmul.f32 %v2833, %v2655
      %v2898 = vmul.f32 %v2834, %v2657
      %v2899 = vmul.f32 %v2835, %v2661
      %v2900 = vmul.f32 %v2836, %v2663
      %v2901 = vmul.f32 %v2837, %v2667
      %v2902 = vmul.f32 %v2838, %v2669
      %v2903 = vmul.f32 %v2839, %v2673
      %v2904 = vmul.f32 %v2840, %v2675
      %v2905 = vmul.f32 %v2841, %v2679
      %v2906 = vmul.f32 %v2842, %v2681
      %v2907 = vmul.f32 %v2843, %v2685
      %v2908 = vmul.f32 %v2844, %v2687
      %v2909 = vmul.f32 %v2845, %v2691
      %v2910 = vmul.f32 %v2846, %v2693
      %v2911 = vmul.f32 %v2847, %v2697
      %v2912 = vmul.f32 %v2848, %v2699
      %v2913 = vmul.f32 %v2849, %v2703
      %v2914 = vmul.f32 %v2850, %v2705
      %v2915 = vmul.f32 %v2851, %v2709
      %v2916 = vmul.f32 %v2852, %v2711
      %v2917 = vmul.f32 %v2853, %v2715
      %v2918 = vmul.f32 %v2854, %v2717
      %v2919 = vmul.f32 %v2855, %v2721
      %v2920 = vmul.f32 %v2856, %v2723
      %v2921 = vmul.f32 %v2857, %v2727
      %v2922 = vmul.f32 %v2858, %v2729
      %v2923 = vmul.f32 %v2859, %v2541
      %v2924 = vmul.f32 %v2860, %v2543
      %v2925 = vmul.f32 %v2861, %v2547
      %v2926 = vmul.f32 %v2862, %v2549
      %v2927 = vmul.f32 %v2863, %v2553
      %v2928 = vmul.f32 %v2864, %v2555
      %v2929 = vmul.f32 %v2865, %v2559
      %v2930 = vmul.f32 %v2866, %v2561
      %v2931 = vmul.f32 %v2867, %v2565
      %v2932 = vmul.f32 %v2868, %v2567
      %v2933 = vmul.f32 %v2869, %v2571
      %v2934 = vmul.f32 %v2870, %v2573
      %v2935 = vmul.f32 %v2871, %v2577
      %v2936 = vmul.f32 %v2872, %v2579
      %v2937 = vmul.f32 %v2873, %v2583
      %v2938 = vmul.f32 %v2874, %v2585
      %v2939 = vmul.f32 %v2875, %v2589
      %v2940 = vmul.f32 %v2876, %v2591
      %v2941 = vmul.f32 %v2877, %v2595
      %v2942 = vmul.f32 %v2878, %v2597
      %v2943 = vmul.f32 %v2879, %v2601
      %v2944 = vmul.f32 %v2880, %v2603
      %v2945 = vmul.f32 %v2881, %v2607
      %v2946 = vmul.f32 %v2882, %v2609
      %v2947 = vmul.f32 %v2883, %v2613
      %v2948 = vmul.f32 %v2884, %v2615
      %v2949 = vmul.f32 %v2885, %v2619
      %v2950 = vmul.f32 %v2886, %v2621
      %v2951 = vmul.f32 %v2887, %v2625
      %v2952 = vmul.f32 %v2888, %v2627
      %v2953 = vmul.f32 %v2889, %v2631
      %v2954 = vmul.f32 %v2890, %v2633
      %v2955 = vmul.f32 %v2891, %v2637
      %v2956 = vmul.f32 %v2892, %v2639
      %v2957 = vmul.f32 %v2893, %v2643
      %v2958 = vmul.f32 %v2894, %v2645
      %v2959 = vmul.f32 %v2895, %v2649
      %v2960 = vmul.f32 %v2896, %v2651
      %v2961 = vmul.f32 %v2897, %v2655
      %v2962 = vmul.f32 %v2898, %v2657
      %v2963 = vmul.f32 %v2899, %v2661
      %v2964 = vmul.f32 %v2900, %v2663
      %v2965 = vmul.f32 %v2901, %v2667
      %v2966 = vmul.f32 %v2902, %v2669
      %v2967 = vmul.f32 %v2903, %v2673
      %v2968 = vmul.f32 %v2904, %v2675
      %v2969 = vmul.f32 %v2905, %v2679
      %v2970 = vmul.f32 %v2906, %v2681
      %v2971 = vmul.f32 %v2907, %v2685
      %v2972 = vmul.f32 %v2908, %v2687
      %v2973 = vmul.f32 %v2909, %v2691
      %v2974 = vmul.f32 %v2910, %v2693
      %v2975 = vmul.f32 %v2911, %v2697
      %v2976 = vmul.f32 %v2912, %v2699
      %v2977 = vmul.f32 %v2913, %v2703
      %v2978 = vmul.f32 %v2914, %v2705
      %v2979 = vmul.f32 %v2915, %v2709
      %v2980 = vmul.f32 %v2916, %v2711
      %v2981 = vmul.f32 %v2917, %v2715
      %v2982 = vmul.f32 %v2918, %v2717
      %v2983 = vmul.f32 %v2919, %v2721
      %v2984 = vmul.f32 %v2920, %v2723
      %v2985 = vmul.f32 %v2921, %v2727
      %v2986 = vmul.f32 %v2922, %v2729
      %v2987 = vadd.f32 %v2541, %v2923
      %v2988 = vadd.f32 %v2543, %v2924
      %v2989 = vadd.f32 %v2547, %v2925
      %v2990 = vadd.f32 %v2549, %v2926
      %v2991 = vadd.f32 %v2553, %v2927
      %v2992 = vadd.f32 %v2555, %v2928
      %v2993 = vadd.f32 %v2559, %v2929
      %v2994 = vadd.f32 %v2561, %v2930
      %v2995 = vadd.f32 %v2565, %v2931
      %v2996 = vadd.f32 %v2567, %v2932
      %v2997 = vadd.f32 %v2571, %v2933
      %v2998 = vadd.f32 %v2573, %v2934
      %v2999 = vadd.f32 %v2577, %v2935
      %v3000 = vadd.f32 %v2579, %v2936
      %v3001 = vadd.f32 %v2583, %v2937
      %v3002 = vadd.f32 %v2585, %v2938
      %v3003 = vadd.f32 %v2589, %v2939
      %v3004 = vadd.f32 %v2591, %v2940
      %v3005 = vadd.f32 %v2595, %v2941
      %v3006 = vadd.f32 %v2597, %v2942
      %v3007 = vadd.f32 %v2601, %v2943
      %v3008 = vadd.f32 %v2603, %v2944
      %v3009 = vadd.f32 %v2607, %v2945
      %v3010 = vadd.f32 %v2609, %v2946
      %v3011 = vadd.f32 %v2613, %v2947
      %v3012 = vadd.f32 %v2615, %v2948
      %v3013 = vadd.f32 %v2619, %v2949
      %v3014 = vadd.f32 %v2621, %v2950
      %v3015 = vadd.f32 %v2625, %v2951
      %v3016 = vadd.f32 %v2627, %v2952
      %v3017 = vadd.f32 %v2631, %v2953
      %v3018 = vadd.f32 %v2633, %v2954
      %v3019 = vadd.f32 %v2637, %v2955
      %v3020 = vadd.f32 %v2639, %v2956
      %v3021 = vadd.f32 %v2643, %v2957
      %v3022 = vadd.f32 %v2645, %v2958
      %v3023 = vadd.f32 %v2649, %v2959
      %v3024 = vadd.f32 %v2651, %v2960
      %v3025 = vadd.f32 %v2655, %v2961
      %v3026 = vadd.f32 %v2657, %v2962
      %v3027 = vadd.f32 %v2661, %v2963
      %v3028 = vadd.f32 %v2663, %v2964
      %v3029 = vadd.f32 %v2667, %v2965
      %v3030 = vadd.f32 %v2669, %v2966
      %v3031 = vadd.f32 %v2673, %v2967
      %v3032 = vadd.f32 %v2675, %v2968
      %v3033 = vadd.f32 %v2679, %v2969
      %v3034 = vadd.f32 %v2681, %v2970
      %v3035 = vadd.f32 %v2685, %v2971
      %v3036 = vadd.f32 %v2687, %v2972
      %v3037 = vadd.f32 %v2691, %v2973
      %v3038 = vadd.f32 %v2693, %v2974
      %v3039 = vadd.f32 %v2697, %v2975
      %v3040 = vadd.f32 %v2699, %v2976
      %v3041 = vadd.f32 %v2703, %v2977
      %v3042 = vadd.f32 %v2705, %v2978
      %v3043 = vadd.f32 %v2709, %v2979
      %v3044 = vadd.f32 %v2711, %v2980
      %v3045 = vadd.f32 %v2715, %v2981
      %v3046 = vadd.f32 %v2717, %v2982
      %v3047 = vadd.f32 %v2721, %v2983
      %v3048 = vadd.f32 %v2723, %v2984
      %v3049 = vadd.f32 %v2727, %v2985
      %v3050 = vadd.f32 %v2729, %v2986
      %v3051 = vmul.f32 %v2987, 0.7978846
      %v3052 = vmul.f32 %v2988, 0.7978846
      %v3053 = vmul.f32 %v2989, 0.7978846
      %v3054 = vmul.f32 %v2990, 0.7978846
      %v3055 = vmul.f32 %v2991, 0.7978846
      %v3056 = vmul.f32 %v2992, 0.7978846
      %v3057 = vmul.f32 %v2993, 0.7978846
      %v3058 = vmul.f32 %v2994, 0.7978846
      %v3059 = vmul.f32 %v2995, 0.7978846
      %v3060 = vmul.f32 %v2996, 0.7978846
      %v3061 = vmul.f32 %v2997, 0.7978846
      %v3062 = vmul.f32 %v2998, 0.7978846
      %v3063 = vmul.f32 %v2999, 0.7978846
      %v3064 = vmul.f32 %v3000, 0.7978846
      %v3065 = vmul.f32 %v3001, 0.7978846
      %v3066 = vmul.f32 %v3002, 0.7978846
      %v3067 = vmul.f32 %v3003, 0.7978846
      %v3068 = vmul.f32 %v3004, 0.7978846
      %v3069 = vmul.f32 %v3005, 0.7978846
      %v3070 = vmul.f32 %v3006, 0.7978846
      %v3071 = vmul.f32 %v3007, 0.7978846
      %v3072 = vmul.f32 %v3008, 0.7978846
      %v3073 = vmul.f32 %v3009, 0.7978846
      %v3074 = vmul.f32 %v3010, 0.7978846
      %v3075 = vmul.f32 %v3011, 0.7978846
      %v3076 = vmul.f32 %v3012, 0.7978846
      %v3077 = vmul.f32 %v3013, 0.7978846
      %v3078 = vmul.f32 %v3014, 0.7978846
      %v3079 = vmul.f32 %v3015, 0.7978846
      %v3080 = vmul.f32 %v3016, 0.7978846
      %v3081 = vmul.f32 %v3017, 0.7978846
      %v3082 = vmul.f32 %v3018, 0.7978846
      %v3083 = vmul.f32 %v3019, 0.7978846
      %v3084 = vmul.f32 %v3020, 0.7978846
      %v3085 = vmul.f32 %v3021, 0.7978846
      %v3086 = vmul.f32 %v3022, 0.7978846
      %v3087 = vmul.f32 %v3023, 0.7978846
      %v3088 = vmul.f32 %v3024, 0.7978846
      %v3089 = vmul.f32 %v3025, 0.7978846
      %v3090 = vmul.f32 %v3026, 0.7978846
      %v3091 = vmul.f32 %v3027, 0.7978846
      %v3092 = vmul.f32 %v3028, 0.7978846
      %v3093 = vmul.f32 %v3029, 0.7978846
      %v3094 = vmul.f32 %v3030, 0.7978846
      %v3095 = vmul.f32 %v3031, 0.7978846
      %v3096 = vmul.f32 %v3032, 0.7978846
      %v3097 = vmul.f32 %v3033, 0.7978846
      %v3098 = vmul.f32 %v3034, 0.7978846
      %v3099 = vmul.f32 %v3035, 0.7978846
      %v3100 = vmul.f32 %v3036, 0.7978846
      %v3101 = vmul.f32 %v3037, 0.7978846
      %v3102 = vmul.f32 %v3038, 0.7978846
      %v3103 = vmul.f32 %v3039, 0.7978846
      %v3104 = vmul.f32 %v3040, 0.7978846
      %v3105 = vmul.f32 %v3041, 0.7978846
      %v3106 = vmul.f32 %v3042, 0.7978846
      %v3107 = vmul.f32 %v3043, 0.7978846
      %v3108 = vmul.f32 %v3044, 0.7978846
      %v3109 = vmul.f32 %v3045, 0.7978846
      %v3110 = vmul.f32 %v3046, 0.7978846
      %v3111 = vmul.f32 %v3047, 0.7978846
      %v3112 = vmul.f32 %v3048, 0.7978846
      %v3113 = vmul.f32 %v3049, 0.7978846
      %v3114 = vmul.f32 %v3050, 0.7978846
      %v3115 = vtanh.pop %v3051
      %v3116 = vtanh.pop %v3052
      %v3117 = vtanh.pop %v3053
      %v3118 = vtanh.pop %v3054
      %v3119 = vtanh.pop %v3055
      %v3120 = vtanh.pop %v3056
      %v3121 = vtanh.pop %v3057
      %v3122 = vtanh.pop %v3058
      %v3123 = vtanh.pop %v3059
      %v3124 = vtanh.pop %v3060
      %v3125 = vtanh.pop %v3061
      %v3126 = vtanh.pop %v3062
      %v3127 = vtanh.pop %v3063
      %v3128 = vtanh.pop %v3064
      %v3129 = vtanh.pop %v3065
      %v3130 = vtanh.pop %v3066
      %v3131 = vtanh.pop %v3067
      %v3132 = vtanh.pop %v3068
      %v3133 = vtanh.pop %v3069
      %v3134 = vtanh.pop %v3070
      %v3135 = vtanh.pop %v3071
      %v3136 = vtanh.pop %v3072
      %v3137 = vtanh.pop %v3073
      %v3138 = vtanh.pop %v3074
      %v3139 = vtanh.pop %v3075
      %v3140 = vtanh.pop %v3076
      %v3141 = vtanh.pop %v3077
      %v3142 = vtanh.pop %v3078
      %v3143 = vtanh.pop %v3079
      %v3144 = vtanh.pop %v3080
      %v3145 = vtanh.pop %v3081
      %v3146 = vtanh.pop %v3082
      %v3147 = vtanh.pop %v3083
      %v3148 = vtanh.pop %v3084
      %v3149 = vtanh.pop %v3085
      %v3150 = vtanh.pop %v3086
      %v3151 = vtanh.pop %v3087
      %v3152 = vtanh.pop %v3088
      %v3153 = vtanh.pop %v3089
      %v3154 = vtanh.pop %v3090
      %v3155 = vtanh.pop %v3091
      %v3156 = vtanh.pop %v3092
      %v3157 = vtanh.pop %v3093
      %v3158 = vtanh.pop %v3094
      %v3159 = vtanh.pop %v3095
      %v3160 = vtanh.pop %v3096
      %v3161 = vtanh.pop %v3097
      %v3162 = vtanh.pop %v3098
      %v3163 = vtanh.pop %v3099
      %v3164 = vtanh.pop %v3100
      %v3165 = vtanh.pop %v3101
      %v3166 = vtanh.pop %v3102
      %v3167 = vtanh.pop %v3103
      %v3168 = vtanh.pop %v3104
      %v3169 = vtanh.pop %v3105
      %v3170 = vtanh.pop %v3106
      %v3171 = vtanh.pop %v3107
      %v3172 = vtanh.pop %v3108
      %v3173 = vtanh.pop %v3109
      %v3174 = vtanh.pop %v3110
      %v3175 = vtanh.pop %v3111
      %v3176 = vtanh.pop %v3112
      %v3177 = vtanh.pop %v3113
      %v3178 = vtanh.pop %v3114
      %v3179 = vadd.f32 %v3115, 1.0
      %v3180 = vadd.f32 %v3116, 1.0
      %v3181 = vadd.f32 %v3117, 1.0
      %v3182 = vadd.f32 %v3118, 1.0
      %v3183 = vadd.f32 %v3119, 1.0
      %v3184 = vadd.f32 %v3120, 1.0
      %v3185 = vadd.f32 %v3121, 1.0
      %v3186 = vadd.f32 %v3122, 1.0
      %v3187 = vadd.f32 %v3123, 1.0
      %v3188 = vadd.f32 %v3124, 1.0
      %v3189 = vadd.f32 %v3125, 1.0
      %v3190 = vadd.f32 %v3126, 1.0
      %v3191 = vadd.f32 %v3127, 1.0
      %v3192 = vadd.f32 %v3128, 1.0
      %v3193 = vadd.f32 %v3129, 1.0
      %v3194 = vadd.f32 %v3130, 1.0
      %v3195 = vadd.f32 %v3131, 1.0
      %v3196 = vadd.f32 %v3132, 1.0
      %v3197 = vadd.f32 %v3133, 1.0
      %v3198 = vadd.f32 %v3134, 1.0
      %v3199 = vadd.f32 %v3135, 1.0
      %v3200 = vadd.f32 %v3136, 1.0
      %v3201 = vadd.f32 %v3137, 1.0
      %v3202 = vadd.f32 %v3138, 1.0
      %v3203 = vadd.f32 %v3139, 1.0
      %v3204 = vadd.f32 %v3140, 1.0
      %v3205 = vadd.f32 %v3141, 1.0
      %v3206 = vadd.f32 %v3142, 1.0
      %v3207 = vadd.f32 %v3143, 1.0
      %v3208 = vadd.f32 %v3144, 1.0
      %v3209 = vadd.f32 %v3145, 1.0
      %v3210 = vadd.f32 %v3146, 1.0
      %v3211 = vadd.f32 %v3147, 1.0
      %v3212 = vadd.f32 %v3148, 1.0
      %v3213 = vadd.f32 %v3149, 1.0
      %v3214 = vadd.f32 %v3150, 1.0
      %v3215 = vadd.f32 %v3151, 1.0
      %v3216 = vadd.f32 %v3152, 1.0
      %v3217 = vadd.f32 %v3153, 1.0
      %v3218 = vadd.f32 %v3154, 1.0
      %v3219 = vadd.f32 %v3155, 1.0
      %v3220 = vadd.f32 %v3156, 1.0
      %v3221 = vadd.f32 %v3157, 1.0
      %v3222 = vadd.f32 %v3158, 1.0
      %v3223 = vadd.f32 %v3159, 1.0
      %v3224 = vadd.f32 %v3160, 1.0
      %v3225 = vadd.f32 %v3161, 1.0
      %v3226 = vadd.f32 %v3162, 1.0
      %v3227 = vadd.f32 %v3163, 1.0
      %v3228 = vadd.f32 %v3164, 1.0
      %v3229 = vadd.f32 %v3165, 1.0
      %v3230 = vadd.f32 %v3166, 1.0
      %v3231 = vadd.f32 %v3167, 1.0
      %v3232 = vadd.f32 %v3168, 1.0
      %v3233 = vadd.f32 %v3169, 1.0
      %v3234 = vadd.f32 %v3170, 1.0
      %v3235 = vadd.f32 %v3171, 1.0
      %v3236 = vadd.f32 %v3172, 1.0
      %v3237 = vadd.f32 %v3173, 1.0
      %v3238 = vadd.f32 %v3174, 1.0
      %v3239 = vadd.f32 %v3175, 1.0
      %v3240 = vadd.f32 %v3176, 1.0
      %v3241 = vadd.f32 %v3177, 1.0
      %v3242 = vadd.f32 %v3178, 1.0
      %v3243 = vmul.f32 %v2731, %v3179
      %v3244 = vmul.f32 %v2732, %v3180
      %v3245 = vmul.f32 %v2733, %v3181
      %v3246 = vmul.f32 %v2734, %v3182
      %v3247 = vmul.f32 %v2735, %v3183
      %v3248 = vmul.f32 %v2736, %v3184
      %v3249 = vmul.f32 %v2737, %v3185
      %v3250 = vmul.f32 %v2738, %v3186
      %v3251 = vmul.f32 %v2739, %v3187
      %v3252 = vmul.f32 %v2740, %v3188
      %v3253 = vmul.f32 %v2741, %v3189
      %v3254 = vmul.f32 %v2742, %v3190
      %v3255 = vmul.f32 %v2743, %v3191
      %v3256 = vmul.f32 %v2744, %v3192
      %v3257 = vmul.f32 %v2745, %v3193
      %v3258 = vmul.f32 %v2746, %v3194
      %v3259 = vmul.f32 %v2747, %v3195
      %v3260 = vmul.f32 %v2748, %v3196
      %v3261 = vmul.f32 %v2749, %v3197
      %v3262 = vmul.f32 %v2750, %v3198
      %v3263 = vmul.f32 %v2751, %v3199
      %v3264 = vmul.f32 %v2752, %v3200
      %v3265 = vmul.f32 %v2753, %v3201
      %v3266 = vmul.f32 %v2754, %v3202
      %v3267 = vmul.f32 %v2755, %v3203
      %v3268 = vmul.f32 %v2756, %v3204
      %v3269 = vmul.f32 %v2757, %v3205
      %v3270 = vmul.f32 %v2758, %v3206
      %v3271 = vmul.f32 %v2759, %v3207
      %v3272 = vmul.f32 %v2760, %v3208
      %v3273 = vmul.f32 %v2761, %v3209
      %v3274 = vmul.f32 %v2762, %v3210
      %v3275 = vmul.f32 %v2763, %v3211
      %v3276 = vmul.f32 %v2764, %v3212
      %v3277 = vmul.f32 %v2765, %v3213
      %v3278 = vmul.f32 %v2766, %v3214
      %v3279 = vmul.f32 %v2767, %v3215
      %v3280 = vmul.f32 %v2768, %v3216
      %v3281 = vmul.f32 %v2769, %v3217
      %v3282 = vmul.f32 %v2770, %v3218
      %v3283 = vmul.f32 %v2771, %v3219
      %v3284 = vmul.f32 %v2772, %v3220
      %v3285 = vmul.f32 %v2773, %v3221
      %v3286 = vmul.f32 %v2774, %v3222
      %v3287 = vmul.f32 %v2775, %v3223
      %v3288 = vmul.f32 %v2776, %v3224
      %v3289 = vmul.f32 %v2777, %v3225
      %v3290 = vmul.f32 %v2778, %v3226
      %v3291 = vmul.f32 %v2779, %v3227
      %v3292 = vmul.f32 %v2780, %v3228
      %v3293 = vmul.f32 %v2781, %v3229
      %v3294 = vmul.f32 %v2782, %v3230
      %v3295 = vmul.f32 %v2783, %v3231
      %v3296 = vmul.f32 %v2784, %v3232
      %v3297 = vmul.f32 %v2785, %v3233
      %v3298 = vmul.f32 %v2786, %v3234
      %v3299 = vmul.f32 %v2787, %v3235
      %v3300 = vmul.f32 %v2788, %v3236
      %v3301 = vmul.f32 %v2789, %v3237
      %v3302 = vmul.f32 %v2790, %v3238
      %v3303 = vmul.f32 %v2791, %v3239
      %v3304 = vmul.f32 %v2792, %v3240
      %v3305 = vmul.f32 %v2793, %v3241
      %v3306 = vmul.f32 %v2794, %v3242
      %v3307 = vld [vmem:[%s8] sm:$0xff]
      %v3308 = vld [vmem:[%s8 + $0x8] sm:$0xff]
      %v3309 = vld [vmem:[%s8 + $0x10] sm:$0xff]
      %v3310 = vld [vmem:[%s8 + $0x18] sm:$0xff]
      %v3311 = vld [vmem:[%s8 + $0x20] sm:$0xff]
      %v3312 = vld [vmem:[%s8 + $0x28] sm:$0xff]
      %v3313 = vld [vmem:[%s8 + $0x30] sm:$0xff]
      %v3314 = vld [vmem:[%s8 + $0x38] sm:$0xff]
      %v3315 = vld [vmem:[%s8 + $0x40] sm:$0xff]
      %v3316 = vld [vmem:[%s8 + $0x48] sm:$0xff]
      %v3317 = vld [vmem:[%s8 + $0x50] sm:$0xff]
      %v3318 = vld [vmem:[%s8 + $0x58] sm:$0xff]
      %v3319 = vld [vmem:[%s8 + $0x60] sm:$0xff]
      %v3320 = vld [vmem:[%s8 + $0x68] sm:$0xff]
      %v3321 = vld [vmem:[%s8 + $0x70] sm:$0xff]
      %v3322 = vld [vmem:[%s8 + $0x78] sm:$0xff]
      %v3323 = vld [vmem:[%s8 + $0x80] sm:$0xff]
      %v3324 = vld [vmem:[%s8 + $0x88] sm:$0xff]
      %v3325 = vld [vmem:[%s8 + $0x90] sm:$0xff]
      %v3326 = vld [vmem:[%s8 + $0x98] sm:$0xff]
      %v3327 = vld [vmem:[%s8 + $0xa0] sm:$0xff]
      %v3328 = vld [vmem:[%s8 + $0xa8] sm:$0xff]
      %v3329 = vld [vmem:[%s8 + $0xb0] sm:$0xff]
      %v3330 = vld [vmem:[%s8 + $0xb8] sm:$0xff]
      %v3331 = vld [vmem:[%s8 + $0xc0] sm:$0xff]
      %v3332 = vld [vmem:[%s8 + $0xc8] sm:$0xff]
      %v3333 = vld [vmem:[%s8 + $0xd0] sm:$0xff]
      %v3334 = vld [vmem:[%s8 + $0xd8] sm:$0xff]
      %v3335 = vld [vmem:[%s8 + $0xe0] sm:$0xff]
      %v3336 = vld [vmem:[%s8 + $0xe8] sm:$0xff]
      %v3337 = vld [vmem:[%s8 + $0xf0] sm:$0xff]
      %v3338 = vld [vmem:[%s8 + $0xf8] sm:$0xff]
      %v3339 = vld [vmem:[%s9] sm:$0x1]
      %v3341 = vlaneseq
      %v3342 = vshrl.u32 %v3341, 7
      %v3343 = vsub.s32 0, %v3342
      %v3344 = vrot.slane %v3339, %v3343
      %3346 = vmatprep.subr.mxu0 0.0
      %3347 = vmatpush1.msra.mxu0 %v3322
      %3348 = vmatprep.subr.mxu0 0.0
      %3349 = vmatpush1.msra.mxu0 %v3321
      %3350 = vmatprep.subr.mxu0 0.0
      %3351 = vmatpush1.msra.mxu0 %v3320
      %3352 = vmatprep.subr.mxu0 0.0
      %3353 = vmatpush1.msra.mxu0 %v3319
      %3354 = vmatprep.subr.mxu0 0.0
      %3355 = vmatpush1.msra.mxu0 %v3318
      %3356 = vmatprep.subr.mxu0 0.0
      %3357 = vmatpush1.msra.mxu0 %v3317
      %3358 = vmatprep.subr.mxu0 0.0
      %3359 = vmatpush1.msra.mxu0 %v3316
      %3360 = vmatprep.subr.mxu0 0.0
      %3361 = vmatpush1.msra.mxu0 %v3315
      %3362 = vmatprep.subr.mxu0 0.0
      %3363 = vmatpush1.msra.mxu0 %v3314
      %3364 = vmatprep.subr.mxu0 0.0
      %3365 = vmatpush1.msra.mxu0 %v3313
      %3366 = vmatprep.subr.mxu0 0.0
      %3367 = vmatpush1.msra.mxu0 %v3312
      %3368 = vmatprep.subr.mxu0 0.0
      %3369 = vmatpush1.msra.mxu0 %v3311
      %3370 = vmatprep.subr.mxu0 0.0
      %3371 = vmatpush1.msra.mxu0 %v3310
      %3372 = vmatprep.subr.mxu0 0.0
      %3373 = vmatpush1.msra.mxu0 %v3309
      %3374 = vmatprep.subr.mxu0 0.0
      %3375 = vmatpush1.msra.mxu0 %v3308
      %3376 = vmatprep.subr.mxu0 0.0
      %3377 = vmatpush1.msra.mxu0 %v3307
      %3378 = vmatprep.subr.mxu0 0.0
      %3379 = vmatpush2.msra.mxu0 %v3338
      %3380 = vmatprep.subr.mxu0 0.0
      %3381 = vmatpush2.msra.mxu0 %v3337
      %3382 = vmatprep.subr.mxu0 0.0
      %3383 = vmatpush2.msra.mxu0 %v3336
      %3384 = vmatprep.subr.mxu0 0.0
      %3385 = vmatpush2.msra.mxu0 %v3335
      %3386 = vmatprep.subr.mxu0 0.0
      %3387 = vmatpush2.msra.mxu0 %v3334
      %3388 = vmatprep.subr.mxu0 0.0
      %3389 = vmatpush2.msra.mxu0 %v3333
      %3390 = vmatprep.subr.mxu0 0.0
      %3391 = vmatpush2.msra.mxu0 %v3332
      %3392 = vmatprep.subr.mxu0 0.0
      %3393 = vmatpush2.msra.mxu0 %v3331
      %3394 = vmatprep.subr.mxu0 0.0
      %3395 = vmatpush2.msra.mxu0 %v3330
      %3396 = vmatprep.subr.mxu0 0.0
      %3397 = vmatpush2.msra.mxu0 %v3329
      %3398 = vmatprep.subr.mxu0 0.0
      %3399 = vmatpush2.msra.mxu0 %v3328
      %3400 = vmatprep.subr.mxu0 0.0
      %3401 = vmatpush2.msra.mxu0 %v3327
      %3402 = vmatprep.subr.mxu0 0.0
      %3403 = vmatpush2.msra.mxu0 %v3326
      %3404 = vmatprep.subr.mxu0 0.0
      %3405 = vmatpush2.msra.mxu0 %v3325
      %3406 = vmatprep.subr.mxu0 0.0
      %3407 = vmatpush2.msra.mxu0 %v3324
      %3408 = vmatprep.subr.mxu0 0.0
      %3409 = vmatpush2.msra.mxu0 %v3323
      %3410 = vmatprep.mubr.f32.mxu0 %v3244
      %3411 = vmatmul.mubr.f32.gmra.mxu0 %v3243
      %v3412 = vpop.f32.mrf.mxu0
      %v3413 = vadd.f32 %v3344, %v3412
      %v3414 = vpop.f32.mrf.mxu0
      %3415 = vmatprep.mubr.f32.mxu0 %v3246
      %3416 = vmatmul.mubr.f32.gmra.mxu0 %v3245
      %v3417 = vpop.f32.mrf.mxu0
      %v3418 = vadd.f32 %v3344, %v3417
      %v3419 = vpop.f32.mrf.mxu0
      %3420 = vmatprep.mubr.f32.mxu0 %v3248
      %3421 = vmatmul.mubr.f32.gmra.mxu0 %v3247
      %v3422 = vpop.f32.mrf.mxu0
      %v3423 = vadd.f32 %v3344, %v3422
      %v3424 = vpop.f32.mrf.mxu0
      %3425 = vmatprep.mubr.f32.mxu0 %v3250
      %3426 = vmatmul.mubr.f32.gmra.mxu0 %v3249
      %v3427 = vpop.f32.mrf.mxu0
      %v3428 = vadd.f32 %v3344, %v3427
      %v3429 = vpop.f32.mrf.mxu0
      %3430 = vmatprep.mubr.f32.mxu0 %v3252
      %3431 = vmatmul.mubr.f32.gmra.mxu0 %v3251
      %v3432 = vpop.f32.mrf.mxu0
      %v3433 = vadd.f32 %v3344, %v3432
      %v3434 = vpop.f32.mrf.mxu0
      %3435 = vmatprep.mubr.f32.mxu0 %v3254
      %3436 = vmatmul.mubr.f32.gmra.mxu0 %v3253
      %v3437 = vpop.f32.mrf.mxu0
      %v3438 = vadd.f32 %v3344, %v3437
      %v3439 = vpop.f32.mrf.mxu0
      %3440 = vmatprep.mubr.f32.mxu0 %v3256
      %3441 = vmatmul.mubr.f32.gmra.mxu0 %v3255
      %v3442 = vpop.f32.mrf.mxu0
      %v3443 = vadd.f32 %v3344, %v3442
      %v3444 = vpop.f32.mrf.mxu0
      %3445 = vmatprep.mubr.f32.mxu0 %v3258
      %3446 = vmatmul.mubr.f32.gmra.mxu0 %v3257
      %v3447 = vpop.f32.mrf.mxu0
      %v3448 = vadd.f32 %v3344, %v3447
      %v3449 = vpop.f32.mrf.mxu0
      %3450 = vmatprep.mubr.f32.mxu0 %v3260
      %3451 = vmatmul.mubr.f32.gmra.mxu0 %v3259
      %v3452 = vpop.f32.mrf.mxu0
      %v3453 = vadd.f32 %v3344, %v3452
      %v3454 = vpop.f32.mrf.mxu0
      %3455 = vmatprep.mubr.f32.mxu0 %v3262
      %3456 = vmatmul.mubr.f32.gmra.mxu0 %v3261
      %v3457 = vpop.f32.mrf.mxu0
      %v3458 = vadd.f32 %v3344, %v3457
      %v3459 = vpop.f32.mrf.mxu0
      %3460 = vmatprep.mubr.f32.mxu0 %v3264
      %3461 = vmatmul.mubr.f32.gmra.mxu0 %v3263
      %v3462 = vpop.f32.mrf.mxu0
      %v3463 = vadd.f32 %v3344, %v3462
      %v3464 = vpop.f32.mrf.mxu0
      %3465 = vmatprep.mubr.f32.mxu0 %v3266
      %3466 = vmatmul.mubr.f32.gmra.mxu0 %v3265
      %v3467 = vpop.f32.mrf.mxu0
      %v3468 = vadd.f32 %v3344, %v3467
      %v3469 = vpop.f32.mrf.mxu0
      %3470 = vmatprep.mubr.f32.mxu0 %v3268
      %3471 = vmatmul.mubr.f32.gmra.mxu0 %v3267
      %v3472 = vpop.f32.mrf.mxu0
      %v3473 = vadd.f32 %v3344, %v3472
      %v3474 = vpop.f32.mrf.mxu0
      %3475 = vmatprep.mubr.f32.mxu0 %v3270
      %3476 = vmatmul.mubr.f32.gmra.mxu0 %v3269
      %v3477 = vpop.f32.mrf.mxu0
      %v3478 = vadd.f32 %v3344, %v3477
      %v3479 = vpop.f32.mrf.mxu0
      %3480 = vmatprep.mubr.f32.mxu0 %v3272
      %3481 = vmatmul.mubr.f32.gmra.mxu0 %v3271
      %v3482 = vpop.f32.mrf.mxu0
      %v3483 = vadd.f32 %v3344, %v3482
      %v3484 = vpop.f32.mrf.mxu0
      %3485 = vmatprep.mubr.f32.mxu0 %v3274
      %3486 = vmatmul.mubr.f32.gmra.mxu0 %v3273
      %v3487 = vpop.f32.mrf.mxu0
      %v3488 = vadd.f32 %v3344, %v3487
      %v3489 = vpop.f32.mrf.mxu0
      %3490 = vmatprep.mubr.f32.mxu0 %v3276
      %3491 = vmatmul.mubr.f32.gmra.mxu0 %v3275
      %v3492 = vpop.f32.mrf.mxu0
      %v3493 = vadd.f32 %v3344, %v3492
      %v3494 = vpop.f32.mrf.mxu0
      %3495 = vmatprep.mubr.f32.mxu0 %v3278
      %3496 = vmatmul.mubr.f32.gmra.mxu0 %v3277
      %v3497 = vpop.f32.mrf.mxu0
      %v3498 = vadd.f32 %v3344, %v3497
      %v3499 = vpop.f32.mrf.mxu0
      %3500 = vmatprep.mubr.f32.mxu0 %v3280
      %3501 = vmatmul.mubr.f32.gmra.mxu0 %v3279
      %v3502 = vpop.f32.mrf.mxu0
      %v3503 = vadd.f32 %v3344, %v3502
      %v3504 = vpop.f32.mrf.mxu0
      %3505 = vmatprep.mubr.f32.mxu0 %v3282
      %3506 = vmatmul.mubr.f32.gmra.mxu0 %v3281
      %v3507 = vpop.f32.mrf.mxu0
      %v3508 = vadd.f32 %v3344, %v3507
      %v3509 = vpop.f32.mrf.mxu0
      %3510 = vmatprep.mubr.f32.mxu0 %v3284
      %3511 = vmatmul.mubr.f32.gmra.mxu0 %v3283
      %v3512 = vpop.f32.mrf.mxu0
      %v3513 = vadd.f32 %v3344, %v3512
      %v3514 = vpop.f32.mrf.mxu0
      %3515 = vmatprep.mubr.f32.mxu0 %v3286
      %3516 = vmatmul.mubr.f32.gmra.mxu0 %v3285
      %v3517 = vpop.f32.mrf.mxu0
      %v3518 = vadd.f32 %v3344, %v3517
      %v3519 = vpop.f32.mrf.mxu0
      %3520 = vmatprep.mubr.f32.mxu0 %v3288
      %3521 = vmatmul.mubr.f32.gmra.mxu0 %v3287
      %v3522 = vpop.f32.mrf.mxu0
      %v3523 = vadd.f32 %v3344, %v3522
      %v3524 = vpop.f32.mrf.mxu0
      %3525 = vmatprep.mubr.f32.mxu0 %v3290
      %3526 = vmatmul.mubr.f32.gmra.mxu0 %v3289
      %v3527 = vpop.f32.mrf.mxu0
      %v3528 = vadd.f32 %v3344, %v3527
      %v3529 = vpop.f32.mrf.mxu0
      %3530 = vmatprep.mubr.f32.mxu0 %v3292
      %3531 = vmatmul.mubr.f32.gmra.mxu0 %v3291
      %v3532 = vpop.f32.mrf.mxu0
      %v3533 = vadd.f32 %v3344, %v3532
      %v3534 = vpop.f32.mrf.mxu0
      %3535 = vmatprep.mubr.f32.mxu0 %v3294
      %3536 = vmatmul.mubr.f32.gmra.mxu0 %v3293
      %v3537 = vpop.f32.mrf.mxu0
      %v3538 = vadd.f32 %v3344, %v3537
      %v3539 = vpop.f32.mrf.mxu0
      %3540 = vmatprep.mubr.f32.mxu0 %v3296
      %3541 = vmatmul.mubr.f32.gmra.mxu0 %v3295
      %v3542 = vpop.f32.mrf.mxu0
      %v3543 = vadd.f32 %v3344, %v3542
      %v3544 = vpop.f32.mrf.mxu0
      %3545 = vmatprep.mubr.f32.mxu0 %v3298
      %3546 = vmatmul.mubr.f32.gmra.mxu0 %v3297
      %v3547 = vpop.f32.mrf.mxu0
      %v3548 = vadd.f32 %v3344, %v3547
      %v3549 = vpop.f32.mrf.mxu0
      %3550 = vmatprep.mubr.f32.mxu0 %v3300
      %3551 = vmatmul.mubr.f32.gmra.mxu0 %v3299
      %v3552 = vpop.f32.mrf.mxu0
      %v3553 = vadd.f32 %v3344, %v3552
      %v3554 = vpop.f32.mrf.mxu0
      %3555 = vmatprep.mubr.f32.mxu0 %v3302
      %3556 = vmatmul.mubr.f32.gmra.mxu0 %v3301
      %v3557 = vpop.f32.mrf.mxu0
      %v3558 = vadd.f32 %v3344, %v3557
      %v3559 = vpop.f32.mrf.mxu0
      %3560 = vmatprep.mubr.f32.mxu0 %v3304
      %3561 = vmatmul.mubr.f32.gmra.mxu0 %v3303
      %v3562 = vpop.f32.mrf.mxu0
      %v3563 = vadd.f32 %v3344, %v3562
      %v3564 = vpop.f32.mrf.mxu0
      %3565 = vmatprep.mubr.f32.mxu0 %v3306
      %3566 = vmatmul.mubr.f32.gmra.mxu0 %v3305
      %v3567 = vpop.f32.mrf.mxu0
      %v3568 = vadd.f32 %v3344, %v3567
      %v3569 = vpop.f32.mrf.mxu0
      %3570 = vdwg.mxu0
      %v3571 = vld [vmem:[%s10] sm:$0xff]
      %v3572 = vld [vmem:[%s10 + $0x8] sm:$0xff]
      %v3573 = vld [vmem:[%s10 + $0x10] sm:$0xff]
      %v3574 = vld [vmem:[%s10 + $0x18] sm:$0xff]
      %v3575 = vld [vmem:[%s10 + $0x20] sm:$0xff]
      %v3576 = vld [vmem:[%s10 + $0x28] sm:$0xff]
      %v3577 = vld [vmem:[%s10 + $0x30] sm:$0xff]
      %v3578 = vld [vmem:[%s10 + $0x38] sm:$0xff]
      %v3579 = vld [vmem:[%s10 + $0x40] sm:$0xff]
      %v3580 = vld [vmem:[%s10 + $0x48] sm:$0xff]
      %v3581 = vld [vmem:[%s10 + $0x50] sm:$0xff]
      %v3582 = vld [vmem:[%s10 + $0x58] sm:$0xff]
      %v3583 = vld [vmem:[%s10 + $0x60] sm:$0xff]
      %v3584 = vld [vmem:[%s10 + $0x68] sm:$0xff]
      %v3585 = vld [vmem:[%s10 + $0x70] sm:$0xff]
      %v3586 = vld [vmem:[%s10 + $0x78] sm:$0xff]
      %v3587 = vld [vmem:[%s10 + $0x80] sm:$0xff]
      %v3588 = vld [vmem:[%s10 + $0x88] sm:$0xff]
      %v3589 = vld [vmem:[%s10 + $0x90] sm:$0xff]
      %v3590 = vld [vmem:[%s10 + $0x98] sm:$0xff]
      %v3591 = vld [vmem:[%s10 + $0xa0] sm:$0xff]
      %v3592 = vld [vmem:[%s10 + $0xa8] sm:$0xff]
      %v3593 = vld [vmem:[%s10 + $0xb0] sm:$0xff]
      %v3594 = vld [vmem:[%s10 + $0xb8] sm:$0xff]
      %v3595 = vld [vmem:[%s10 + $0xc0] sm:$0xff]
      %v3596 = vld [vmem:[%s10 + $0xc8] sm:$0xff]
      %v3597 = vld [vmem:[%s10 + $0xd0] sm:$0xff]
      %v3598 = vld [vmem:[%s10 + $0xd8] sm:$0xff]
      %v3599 = vld [vmem:[%s10 + $0xe0] sm:$0xff]
      %v3600 = vld [vmem:[%s10 + $0xe8] sm:$0xff]
      %v3601 = vld [vmem:[%s10 + $0xf0] sm:$0xff]
      %v3602 = vld [vmem:[%s10 + $0xf8] sm:$0xff]
      %v3603 = vld [vmem:[%s11] sm:$0x1]
      %v3605 = vlaneseq
      %v3606 = vshrl.u32 %v3605, 7
      %v3607 = vsub.s32 0, %v3606
      %v3608 = vrot.slane %v3603, %v3607
      %3610 = vmatprep.subr.mxu0 0.0
      %3611 = vmatpush1.msra.mxu0 %v3586
      %3612 = vmatprep.subr.mxu0 0.0
      %3613 = vmatpush1.msra.mxu0 %v3585
      %3614 = vmatprep.subr.mxu0 0.0
      %3615 = vmatpush1.msra.mxu0 %v3584
      %3616 = vmatprep.subr.mxu0 0.0
      %3617 = vmatpush1.msra.mxu0 %v3583
      %3618 = vmatprep.subr.mxu0 0.0
      %3619 = vmatpush1.msra.mxu0 %v3582
      %3620 = vmatprep.subr.mxu0 0.0
      %3621 = vmatpush1.msra.mxu0 %v3581
      %3622 = vmatprep.subr.mxu0 0.0
      %3623 = vmatpush1.msra.mxu0 %v3580
      %3624 = vmatprep.subr.mxu0 0.0
      %3625 = vmatpush1.msra.mxu0 %v3579
      %3626 = vmatprep.subr.mxu0 0.0
      %3627 = vmatpush1.msra.mxu0 %v3578
      %3628 = vmatprep.subr.mxu0 0.0
      %3629 = vmatpush1.msra.mxu0 %v3577
      %3630 = vmatprep.subr.mxu0 0.0
      %3631 = vmatpush1.msra.mxu0 %v3576
      %3632 = vmatprep.subr.mxu0 0.0
      %3633 = vmatpush1.msra.mxu0 %v3575
      %3634 = vmatprep.subr.mxu0 0.0
      %3635 = vmatpush1.msra.mxu0 %v3574
      %3636 = vmatprep.subr.mxu0 0.0
      %3637 = vmatpush1.msra.mxu0 %v3573
      %3638 = vmatprep.subr.mxu0 0.0
      %3639 = vmatpush1.msra.mxu0 %v3572
      %3640 = vmatprep.subr.mxu0 0.0
      %3641 = vmatpush1.msra.mxu0 %v3571
      %3642 = vmatprep.subr.mxu0 0.0
      %3643 = vmatpush2.msra.mxu0 %v3602
      %3644 = vmatprep.subr.mxu0 0.0
      %3645 = vmatpush2.msra.mxu0 %v3601
      %3646 = vmatprep.subr.mxu0 0.0
      %3647 = vmatpush2.msra.mxu0 %v3600
      %3648 = vmatprep.subr.mxu0 0.0
      %3649 = vmatpush2.msra.mxu0 %v3599
      %3650 = vmatprep.subr.mxu0 0.0
      %3651 = vmatpush2.msra.mxu0 %v3598
      %3652 = vmatprep.subr.mxu0 0.0
      %3653 = vmatpush2.msra.mxu0 %v3597
      %3654 = vmatprep.subr.mxu0 0.0
      %3655 = vmatpush2.msra.mxu0 %v3596
      %3656 = vmatprep.subr.mxu0 0.0
      %3657 = vmatpush2.msra.mxu0 %v3595
      %3658 = vmatprep.subr.mxu0 0.0
      %3659 = vmatpush2.msra.mxu0 %v3594
      %3660 = vmatprep.subr.mxu0 0.0
      %3661 = vmatpush2.msra.mxu0 %v3593
      %3662 = vmatprep.subr.mxu0 0.0
      %3663 = vmatpush2.msra.mxu0 %v3592
      %3664 = vmatprep.subr.mxu0 0.0
      %3665 = vmatpush2.msra.mxu0 %v3591
      %3666 = vmatprep.subr.mxu0 0.0
      %3667 = vmatpush2.msra.mxu0 %v3590
      %3668 = vmatprep.subr.mxu0 0.0
      %3669 = vmatpush2.msra.mxu0 %v3589
      %3670 = vmatprep.subr.mxu0 0.0
      %3671 = vmatpush2.msra.mxu0 %v3588
      %3672 = vmatprep.subr.mxu0 0.0
      %3673 = vmatpush2.msra.mxu0 %v3587
      %3674 = vmatprep.mubr.f32.mxu0 %v3244
      %3675 = vmatmul.mubr.f32.gmra.mxu0 %v3243
      %v3676 = vpop.f32.mrf.mxu0
      %v3677 = vadd.f32 %v3608, %v3676
      %v3678 = vpop.f32.mrf.mxu0
      %3679 = vmatprep.mubr.f32.mxu0 %v3246
      %3680 = vmatmul.mubr.f32.gmra.mxu0 %v3245
      %v3681 = vpop.f32.mrf.mxu0
      %v3682 = vadd.f32 %v3608, %v3681
      %v3683 = vpop.f32.mrf.mxu0
      %3684 = vmatprep.mubr.f32.mxu0 %v3248
      %3685 = vmatmul.mubr.f32.gmra.mxu0 %v3247
      %v3686 = vpop.f32.mrf.mxu0
      %v3687 = vadd.f32 %v3608, %v3686
      %v3688 = vpop.f32.mrf.mxu0
      %3689 = vmatprep.mubr.f32.mxu0 %v3250
      %3690 = vmatmul.mubr.f32.gmra.mxu0 %v3249
      %v3691 = vpop.f32.mrf.mxu0
      %v3692 = vadd.f32 %v3608, %v3691
      %v3693 = vpop.f32.mrf.mxu0
      %3694 = vmatprep.mubr.f32.mxu0 %v3252
      %3695 = vmatmul.mubr.f32.gmra.mxu0 %v3251
      %v3696 = vpop.f32.mrf.mxu0
      %v3697 = vadd.f32 %v3608, %v3696
      %v3698 = vpop.f32.mrf.mxu0
      %3699 = vmatprep.mubr.f32.mxu0 %v3254
      %3700 = vmatmul.mubr.f32.gmra.mxu0 %v3253
      %v3701 = vpop.f32.mrf.mxu0
      %v3702 = vadd.f32 %v3608, %v3701
      %v3703 = vpop.f32.mrf.mxu0
      %3704 = vmatprep.mubr.f32.mxu0 %v3256
      %3705 = vmatmul.mubr.f32.gmra.mxu0 %v3255
      %v3706 = vpop.f32.mrf.mxu0
      %v3707 = vadd.f32 %v3608, %v3706
      %v3708 = vpop.f32.mrf.mxu0
      %3709 = vmatprep.mubr.f32.mxu0 %v3258
      %3710 = vmatmul.mubr.f32.gmra.mxu0 %v3257
      %v3711 = vpop.f32.mrf.mxu0
      %v3712 = vadd.f32 %v3608, %v3711
      %v3713 = vpop.f32.mrf.mxu0
      %3714 = vmatprep.mubr.f32.mxu0 %v3260
      %3715 = vmatmul.mubr.f32.gmra.mxu0 %v3259
      %v3716 = vpop.f32.mrf.mxu0
      %v3717 = vadd.f32 %v3608, %v3716
      %v3718 = vpop.f32.mrf.mxu0
      %3719 = vmatprep.mubr.f32.mxu0 %v3262
      %3720 = vmatmul.mubr.f32.gmra.mxu0 %v3261
      %v3721 = vpop.f32.mrf.mxu0
      %v3722 = vadd.f32 %v3608, %v3721
      %v3723 = vpop.f32.mrf.mxu0
      %3724 = vmatprep.mubr.f32.mxu0 %v3264
      %3725 = vmatmul.mubr.f32.gmra.mxu0 %v3263
      %v3726 = vpop.f32.mrf.mxu0
      %v3727 = vadd.f32 %v3608, %v3726
      %v3728 = vpop.f32.mrf.mxu0
      %3729 = vmatprep.mubr.f32.mxu0 %v3266
      %3730 = vmatmul.mubr.f32.gmra.mxu0 %v3265
      %v3731 = vpop.f32.mrf.mxu0
      %v3732 = vadd.f32 %v3608, %v3731
      %v3733 = vpop.f32.mrf.mxu0
      %3734 = vmatprep.mubr.f32.mxu0 %v3268
      %3735 = vmatmul.mubr.f32.gmra.mxu0 %v3267
      %v3736 = vpop.f32.mrf.mxu0
      %v3737 = vadd.f32 %v3608, %v3736
      %v3738 = vpop.f32.mrf.mxu0
      %3739 = vmatprep.mubr.f32.mxu0 %v3270
      %3740 = vmatmul.mubr.f32.gmra.mxu0 %v3269
      %v3741 = vpop.f32.mrf.mxu0
      %v3742 = vadd.f32 %v3608, %v3741
      %v3743 = vpop.f32.mrf.mxu0
      %3744 = vmatprep.mubr.f32.mxu0 %v3272
      %3745 = vmatmul.mubr.f32.gmra.mxu0 %v3271
      %v3746 = vpop.f32.mrf.mxu0
      %v3747 = vadd.f32 %v3608, %v3746
      %v3748 = vpop.f32.mrf.mxu0
      %3749 = vmatprep.mubr.f32.mxu0 %v3274
      %3750 = vmatmul.mubr.f32.gmra.mxu0 %v3273
      %v3751 = vpop.f32.mrf.mxu0
      %v3752 = vadd.f32 %v3608, %v3751
      %v3753 = vpop.f32.mrf.mxu0
      %3754 = vmatprep.mubr.f32.mxu0 %v3276
      %3755 = vmatmul.mubr.f32.gmra.mxu0 %v3275
      %v3756 = vpop.f32.mrf.mxu0
      %v3757 = vadd.f32 %v3608, %v3756
      %v3758 = vpop.f32.mrf.mxu0
      %3759 = vmatprep.mubr.f32.mxu0 %v3278
      %3760 = vmatmul.mubr.f32.gmra.mxu0 %v3277
      %v3761 = vpop.f32.mrf.mxu0
      %v3762 = vadd.f32 %v3608, %v3761
      %v3763 = vpop.f32.mrf.mxu0
      %3764 = vmatprep.mubr.f32.mxu0 %v3280
      %3765 = vmatmul.mubr.f32.gmra.mxu0 %v3279
      %v3766 = vpop.f32.mrf.mxu0
      %v3767 = vadd.f32 %v3608, %v3766
      %v3768 = vpop.f32.mrf.mxu0
      %3769 = vmatprep.mubr.f32.mxu0 %v3282
      %3770 = vmatmul.mubr.f32.gmra.mxu0 %v3281
      %v3771 = vpop.f32.mrf.mxu0
      %v3772 = vadd.f32 %v3608, %v3771
      %v3773 = vpop.f32.mrf.mxu0
      %3774 = vmatprep.mubr.f32.mxu0 %v3284
      %3775 = vmatmul.mubr.f32.gmra.mxu0 %v3283
      %v3776 = vpop.f32.mrf.mxu0
      %v3777 = vadd.f32 %v3608, %v3776
      %v3778 = vpop.f32.mrf.mxu0
      %3779 = vmatprep.mubr.f32.mxu0 %v3286
      %3780 = vmatmul.mubr.f32.gmra.mxu0 %v3285
      %v3781 = vpop.f32.mrf.mxu0
      %v3782 = vadd.f32 %v3608, %v3781
      %v3783 = vpop.f32.mrf.mxu0
      %3784 = vmatprep.mubr.f32.mxu0 %v3288
      %3785 = vmatmul.mubr.f32.gmra.mxu0 %v3287
      %v3786 = vpop.f32.mrf.mxu0
      %v3787 = vadd.f32 %v3608, %v3786
      %v3788 = vpop.f32.mrf.mxu0
      %3789 = vmatprep.mubr.f32.mxu0 %v3290
      %3790 = vmatmul.mubr.f32.gmra.mxu0 %v3289
      %v3791 = vpop.f32.mrf.mxu0
      %v3792 = vadd.f32 %v3608, %v3791
      %v3793 = vpop.f32.mrf.mxu0
      %3794 = vmatprep.mubr.f32.mxu0 %v3292
      %3795 = vmatmul.mubr.f32.gmra.mxu0 %v3291
      %v3796 = vpop.f32.mrf.mxu0
      %v3797 = vadd.f32 %v3608, %v3796
      %v3798 = vpop.f32.mrf.mxu0
      %3799 = vmatprep.mubr.f32.mxu0 %v3294
      %3800 = vmatmul.mubr.f32.gmra.mxu0 %v3293
      %v3801 = vpop.f32.mrf.mxu0
      %v3802 = vadd.f32 %v3608, %v3801
      %v3803 = vpop.f32.mrf.mxu0
      %3804 = vmatprep.mubr.f32.mxu0 %v3296
      %3805 = vmatmul.mubr.f32.gmra.mxu0 %v3295
      %v3806 = vpop.f32.mrf.mxu0
      %v3807 = vadd.f32 %v3608, %v3806
      %v3808 = vpop.f32.mrf.mxu0
      %3809 = vmatprep.mubr.f32.mxu0 %v3298
      %3810 = vmatmul.mubr.f32.gmra.mxu0 %v3297
      %v3811 = vpop.f32.mrf.mxu0
      %v3812 = vadd.f32 %v3608, %v3811
      %v3813 = vpop.f32.mrf.mxu0
      %3814 = vmatprep.mubr.f32.mxu0 %v3300
      %3815 = vmatmul.mubr.f32.gmra.mxu0 %v3299
      %v3816 = vpop.f32.mrf.mxu0
      %v3817 = vadd.f32 %v3608, %v3816
      %v3818 = vpop.f32.mrf.mxu0
      %3819 = vmatprep.mubr.f32.mxu0 %v3302
      %3820 = vmatmul.mubr.f32.gmra.mxu0 %v3301
      %v3821 = vpop.f32.mrf.mxu0
      %v3822 = vadd.f32 %v3608, %v3821
      %v3823 = vpop.f32.mrf.mxu0
      %3824 = vmatprep.mubr.f32.mxu0 %v3304
      %3825 = vmatmul.mubr.f32.gmra.mxu0 %v3303
      %v3826 = vpop.f32.mrf.mxu0
      %v3827 = vadd.f32 %v3608, %v3826
      %v3828 = vpop.f32.mrf.mxu0
      %3829 = vmatprep.mubr.f32.mxu0 %v3306
      %3830 = vmatmul.mubr.f32.gmra.mxu0 %v3305
      %v3831 = vpop.f32.mrf.mxu0
      %v3832 = vadd.f32 %v3608, %v3831
      %v3833 = vpop.f32.mrf.mxu0
      %3834 = vdwg.mxu0
      %v3835 = vadd.f32 %v3413, 2.0
      %v3836 = vadd.f32 %v3418, 2.0
      %v3837 = vadd.f32 %v3423, 2.0
      %v3838 = vadd.f32 %v3428, 2.0
      %v3839 = vadd.f32 %v3433, 2.0
      %v3840 = vadd.f32 %v3438, 2.0
      %v3841 = vadd.f32 %v3443, 2.0
      %v3842 = vadd.f32 %v3448, 2.0
      %v3843 = vadd.f32 %v3453, 2.0
      %v3844 = vadd.f32 %v3458, 2.0
      %v3845 = vadd.f32 %v3463, 2.0
      %v3846 = vadd.f32 %v3468, 2.0
      %v3847 = vadd.f32 %v3473, 2.0
      %v3848 = vadd.f32 %v3478, 2.0
      %v3849 = vadd.f32 %v3483, 2.0
      %v3850 = vadd.f32 %v3488, 2.0
      %v3851 = vadd.f32 %v3493, 2.0
      %v3852 = vadd.f32 %v3498, 2.0
      %v3853 = vadd.f32 %v3503, 2.0
      %v3854 = vadd.f32 %v3508, 2.0
      %v3855 = vadd.f32 %v3513, 2.0
      %v3856 = vadd.f32 %v3518, 2.0
      %v3857 = vadd.f32 %v3523, 2.0
      %v3858 = vadd.f32 %v3528, 2.0
      %v3859 = vadd.f32 %v3533, 2.0
      %v3860 = vadd.f32 %v3538, 2.0
      %v3861 = vadd.f32 %v3543, 2.0
      %v3862 = vadd.f32 %v3548, 2.0
      %v3863 = vadd.f32 %v3553, 2.0
      %v3864 = vadd.f32 %v3558, 2.0
      %v3865 = vadd.f32 %v3563, 2.0
      %v3866 = vadd.f32 %v3568, 2.0
      %v3867 = vsub.f32 0.0, %v3835
      %v3868 = vsub.f32 0.0, %v3836
      %v3869 = vsub.f32 0.0, %v3837
      %v3870 = vsub.f32 0.0, %v3838
      %v3871 = vsub.f32 0.0, %v3839
      %v3872 = vsub.f32 0.0, %v3840
      %v3873 = vsub.f32 0.0, %v3841
      %v3874 = vsub.f32 0.0, %v3842
      %v3875 = vsub.f32 0.0, %v3843
      %v3876 = vsub.f32 0.0, %v3844
      %v3877 = vsub.f32 0.0, %v3845
      %v3878 = vsub.f32 0.0, %v3846
      %v3879 = vsub.f32 0.0, %v3847
      %v3880 = vsub.f32 0.0, %v3848
      %v3881 = vsub.f32 0.0, %v3849
      %v3882 = vsub.f32 0.0, %v3850
      %v3883 = vsub.f32 0.0, %v3851
      %v3884 = vsub.f32 0.0, %v3852
      %v3885 = vsub.f32 0.0, %v3853
      %v3886 = vsub.f32 0.0, %v3854
      %v3887 = vsub.f32 0.0, %v3855
      %v3888 = vsub.f32 0.0, %v3856
      %v3889 = vsub.f32 0.0, %v3857
      %v3890 = vsub.f32 0.0, %v3858
      %v3891 = vsub.f32 0.0, %v3859
      %v3892 = vsub.f32 0.0, %v3860
      %v3893 = vsub.f32 0.0, %v3861
      %v3894 = vsub.f32 0.0, %v3862
      %v3895 = vsub.f32 0.0, %v3863
      %v3896 = vsub.f32 0.0, %v3864
      %v3897 = vsub.f32 0.0, %v3865
      %v3898 = vsub.f32 0.0, %v3866
      %v3899 = vmul.f32 %v3867, 1.442695
      %v3900 = vpow.pop %v3899
      %v3901 = vmul.f32 %v3868, 1.442695
      %v3902 = vpow.pop %v3901
      %v3903 = vmul.f32 %v3869, 1.442695
      %v3904 = vpow.pop %v3903
      %v3905 = vmul.f32 %v3870, 1.442695
      %v3906 = vpow.pop %v3905
      %v3907 = vmul.f32 %v3871, 1.442695
      %v3908 = vpow.pop %v3907
      %v3909 = vmul.f32 %v3872, 1.442695
      %v3910 = vpow.pop %v3909
      %v3911 = vmul.f32 %v3873, 1.442695
      %v3912 = vpow.pop %v3911
      %v3913 = vmul.f32 %v3874, 1.442695
      %v3914 = vpow.pop %v3913
      %v3915 = vmul.f32 %v3875, 1.442695
      %v3916 = vpow.pop %v3915
      %v3917 = vmul.f32 %v3876, 1.442695
      %v3918 = vpow.pop %v3917
      %v3919 = vmul.f32 %v3877, 1.442695
      %v3920 = vpow.pop %v3919
      %v3921 = vmul.f32 %v3878, 1.442695
      %v3922 = vpow.pop %v3921
      %v3923 = vmul.f32 %v3879, 1.442695
      %v3924 = vpow.pop %v3923
      %v3925 = vmul.f32 %v3880, 1.442695
      %v3926 = vpow.pop %v3925
      %v3927 = vmul.f32 %v3881, 1.442695
      %v3928 = vpow.pop %v3927
      %v3929 = vmul.f32 %v3882, 1.442695
      %v3930 = vpow.pop %v3929
      %v3931 = vmul.f32 %v3883, 1.442695
      %v3932 = vpow.pop %v3931
      %v3933 = vmul.f32 %v3884, 1.442695
      %v3934 = vpow.pop %v3933
      %v3935 = vmul.f32 %v3885, 1.442695
      %v3936 = vpow.pop %v3935
      %v3937 = vmul.f32 %v3886, 1.442695
      %v3938 = vpow.pop %v3937
      %v3939 = vmul.f32 %v3887, 1.442695
      %v3940 = vpow.pop %v3939
      %v3941 = vmul.f32 %v3888, 1.442695
      %v3942 = vpow.pop %v3941
      %v3943 = vmul.f32 %v3889, 1.442695
      %v3944 = vpow.pop %v3943
      %v3945 = vmul.f32 %v3890, 1.442695
      %v3946 = vpow.pop %v3945
      %v3947 = vmul.f32 %v3891, 1.442695
      %v3948 = vpow.pop %v3947
      %v3949 = vmul.f32 %v3892, 1.442695
      %v3950 = vpow.pop %v3949
      %v3951 = vmul.f32 %v3893, 1.442695
      %v3952 = vpow.pop %v3951
      %v3953 = vmul.f32 %v3894, 1.442695
      %v3954 = vpow.pop %v3953
      %v3955 = vmul.f32 %v3895, 1.442695
      %v3956 = vpow.pop %v3955
      %v3957 = vmul.f32 %v3896, 1.442695
      %v3958 = vpow.pop %v3957
      %v3959 = vmul.f32 %v3897, 1.442695
      %v3960 = vpow.pop %v3959
      %v3961 = vmul.f32 %v3898, 1.442695
      %v3962 = vpow.pop %v3961
      %v3963 = vadd.f32 %v3900, 1.0
      %v3964 = vadd.f32 %v3902, 1.0
      %v3965 = vadd.f32 %v3904, 1.0
      %v3966 = vadd.f32 %v3906, 1.0
      %v3967 = vadd.f32 %v3908, 1.0
      %v3968 = vadd.f32 %v3910, 1.0
      %v3969 = vadd.f32 %v3912, 1.0
      %v3970 = vadd.f32 %v3914, 1.0
      %v3971 = vadd.f32 %v3916, 1.0
      %v3972 = vadd.f32 %v3918, 1.0
      %v3973 = vadd.f32 %v3920, 1.0
      %v3974 = vadd.f32 %v3922, 1.0
      %v3975 = vadd.f32 %v3924, 1.0
      %v3976 = vadd.f32 %v3926, 1.0
      %v3977 = vadd.f32 %v3928, 1.0
      %v3978 = vadd.f32 %v3930, 1.0
      %v3979 = vadd.f32 %v3932, 1.0
      %v3980 = vadd.f32 %v3934, 1.0
      %v3981 = vadd.f32 %v3936, 1.0
      %v3982 = vadd.f32 %v3938, 1.0
      %v3983 = vadd.f32 %v3940, 1.0
      %v3984 = vadd.f32 %v3942, 1.0
      %v3985 = vadd.f32 %v3944, 1.0
      %v3986 = vadd.f32 %v3946, 1.0
      %v3987 = vadd.f32 %v3948, 1.0
      %v3988 = vadd.f32 %v3950, 1.0
      %v3989 = vadd.f32 %v3952, 1.0
      %v3990 = vadd.f32 %v3954, 1.0
      %v3991 = vadd.f32 %v3956, 1.0
      %v3992 = vadd.f32 %v3958, 1.0
      %v3993 = vadd.f32 %v3960, 1.0
      %v3994 = vadd.f32 %v3962, 1.0
      %v3995 = vrcp.pop %v3963
      %v3996 = vmul.f32 1.0, %v3995
      %v3997 = vrcp.pop %v3964
      %v3998 = vmul.f32 1.0, %v3997
      %v3999 = vrcp.pop %v3965
      %v4000 = vmul.f32 1.0, %v3999
      %v4001 = vrcp.pop %v3966
      %v4002 = vmul.f32 1.0, %v4001
      %v4003 = vrcp.pop %v3967
      %v4004 = vmul.f32 1.0, %v4003
      %v4005 = vrcp.pop %v3968
      %v4006 = vmul.f32 1.0, %v4005
      %v4007 = vrcp.pop %v3969
      %v4008 = vmul.f32 1.0, %v4007
      %v4009 = vrcp.pop %v3970
      %v4010 = vmul.f32 1.0, %v4009
      %v4011 = vrcp.pop %v3971
      %v4012 = vmul.f32 1.0, %v4011
      %v4013 = vrcp.pop %v3972
      %v4014 = vmul.f32 1.0, %v4013
      %v4015 = vrcp.pop %v3973
      %v4016 = vmul.f32 1.0, %v4015
      %v4017 = vrcp.pop %v3974
      %v4018 = vmul.f32 1.0, %v4017
      %v4019 = vrcp.pop %v3975
      %v4020 = vmul.f32 1.0, %v4019
      %v4021 = vrcp.pop %v3976
      %v4022 = vmul.f32 1.0, %v4021
      %v4023 = vrcp.pop %v3977
      %v4024 = vmul.f32 1.0, %v4023
      %v4025 = vrcp.pop %v3978
      %v4026 = vmul.f32 1.0, %v4025
      %v4027 = vrcp.pop %v3979
      %v4028 = vmul.f32 1.0, %v4027
      %v4029 = vrcp.pop %v3980
      %v4030 = vmul.f32 1.0, %v4029
      %v4031 = vrcp.pop %v3981
      %v4032 = vmul.f32 1.0, %v4031
      %v4033 = vrcp.pop %v3982
      %v4034 = vmul.f32 1.0, %v4033
      %v4035 = vrcp.pop %v3983
      %v4036 = vmul.f32 1.0, %v4035
      %v4037 = vrcp.pop %v3984
      %v4038 = vmul.f32 1.0, %v4037
      %v4039 = vrcp.pop %v3985
      %v4040 = vmul.f32 1.0, %v4039
      %v4041 = vrcp.pop %v3986
      %v4042 = vmul.f32 1.0, %v4041
      %v4043 = vrcp.pop %v3987
      %v4044 = vmul.f32 1.0, %v4043
      %v4045 = vrcp.pop %v3988
      %v4046 = vmul.f32 1.0, %v4045
      %v4047 = vrcp.pop %v3989
      %v4048 = vmul.f32 1.0, %v4047
      %v4049 = vrcp.pop %v3990
      %v4050 = vmul.f32 1.0, %v4049
      %v4051 = vrcp.pop %v3991
      %v4052 = vmul.f32 1.0, %v4051
      %v4053 = vrcp.pop %v3992
      %v4054 = vmul.f32 1.0, %v4053
      %v4055 = vrcp.pop %v3993
      %v4056 = vmul.f32 1.0, %v4055
      %v4057 = vrcp.pop %v3994
      %v4058 = vmul.f32 1.0, %v4057
      %v4059 = vld [vmem:[%s493] sm:$0xff]
      %v4060 = vld [vmem:[%s493 + $0x8] sm:$0xff]
      %v4061 = vld [vmem:[%s493 + $0x10] sm:$0xff]
      %v4062 = vld [vmem:[%s493 + $0x18] sm:$0xff]
      %v4063 = vld [vmem:[%s493 + $0x20] sm:$0xff]
      %v4064 = vld [vmem:[%s493 + $0x28] sm:$0xff]
      %v4065 = vld [vmem:[%s493 + $0x30] sm:$0xff]
      %v4066 = vld [vmem:[%s493 + $0x38] sm:$0xff]
      %v4067 = vld [vmem:[%s493 + $0x40] sm:$0xff]
      %v4068 = vld [vmem:[%s493 + $0x48] sm:$0xff]
      %v4069 = vld [vmem:[%s493 + $0x50] sm:$0xff]
      %v4070 = vld [vmem:[%s493 + $0x58] sm:$0xff]
      %v4071 = vld [vmem:[%s493 + $0x60] sm:$0xff]
      %v4072 = vld [vmem:[%s493 + $0x68] sm:$0xff]
      %v4073 = vld [vmem:[%s493 + $0x70] sm:$0xff]
      %v4074 = vld [vmem:[%s493 + $0x78] sm:$0xff]
      %v4075 = vld [vmem:[%s493 + $0x80] sm:$0xff]
      %v4076 = vld [vmem:[%s493 + $0x88] sm:$0xff]
      %v4077 = vld [vmem:[%s493 + $0x90] sm:$0xff]
      %v4078 = vld [vmem:[%s493 + $0x98] sm:$0xff]
      %v4079 = vld [vmem:[%s493 + $0xa0] sm:$0xff]
      %v4080 = vld [vmem:[%s493 + $0xa8] sm:$0xff]
      %v4081 = vld [vmem:[%s493 + $0xb0] sm:$0xff]
      %v4082 = vld [vmem:[%s493 + $0xb8] sm:$0xff]
      %v4083 = vld [vmem:[%s493 + $0xc0] sm:$0xff]
      %v4084 = vld [vmem:[%s493 + $0xc8] sm:$0xff]
      %v4085 = vld [vmem:[%s493 + $0xd0] sm:$0xff]
      %v4086 = vld [vmem:[%s493 + $0xd8] sm:$0xff]
      %v4087 = vld [vmem:[%s493 + $0xe0] sm:$0xff]
      %v4088 = vld [vmem:[%s493 + $0xe8] sm:$0xff]
      %v4089 = vld [vmem:[%s493 + $0xf0] sm:$0xff]
      %v4090 = vld [vmem:[%s493 + $0xf8] sm:$0xff]
      %v4091 = vld [vmem:[%s12] sm:$0xff]
      %v4092 = vld [vmem:[%s12 + $0x8] sm:$0xff]
      %v4093 = vld [vmem:[%s12 + $0x10] sm:$0xff]
      %v4094 = vld [vmem:[%s12 + $0x18] sm:$0xff]
      %v4096 = vsel %vm559, %v4059, 0
      %v4099 = vsel %vm559, %v4060, 0
      %v4102 = vsel %vm559, %v4061, 0
      %v4105 = vsel %vm559, %v4062, 0
      %v4108 = vsel %vm559, %v4063, 0
      %v4111 = vsel %vm559, %v4064, 0
      %v4114 = vsel %vm559, %v4065, 0
      %v4117 = vsel %vm559, %v4066, 0
      %v4120 = vsel %vm559, %v4067, 0
      %v4123 = vsel %vm559, %v4068, 0
      %v4126 = vsel %vm559, %v4069, 0
      %v4129 = vsel %vm559, %v4070, 0
      %v4132 = vsel %vm559, %v4071, 0
      %v4135 = vsel %vm559, %v4072, 0
      %v4138 = vsel %vm559, %v4073, 0
      %v4141 = vsel %vm559, %v4074, 0
      %v4144 = vsel %vm559, %v4075, 0
      %v4147 = vsel %vm559, %v4076, 0
      %v4150 = vsel %vm559, %v4077, 0
      %v4153 = vsel %vm559, %v4078, 0
      %v4156 = vsel %vm559, %v4079, 0
      %v4159 = vsel %vm559, %v4080, 0
      %v4162 = vsel %vm559, %v4081, 0
      %v4165 = vsel %vm559, %v4082, 0
      %v4168 = vsel %vm559, %v4083, 0
      %v4171 = vsel %vm559, %v4084, 0
      %v4174 = vsel %vm559, %v4085, 0
      %v4177 = vsel %vm559, %v4086, 0
      %v4180 = vsel %vm559, %v4087, 0
      %v4183 = vsel %vm559, %v4088, 0
      %v4186 = vsel %vm559, %v4089, 0
      %v4189 = vsel %vm559, %v4090, 0
      %4191 = vmatprep.subr.mxu0 0.0
      %4192 = vmatpush1.msra.mxu0 0.0
      %4193 = vmatprep.subr.mxu0 0.0
      %4194 = vmatpush1.msra.mxu0 0.0
      %4195 = vmatprep.subr.mxu0 0.0
      %4196 = vmatpush1.msra.mxu0 0.0
      %4197 = vmatprep.subr.mxu0 0.0
      %4198 = vmatpush1.msra.mxu0 0.0
      %4199 = vmatprep.subr.mxu0 0.0
      %4200 = vmatpush1.msra.mxu0 0.0
      %4201 = vmatprep.subr.mxu0 0.0
      %4202 = vmatpush1.msra.mxu0 0.0
      %4203 = vmatprep.subr.mxu0 0.0
      %4204 = vmatpush1.msra.mxu0 0.0
      %4205 = vmatprep.subr.mxu0 0.0
      %4206 = vmatpush1.msra.mxu0 0.0
      %4207 = vmatprep.subr.mxu0 0.0
      %4208 = vmatpush1.msra.mxu0 0.0
      %4209 = vmatprep.subr.mxu0 0.0
      %4210 = vmatpush1.msra.mxu0 0.0
      %4211 = vmatprep.subr.mxu0 0.0
      %4212 = vmatpush1.msra.mxu0 0.0
      %4213 = vmatprep.subr.mxu0 0.0
      %4214 = vmatpush1.msra.mxu0 0.0
      %4215 = vmatprep.subr.mxu0 0.0
      %4216 = vmatpush1.msra.mxu0 %v4094
      %4217 = vmatprep.subr.mxu0 0.0
      %4218 = vmatpush1.msra.mxu0 %v4093
      %4219 = vmatprep.subr.mxu0 0.0
      %4220 = vmatpush1.msra.mxu0 %v4092
      %4221 = vmatprep.subr.mxu0 0.0
      %4222 = vmatpush1.msra.mxu0 %v4091
      %4223 = vmatprep.subr.mxu0 0.0
      %4224 = vmatpush2.msra.mxu0 0.0
      %4225 = vmatprep.subr.mxu0 0.0
      %4226 = vmatpush2.msra.mxu0 0.0
      %4227 = vmatprep.subr.mxu0 0.0
      %4228 = vmatpush2.msra.mxu0 0.0
      %4229 = vmatprep.subr.mxu0 0.0
      %4230 = vmatpush2.msra.mxu0 0.0
      %4231 = vmatprep.subr.mxu0 0.0
      %4232 = vmatpush2.msra.mxu0 0.0
      %4233 = vmatprep.subr.mxu0 0.0
      %4234 = vmatpush2.msra.mxu0 0.0
      %4235 = vmatprep.subr.mxu0 0.0
      %4236 = vmatpush2.msra.mxu0 0.0
      %4237 = vmatprep.subr.mxu0 0.0
      %4238 = vmatpush2.msra.mxu0 0.0
      %4239 = vmatprep.subr.mxu0 0.0
      %4240 = vmatpush2.msra.mxu0 0.0
      %4241 = vmatprep.subr.mxu0 0.0
      %4242 = vmatpush2.msra.mxu0 0.0
      %4243 = vmatprep.subr.mxu0 0.0
      %4244 = vmatpush2.msra.mxu0 0.0
      %4245 = vmatprep.subr.mxu0 0.0
      %4246 = vmatpush2.msra.mxu0 0.0
      %4247 = vmatprep.subr.mxu0 0.0
      %4248 = vmatpush2.msra.mxu0 0.0
      %4249 = vmatprep.subr.mxu0 0.0
      %4250 = vmatpush2.msra.mxu0 0.0
      %4251 = vmatprep.subr.mxu0 0.0
      %4252 = vmatpush2.msra.mxu0 0.0
      %4253 = vmatprep.subr.mxu0 0.0
      %4254 = vmatpush2.msra.mxu0 0.0
      %4255 = vmatprep.mubr.f32.mxu0 0.0
      %4256 = vmatmul.mubr.f32.gmra.mxu0 %v4096
      %v4257 = vpop.f32.mrf.mxu0
      %v4258 = vadd.f32 %v3677, %v4257
      %v4259 = vpop.f32.mrf.mxu0
      %4260 = vmatprep.mubr.f32.mxu0 0.0
      %4261 = vmatmul.mubr.f32.gmra.mxu0 %v4099
      %v4262 = vpop.f32.mrf.mxu0
      %v4263 = vadd.f32 %v3682, %v4262
      %v4264 = vpop.f32.mrf.mxu0
      %4265 = vmatprep.mubr.f32.mxu0 0.0
      %4266 = vmatmul.mubr.f32.gmra.mxu0 %v4102
      %v4267 = vpop.f32.mrf.mxu0
      %v4268 = vadd.f32 %v3687, %v4267
      %v4269 = vpop.f32.mrf.mxu0
      %4270 = vmatprep.mubr.f32.mxu0 0.0
      %4271 = vmatmul.mubr.f32.gmra.mxu0 %v4105
      %v4272 = vpop.f32.mrf.mxu0
      %v4273 = vadd.f32 %v3692, %v4272
      %v4274 = vpop.f32.mrf.mxu0
      %4275 = vmatprep.mubr.f32.mxu0 0.0
      %4276 = vmatmul.mubr.f32.gmra.mxu0 %v4108
      %v4277 = vpop.f32.mrf.mxu0
      %v4278 = vadd.f32 %v3697, %v4277
      %v4279 = vpop.f32.mrf.mxu0
      %4280 = vmatprep.mubr.f32.mxu0 0.0
      %4281 = vmatmul.mubr.f32.gmra.mxu0 %v4111
      %v4282 = vpop.f32.mrf.mxu0
      %v4283 = vadd.f32 %v3702, %v4282
      %v4284 = vpop.f32.mrf.mxu0
      %4285 = vmatprep.mubr.f32.mxu0 0.0
      %4286 = vmatmul.mubr.f32.gmra.mxu0 %v4114
      %v4287 = vpop.f32.mrf.mxu0
      %v4288 = vadd.f32 %v3707, %v4287
      %v4289 = vpop.f32.mrf.mxu0
      %4290 = vmatprep.mubr.f32.mxu0 0.0
      %4291 = vmatmul.mubr.f32.gmra.mxu0 %v4117
      %v4292 = vpop.f32.mrf.mxu0
      %v4293 = vadd.f32 %v3712, %v4292
      %v4294 = vpop.f32.mrf.mxu0
      %4295 = vmatprep.mubr.f32.mxu0 0.0
      %4296 = vmatmul.mubr.f32.gmra.mxu0 %v4120
      %v4297 = vpop.f32.mrf.mxu0
      %v4298 = vadd.f32 %v3717, %v4297
      %v4299 = vpop.f32.mrf.mxu0
      %4300 = vmatprep.mubr.f32.mxu0 0.0
      %4301 = vmatmul.mubr.f32.gmra.mxu0 %v4123
      %v4302 = vpop.f32.mrf.mxu0
      %v4303 = vadd.f32 %v3722, %v4302
      %v4304 = vpop.f32.mrf.mxu0
      %4305 = vmatprep.mubr.f32.mxu0 0.0
      %4306 = vmatmul.mubr.f32.gmra.mxu0 %v4126
      %v4307 = vpop.f32.mrf.mxu0
      %v4308 = vadd.f32 %v3727, %v4307
      %v4309 = vpop.f32.mrf.mxu0
      %4310 = vmatprep.mubr.f32.mxu0 0.0
      %4311 = vmatmul.mubr.f32.gmra.mxu0 %v4129
      %v4312 = vpop.f32.mrf.mxu0
      %v4313 = vadd.f32 %v3732, %v4312
      %v4314 = vpop.f32.mrf.mxu0
      %4315 = vmatprep.mubr.f32.mxu0 0.0
      %4316 = vmatmul.mubr.f32.gmra.mxu0 %v4132
      %v4317 = vpop.f32.mrf.mxu0
      %v4318 = vadd.f32 %v3737, %v4317
      %v4319 = vpop.f32.mrf.mxu0
      %4320 = vmatprep.mubr.f32.mxu0 0.0
      %4321 = vmatmul.mubr.f32.gmra.mxu0 %v4135
      %v4322 = vpop.f32.mrf.mxu0
      %v4323 = vadd.f32 %v3742, %v4322
      %v4324 = vpop.f32.mrf.mxu0
      %4325 = vmatprep.mubr.f32.mxu0 0.0
      %4326 = vmatmul.mubr.f32.gmra.mxu0 %v4138
      %v4327 = vpop.f32.mrf.mxu0
      %v4328 = vadd.f32 %v3747, %v4327
      %v4329 = vpop.f32.mrf.mxu0
      %4330 = vmatprep.mubr.f32.mxu0 0.0
      %4331 = vmatmul.mubr.f32.gmra.mxu0 %v4141
      %v4332 = vpop.f32.mrf.mxu0
      %v4333 = vadd.f32 %v3752, %v4332
      %v4334 = vpop.f32.mrf.mxu0
      %4335 = vmatprep.mubr.f32.mxu0 0.0
      %4336 = vmatmul.mubr.f32.gmra.mxu0 %v4144
      %v4337 = vpop.f32.mrf.mxu0
      %v4338 = vadd.f32 %v3757, %v4337
      %v4339 = vpop.f32.mrf.mxu0
      %4340 = vmatprep.mubr.f32.mxu0 0.0
      %4341 = vmatmul.mubr.f32.gmra.mxu0 %v4147
      %v4342 = vpop.f32.mrf.mxu0
      %v4343 = vadd.f32 %v3762, %v4342
      %v4344 = vpop.f32.mrf.mxu0
      %4345 = vmatprep.mubr.f32.mxu0 0.0
      %4346 = vmatmul.mubr.f32.gmra.mxu0 %v4150
      %v4347 = vpop.f32.mrf.mxu0
      %v4348 = vadd.f32 %v3767, %v4347
      %v4349 = vpop.f32.mrf.mxu0
      %4350 = vmatprep.mubr.f32.mxu0 0.0
      %4351 = vmatmul.mubr.f32.gmra.mxu0 %v4153
      %v4352 = vpop.f32.mrf.mxu0
      %v4353 = vadd.f32 %v3772, %v4352
      %v4354 = vpop.f32.mrf.mxu0
      %4355 = vmatprep.mubr.f32.mxu0 0.0
      %4356 = vmatmul.mubr.f32.gmra.mxu0 %v4156
      %v4357 = vpop.f32.mrf.mxu0
      %v4358 = vadd.f32 %v3777, %v4357
      %v4359 = vpop.f32.mrf.mxu0
      %4360 = vmatprep.mubr.f32.mxu0 0.0
      %4361 = vmatmul.mubr.f32.gmra.mxu0 %v4159
      %v4362 = vpop.f32.mrf.mxu0
      %v4363 = vadd.f32 %v3782, %v4362
      %v4364 = vpop.f32.mrf.mxu0
      %4365 = vmatprep.mubr.f32.mxu0 0.0
      %4366 = vmatmul.mubr.f32.gmra.mxu0 %v4162
      %v4367 = vpop.f32.mrf.mxu0
      %v4368 = vadd.f32 %v3787, %v4367
      %v4369 = vpop.f32.mrf.mxu0
      %4370 = vmatprep.mubr.f32.mxu0 0.0
      %4371 = vmatmul.mubr.f32.gmra.mxu0 %v4165
      %v4372 = vpop.f32.mrf.mxu0
      %v4373 = vadd.f32 %v3792, %v4372
      %v4374 = vpop.f32.mrf.mxu0
      %4375 = vmatprep.mubr.f32.mxu0 0.0
      %4376 = vmatmul.mubr.f32.gmra.mxu0 %v4168
      %v4377 = vpop.f32.mrf.mxu0
      %v4378 = vadd.f32 %v3797, %v4377
      %v4379 = vpop.f32.mrf.mxu0
      %4380 = vmatprep.mubr.f32.mxu0 0.0
      %4381 = vmatmul.mubr.f32.gmra.mxu0 %v4171
      %v4382 = vpop.f32.mrf.mxu0
      %v4383 = vadd.f32 %v3802, %v4382
      %v4384 = vpop.f32.mrf.mxu0
      %4385 = vmatprep.mubr.f32.mxu0 0.0
      %4386 = vmatmul.mubr.f32.gmra.mxu0 %v4174
      %v4387 = vpop.f32.mrf.mxu0
      %v4388 = vadd.f32 %v3807, %v4387
      %v4389 = vpop.f32.mrf.mxu0
      %4390 = vmatprep.mubr.f32.mxu0 0.0
      %4391 = vmatmul.mubr.f32.gmra.mxu0 %v4177
      %v4392 = vpop.f32.mrf.mxu0
      %v4393 = vadd.f32 %v3812, %v4392
      %v4394 = vpop.f32.mrf.mxu0
      %4395 = vmatprep.mubr.f32.mxu0 0.0
      %4396 = vmatmul.mubr.f32.gmra.mxu0 %v4180
      %v4397 = vpop.f32.mrf.mxu0
      %v4398 = vadd.f32 %v3817, %v4397
      %v4399 = vpop.f32.mrf.mxu0
      %4400 = vmatprep.mubr.f32.mxu0 0.0
      %4401 = vmatmul.mubr.f32.gmra.mxu0 %v4183
      %v4402 = vpop.f32.mrf.mxu0
      %v4403 = vadd.f32 %v3822, %v4402
      %v4404 = vpop.f32.mrf.mxu0
      %4405 = vmatprep.mubr.f32.mxu0 0.0
      %4406 = vmatmul.mubr.f32.gmra.mxu0 %v4186
      %v4407 = vpop.f32.mrf.mxu0
      %v4408 = vadd.f32 %v3827, %v4407
      %v4409 = vpop.f32.mrf.mxu0
      %4410 = vmatprep.mubr.f32.mxu0 0.0
      %4411 = vmatmul.mubr.f32.gmra.mxu0 %v4189
      %v4412 = vpop.f32.mrf.mxu0
      %v4413 = vadd.f32 %v3832, %v4412
      %v4414 = vpop.f32.mrf.mxu0
      %4415 = vdwg.mxu0
      %v4416 = vmul.f32 %v4258, %v3996
      %v4417 = vmul.f32 %v4263, %v3998
      %v4418 = vmul.f32 %v4268, %v4000
      %v4419 = vmul.f32 %v4273, %v4002
      %v4420 = vmul.f32 %v4278, %v4004
      %v4421 = vmul.f32 %v4283, %v4006
      %v4422 = vmul.f32 %v4288, %v4008
      %v4423 = vmul.f32 %v4293, %v4010
      %v4424 = vmul.f32 %v4298, %v4012
      %v4425 = vmul.f32 %v4303, %v4014
      %v4426 = vmul.f32 %v4308, %v4016
      %v4427 = vmul.f32 %v4313, %v4018
      %v4428 = vmul.f32 %v4318, %v4020
      %v4429 = vmul.f32 %v4323, %v4022
      %v4430 = vmul.f32 %v4328, %v4024
      %v4431 = vmul.f32 %v4333, %v4026
      %v4432 = vmul.f32 %v4338, %v4028
      %v4433 = vmul.f32 %v4343, %v4030
      %v4434 = vmul.f32 %v4348, %v4032
      %v4435 = vmul.f32 %v4353, %v4034
      %v4436 = vmul.f32 %v4358, %v4036
      %v4437 = vmul.f32 %v4363, %v4038
      %v4438 = vmul.f32 %v4368, %v4040
      %v4439 = vmul.f32 %v4373, %v4042
      %v4440 = vmul.f32 %v4378, %v4044
      %v4441 = vmul.f32 %v4383, %v4046
      %v4442 = vmul.f32 %v4388, %v4048
      %v4443 = vmul.f32 %v4393, %v4050
      %v4444 = vmul.f32 %v4398, %v4052
      %v4445 = vmul.f32 %v4403, %v4054
      %v4446 = vmul.f32 %v4408, %v4056
      %v4447 = vmul.f32 %v4413, %v4058
      %4448 = vst.msk [vmem:[%s499] sm:$0xff] %vm559, %v4416
      %4449 = vst.msk [vmem:[%s499 + $0x8] sm:$0xff] %vm559, %v4417
      %4450 = vst.msk [vmem:[%s499 + $0x10] sm:$0xff] %vm559, %v4418
      %4451 = vst.msk [vmem:[%s499 + $0x18] sm:$0xff] %vm559, %v4419
      %4452 = vst.msk [vmem:[%s499 + $0x20] sm:$0xff] %vm559, %v4420
      %4453 = vst.msk [vmem:[%s499 + $0x28] sm:$0xff] %vm559, %v4421
      %4454 = vst.msk [vmem:[%s499 + $0x30] sm:$0xff] %vm559, %v4422
      %4455 = vst.msk [vmem:[%s499 + $0x38] sm:$0xff] %vm559, %v4423
      %4456 = vst.msk [vmem:[%s499 + $0x40] sm:$0xff] %vm559, %v4424
      %4457 = vst.msk [vmem:[%s499 + $0x48] sm:$0xff] %vm559, %v4425
      %4458 = vst.msk [vmem:[%s499 + $0x50] sm:$0xff] %vm559, %v4426
      %4459 = vst.msk [vmem:[%s499 + $0x58] sm:$0xff] %vm559, %v4427
      %4460 = vst.msk [vmem:[%s499 + $0x60] sm:$0xff] %vm559, %v4428
      %4461 = vst.msk [vmem:[%s499 + $0x68] sm:$0xff] %vm559, %v4429
      %4462 = vst.msk [vmem:[%s499 + $0x70] sm:$0xff] %vm559, %v4430
      %4463 = vst.msk [vmem:[%s499 + $0x78] sm:$0xff] %vm559, %v4431
      %4464 = vst.msk [vmem:[%s499 + $0x80] sm:$0xff] %vm559, %v4432
      %4465 = vst.msk [vmem:[%s499 + $0x88] sm:$0xff] %vm559, %v4433
      %4466 = vst.msk [vmem:[%s499 + $0x90] sm:$0xff] %vm559, %v4434
      %4467 = vst.msk [vmem:[%s499 + $0x98] sm:$0xff] %vm559, %v4435
      %4468 = vst.msk [vmem:[%s499 + $0xa0] sm:$0xff] %vm559, %v4436
      %4469 = vst.msk [vmem:[%s499 + $0xa8] sm:$0xff] %vm559, %v4437
      %4470 = vst.msk [vmem:[%s499 + $0xb0] sm:$0xff] %vm559, %v4438
      %4471 = vst.msk [vmem:[%s499 + $0xb8] sm:$0xff] %vm559, %v4439
      %4472 = vst.msk [vmem:[%s499 + $0xc0] sm:$0xff] %vm559, %v4440
      %4473 = vst.msk [vmem:[%s499 + $0xc8] sm:$0xff] %vm559, %v4441
      %4474 = vst.msk [vmem:[%s499 + $0xd0] sm:$0xff] %vm559, %v4442
      %4475 = vst.msk [vmem:[%s499 + $0xd8] sm:$0xff] %vm559, %v4443
      %4476 = vst.msk [vmem:[%s499 + $0xe0] sm:$0xff] %vm559, %v4444
      %4477 = vst.msk [vmem:[%s499 + $0xe8] sm:$0xff] %vm559, %v4445
      %4478 = vst.msk [vmem:[%s499 + $0xf0] sm:$0xff] %vm559, %v4446
      %4479 = vst.msk [vmem:[%s499 + $0xf8] sm:$0xff] %vm559, %v4447
      %v4480 = vlog2.pop %v3996
      %v4481 = vmul.f32 %v4480, 0.6931472
      %v4482 = vlog2.pop %v3998
      %v4483 = vmul.f32 %v4482, 0.6931472
      %v4484 = vlog2.pop %v4000
      %v4485 = vmul.f32 %v4484, 0.6931472
      %v4486 = vlog2.pop %v4002
      %v4487 = vmul.f32 %v4486, 0.6931472
      %v4488 = vlog2.pop %v4004
      %v4489 = vmul.f32 %v4488, 0.6931472
      %v4490 = vlog2.pop %v4006
      %v4491 = vmul.f32 %v4490, 0.6931472
      %v4492 = vlog2.pop %v4008
      %v4493 = vmul.f32 %v4492, 0.6931472
      %v4494 = vlog2.pop %v4010
      %v4495 = vmul.f32 %v4494, 0.6931472
      %v4496 = vlog2.pop %v4012
      %v4497 = vmul.f32 %v4496, 0.6931472
      %v4498 = vlog2.pop %v4014
      %v4499 = vmul.f32 %v4498, 0.6931472
      %v4500 = vlog2.pop %v4016
      %v4501 = vmul.f32 %v4500, 0.6931472
      %v4502 = vlog2.pop %v4018
      %v4503 = vmul.f32 %v4502, 0.6931472
      %v4504 = vlog2.pop %v4020
      %v4505 = vmul.f32 %v4504, 0.6931472
      %v4506 = vlog2.pop %v4022
      %v4507 = vmul.f32 %v4506, 0.6931472
      %v4508 = vlog2.pop %v4024
      %v4509 = vmul.f32 %v4508, 0.6931472
      %v4510 = vlog2.pop %v4026
      %v4511 = vmul.f32 %v4510, 0.6931472
      %v4512 = vlog2.pop %v4028
      %v4513 = vmul.f32 %v4512, 0.6931472
      %v4514 = vlog2.pop %v4030
      %v4515 = vmul.f32 %v4514, 0.6931472
      %v4516 = vlog2.pop %v4032
      %v4517 = vmul.f32 %v4516, 0.6931472
      %v4518 = vlog2.pop %v4034
      %v4519 = vmul.f32 %v4518, 0.6931472
      %v4520 = vlog2.pop %v4036
      %v4521 = vmul.f32 %v4520, 0.6931472
      %v4522 = vlog2.pop %v4038
      %v4523 = vmul.f32 %v4522, 0.6931472
      %v4524 = vlog2.pop %v4040
      %v4525 = vmul.f32 %v4524, 0.6931472
      %v4526 = vlog2.pop %v4042
      %v4527 = vmul.f32 %v4526, 0.6931472
      %v4528 = vlog2.pop %v4044
      %v4529 = vmul.f32 %v4528, 0.6931472
      %v4530 = vlog2.pop %v4046
      %v4531 = vmul.f32 %v4530, 0.6931472
      %v4532 = vlog2.pop %v4048
      %v4533 = vmul.f32 %v4532, 0.6931472
      %v4534 = vlog2.pop %v4050
      %v4535 = vmul.f32 %v4534, 0.6931472
      %v4536 = vlog2.pop %v4052
      %v4537 = vmul.f32 %v4536, 0.6931472
      %v4538 = vlog2.pop %v4054
      %v4539 = vmul.f32 %v4538, 0.6931472
      %v4540 = vlog2.pop %v4056
      %v4541 = vmul.f32 %v4540, 0.6931472
      %v4542 = vlog2.pop %v4058
      %v4543 = vmul.f32 %v4542, 0.6931472
      %v4544 = vsel %vm559, %v4481, 0.0
      %4545 = vadd.xlane.f32.xlu0 %v4544
      %v4546 = vpop.xlane.xlu0 %4545
      %v4547 = vsel %vm559, %v4483, 0.0
      %4548 = vadd.xlane.f32.xlu0 %v4547
      %v4549 = vpop.xlane.xlu0 %4548
      %v4550 = vsel %vm559, %v4485, 0.0
      %4551 = vadd.xlane.f32.xlu0 %v4550
      %v4552 = vpop.xlane.xlu0 %4551
      %v4553 = vsel %vm559, %v4487, 0.0
      %4554 = vadd.xlane.f32.xlu0 %v4553
      %v4555 = vpop.xlane.xlu0 %4554
      %v4556 = vsel %vm559, %v4489, 0.0
      %4557 = vadd.xlane.f32.xlu0 %v4556
      %v4558 = vpop.xlane.xlu0 %4557
      %v4559 = vsel %vm559, %v4491, 0.0
      %4560 = vadd.xlane.f32.xlu0 %v4559
      %v4561 = vpop.xlane.xlu0 %4560
      %v4562 = vsel %vm559, %v4493, 0.0
      %4563 = vadd.xlane.f32.xlu0 %v4562
      %v4564 = vpop.xlane.xlu0 %4563
      %v4565 = vsel %vm559, %v4495, 0.0
      %4566 = vadd.xlane.f32.xlu0 %v4565
      %v4567 = vpop.xlane.xlu0 %4566
      %v4568 = vsel %vm559, %v4497, 0.0
      %4569 = vadd.xlane.f32.xlu0 %v4568
      %v4570 = vpop.xlane.xlu0 %4569
      %v4571 = vsel %vm559, %v4499, 0.0
      %4572 = vadd.xlane.f32.xlu0 %v4571
      %v4573 = vpop.xlane.xlu0 %4572
      %v4574 = vsel %vm559, %v4501, 0.0
      %4575 = vadd.xlane.f32.xlu0 %v4574
      %v4576 = vpop.xlane.xlu0 %4575
      %v4577 = vsel %vm559, %v4503, 0.0
      %4578 = vadd.xlane.f32.xlu0 %v4577
      %v4579 = vpop.xlane.xlu0 %4578
      %v4580 = vsel %vm559, %v4505, 0.0
      %4581 = vadd.xlane.f32.xlu0 %v4580
      %v4582 = vpop.xlane.xlu0 %4581
      %v4583 = vsel %vm559, %v4507, 0.0
      %4584 = vadd.xlane.f32.xlu0 %v4583
      %v4585 = vpop.xlane.xlu0 %4584
      %v4586 = vsel %vm559, %v4509, 0.0
      %4587 = vadd.xlane.f32.xlu0 %v4586
      %v4588 = vpop.xlane.xlu0 %4587
      %v4589 = vsel %vm559, %v4511, 0.0
      %4590 = vadd.xlane.f32.xlu0 %v4589
      %v4591 = vpop.xlane.xlu0 %4590
      %v4592 = vsel %vm559, %v4513, 0.0
      %4593 = vadd.xlane.f32.xlu0 %v4592
      %v4594 = vpop.xlane.xlu0 %4593
      %v4595 = vsel %vm559, %v4515, 0.0
      %4596 = vadd.xlane.f32.xlu0 %v4595
      %v4597 = vpop.xlane.xlu0 %4596
      %v4598 = vsel %vm559, %v4517, 0.0
      %4599 = vadd.xlane.f32.xlu0 %v4598
      %v4600 = vpop.xlane.xlu0 %4599
      %v4601 = vsel %vm559, %v4519, 0.0
      %4602 = vadd.xlane.f32.xlu0 %v4601
      %v4603 = vpop.xlane.xlu0 %4602
      %v4604 = vsel %vm559, %v4521, 0.0
      %4605 = vadd.xlane.f32.xlu0 %v4604
      %v4606 = vpop.xlane.xlu0 %4605
      %v4607 = vsel %vm559, %v4523, 0.0
      %4608 = vadd.xlane.f32.xlu0 %v4607
      %v4609 = vpop.xlane.xlu0 %4608
      %v4610 = vsel %vm559, %v4525, 0.0
      %4611 = vadd.xlane.f32.xlu0 %v4610
      %v4612 = vpop.xlane.xlu0 %4611
      %v4613 = vsel %vm559, %v4527, 0.0
      %4614 = vadd.xlane.f32.xlu0 %v4613
      %v4615 = vpop.xlane.xlu0 %4614
      %v4616 = vsel %vm559, %v4529, 0.0
      %4617 = vadd.xlane.f32.xlu0 %v4616
      %v4618 = vpop.xlane.xlu0 %4617
      %v4619 = vsel %vm559, %v4531, 0.0
      %4620 = vadd.xlane.f32.xlu0 %v4619
      %v4621 = vpop.xlane.xlu0 %4620
      %v4622 = vsel %vm559, %v4533, 0.0
      %4623 = vadd.xlane.f32.xlu0 %v4622
      %v4624 = vpop.xlane.xlu0 %4623
      %v4625 = vsel %vm559, %v4535, 0.0
      %4626 = vadd.xlane.f32.xlu0 %v4625
      %v4627 = vpop.xlane.xlu0 %4626
      %v4628 = vsel %vm559, %v4537, 0.0
      %4629 = vadd.xlane.f32.xlu0 %v4628
      %v4630 = vpop.xlane.xlu0 %4629
      %v4631 = vsel %vm559, %v4539, 0.0
      %4632 = vadd.xlane.f32.xlu0 %v4631
      %v4633 = vpop.xlane.xlu0 %4632
      %v4634 = vsel %vm559, %v4541, 0.0
      %4635 = vadd.xlane.f32.xlu0 %v4634
      %v4636 = vpop.xlane.xlu0 %4635
      %v4637 = vsel %vm559, %v4543, 0.0
      %4638 = vadd.xlane.f32.xlu0 %v4637
      %v4639 = vpop.xlane.xlu0 %4638
      %vm4640 = vcmask 7168
      %4641 = vst.msk [vmem:[%s505] sm:$0xff] %vm4640, %v4546
      %4642 = vst.msk [vmem:[%s505 + $0x8] sm:$0xff] %vm4640, %v4549
      %4643 = vst.msk [vmem:[%s505 + $0x10] sm:$0xff] %vm4640, %v4552
      %4644 = vst.msk [vmem:[%s505 + $0x18] sm:$0xff] %vm4640, %v4555
      %4645 = vst.msk [vmem:[%s505 + $0x20] sm:$0xff] %vm4640, %v4558
      %4646 = vst.msk [vmem:[%s505 + $0x28] sm:$0xff] %vm4640, %v4561
      %4647 = vst.msk [vmem:[%s505 + $0x30] sm:$0xff] %vm4640, %v4564
      %4648 = vst.msk [vmem:[%s505 + $0x38] sm:$0xff] %vm4640, %v4567
      %4649 = vst.msk [vmem:[%s505 + $0x40] sm:$0xff] %vm4640, %v4570
      %4650 = vst.msk [vmem:[%s505 + $0x48] sm:$0xff] %vm4640, %v4573
      %4651 = vst.msk [vmem:[%s505 + $0x50] sm:$0xff] %vm4640, %v4576
      %4652 = vst.msk [vmem:[%s505 + $0x58] sm:$0xff] %vm4640, %v4579
      %4653 = vst.msk [vmem:[%s505 + $0x60] sm:$0xff] %vm4640, %v4582
      %4654 = vst.msk [vmem:[%s505 + $0x68] sm:$0xff] %vm4640, %v4585
      %4655 = vst.msk [vmem:[%s505 + $0x70] sm:$0xff] %vm4640, %v4588
      %4656 = vst.msk [vmem:[%s505 + $0x78] sm:$0xff] %vm4640, %v4591
      %4657 = vst.msk [vmem:[%s505 + $0x80] sm:$0xff] %vm4640, %v4594
      %4658 = vst.msk [vmem:[%s505 + $0x88] sm:$0xff] %vm4640, %v4597
      %4659 = vst.msk [vmem:[%s505 + $0x90] sm:$0xff] %vm4640, %v4600
      %4660 = vst.msk [vmem:[%s505 + $0x98] sm:$0xff] %vm4640, %v4603
      %4661 = vst.msk [vmem:[%s505 + $0xa0] sm:$0xff] %vm4640, %v4606
      %4662 = vst.msk [vmem:[%s505 + $0xa8] sm:$0xff] %vm4640, %v4609
      %4663 = vst.msk [vmem:[%s505 + $0xb0] sm:$0xff] %vm4640, %v4612
      %4664 = vst.msk [vmem:[%s505 + $0xb8] sm:$0xff] %vm4640, %v4615
      %4665 = vst.msk [vmem:[%s505 + $0xc0] sm:$0xff] %vm4640, %v4618
      %4666 = vst.msk [vmem:[%s505 + $0xc8] sm:$0xff] %vm4640, %v4621
      %4667 = vst.msk [vmem:[%s505 + $0xd0] sm:$0xff] %vm4640, %v4624
      %4668 = vst.msk [vmem:[%s505 + $0xd8] sm:$0xff] %vm4640, %v4627
      %4669 = vst.msk [vmem:[%s505 + $0xe0] sm:$0xff] %vm4640, %v4630
      %4670 = vst.msk [vmem:[%s505 + $0xe8] sm:$0xff] %vm4640, %v4633
      %4671 = vst.msk [vmem:[%s505 + $0xf0] sm:$0xff] %vm4640, %v4636
      %4672 = vst.msk [vmem:[%s505 + $0xf8] sm:$0xff] %vm4640, %v4639
      %s4673 = smul.u32 32, %s26
      %p4674 = scmp.lt.s32.totalorder %s4673, 63
      %s4675 = scalar_select %p4674, %s4673, 63
      %s4676 = smul.addr %s4675, 8
      %s4677 = scalar_lea.vmem %s13, %s4676
      %s4678 = smul.u32 32, %s26
      %p4679 = scmp.lt.s32.totalorder %s4678, 63
      %s4680 = scalar_select %p4679, %s4678, 63
      %s4681 = smul.addr %s4680, 8
      %s4682 = scalar_lea.vmem %s14, %s4681
      // Predicated region
      $region73: #{tpu_custom_call.1} parent=71 // pred_check
        %p4683 = pneg %p327
      $region74: #{tpu_custom_call.1} parent=71 // pred_check_branch
        %4685 = sbr.rel (%p4683) target = $region76
      $region75: #{tpu_custom_call.1} parent=71 // pred_region
        %s4686 = smul.u32 32, %s26
      $region76: #{tpu_custom_call.1} parent=71 // pred_fallthru
        _
      // Predicated region
      $region77: #{tpu_custom_call.1} parent=71 // pred_check
        %p4687 = pneg %p353
      $region78: #{tpu_custom_call.1} parent=71 // pred_check_branch
        %4689 = sbr.rel (%p4687) target = $region80
      $region79: #{tpu_custom_call.1} parent=71 // pred_region
        %s4690 = smul.u32 32, %s26
      $region80: #{tpu_custom_call.1} parent=71 // pred_fallthru
        _
    $region72: #{tpu_custom_call.1} parent=5 // pred_fallthru
      _
    %p4691 = scmp.le.s32.totalorder 2, %s21
    // Predicated region
    $region81: #{tpu_custom_call.1} parent=5 // pred_check
      %p4692 = pneg %p4691
    $region82: #{tpu_custom_call.1} parent=5 // pred_check_branch
      %4694 = sbr.rel (%p4692) target = $region84
    $region83: #{tpu_custom_call.1} parent=5 // pred_region
      %s4695 = ssub.s32 %s21, 2
      // Predicated region
      $region85: #{tpu_custom_call.1} parent=83 // pred_check
        %p4696 = pneg %p333
      $region86: #{tpu_custom_call.1} parent=83 // pred_check_branch
        %4698 = sbr.rel (%p4696) target = $region88
      $region87: #{tpu_custom_call.1} parent=83 // pred_region
        %s4699 = smul.u32 32, %s27
        %p4700 = scmp.lt.s32.totalorder %s4699, 63
        %s4701 = scalar_select %p4700, %s4699, 63
        %s4702 = smul.addr %s4701, 8
        %s4703 = scalar_lea.vmem %s13, %s4702
      $region88: #{tpu_custom_call.1} parent=83 // pred_fallthru
        _
      // Predicated region
      $region89: #{tpu_custom_call.1} parent=83 // pred_check
        %p4704 = pneg %p359
      $region90: #{tpu_custom_call.1} parent=83 // pred_check_branch
        %4706 = sbr.rel (%p4704) target = $region92
      $region91: #{tpu_custom_call.1} parent=83 // pred_region
        %s4707 = smul.u32 32, %s27
        %p4708 = scmp.lt.s32.totalorder %s4707, 63
        %s4709 = scalar_select %p4708, %s4707, 63
        %s4710 = smul.addr %s4709, 8
        %s4711 = scalar_lea.vmem %s14, %s4710
      $region92: #{tpu_custom_call.1} parent=83 // pred_fallthru
        _
    $region84: #{tpu_custom_call.1} parent=5 // pred_fallthru
      _
  $region6: #{tpu_custom_call.1} parent=0 // loop_footer
    %s25 = sadd.s32 1, %s21
  $region7: #{tpu_custom_call.1} parent=0 // loop_footer_branch
    %20 = sbr.rel target = $region3
  $region8: #{tpu_custom_call.1} parent=0 // loop_exit
    _

</llo_original>
